<compile_context>
chip_gen: v7x
topology: tpu7x:2x2x1
jax: 0.10.0
libtpu: 0.0.40
codegen_flags: <defaults>
</compile_context>

<pallas_src>
import functools
import jax
import jax.numpy as jnp
from jax.experimental import pallas as pl
from jax.experimental.pallas import tpu as pltpu

_SQRT2_INV = 0.7071067811865476


# ----------------------------------------------------------------------------- kernels
def _linear_kernel(*refs, has_add, gelu):
    """y = (x @ W + b) [+ add] ; optionally exact (erf) GELU, matching F.gelu."""
    if has_add:
        x_ref, w_ref, b_ref, add_ref, o_ref = refs
    else:
        x_ref, w_ref, b_ref, o_ref = refs
    y = jnp.dot(x_ref[...], w_ref[...], preferred_element_type=jnp.float32)
    y = y + b_ref[...]
    if has_add:
        y = y + add_ref[...]
    if gelu:
        y = 0.5 * y * (1.0 + jax.lax.erf(y * _SQRT2_INV))
    o_ref[...] = y.astype(o_ref.dtype)


def _fc_head_kernel(x_ref, w1_ref, b1_ref, w2_ref, b2_ref, o_ref):
    """Fused fc1 (+GELU) -> fc2.  Only the (tn, 1) result is written to HBM."""
    h = jnp.dot(x_ref[...], w1_ref[...], preferred_element_type=jnp.float32) + b1_ref[...]
    h = 0.5 * h * (1.0 + jax.lax.erf(h * _SQRT2_INV))
    y = jnp.dot(h, w2_ref[...], preferred_element_type=jnp.float32) + b2_ref[...]
    o_ref[...] = y.astype(o_ref.dtype)


def _spectral_kernel(lhs_ref, w_ref, o_ref):
    """Packed complex matmul for a batch of mode-groups.

    lhs: (g, B, 2*G*I)  rows are [re|im] of G modes packed along lanes.
    w  : (g, 2*G*I, 2*G*O) block-diagonal packed complex weights.
    out: (g, B, 2*G*O)  columns are [re|im] of G modes.
    """
    o_ref[...] = jnp.einsum("gbk,gkn->gbn", lhs_ref[...], w_ref[...],
                            preferred_element_type=jnp.float32)


# ----------------------------------------------------------------------------- wrappers
def linear_pallas(x, w, b, add=None, gelu=False, tn=256):
    """x: (N, Cin) f32, w: (Cin, Cout), b: (Cout,).  Optional residual `add`: (N, Cout)."""
    N, Cin = x.shape
    Cout = w.shape[1]
    inputs = [x, w, b.reshape(1, Cout)]
    in_specs = [
        pl.BlockSpec((tn, Cin), lambda i: (i, 0)),
        pl.BlockSpec((Cin, Cout), lambda i: (0, 0)),
        pl.BlockSpec((1, Cout), lambda i: (0, 0)),
    ]
    if add is not None:
        inputs.append(add)
        in_specs.append(pl.BlockSpec((tn, Cout), lambda i: (i, 0)))
    kernel = functools.partial(_linear_kernel, has_add=add is not None, gelu=gelu)
    return pl.pallas_call(
        kernel,
        out_shape=jax.ShapeDtypeStruct((N, Cout), jnp.float32),
        grid=(pl.cdiv(N, tn),),                       # ragged last block handled by Pallas
        in_specs=in_specs,
        out_specs=pl.BlockSpec((tn, Cout), lambda i: (i, 0)),
        compiler_params=pltpu.CompilerParams(dimension_semantics=("parallel",)),
    )(*inputs)


def fc1_fc2_pallas(x, w1, b1, w2, b2, tn=256):
    """Fused projection head: gelu(x @ w1 + b1) @ w2 + b2, output (N, 1)."""
    N, width = x.shape
    H = w1.shape[1]
    return pl.pallas_call(
        _fc_head_kernel,
        out_shape=jax.ShapeDtypeStruct((N, 1), jnp.float32),
        grid=(pl.cdiv(N, tn),),
        in_specs=[
            pl.BlockSpec((tn, width), lambda i: (i, 0)),
            pl.BlockSpec((width, H), lambda i: (0, 0)),
            pl.BlockSpec((1, H), lambda i: (0, 0)),
            pl.BlockSpec((H, 1), lambda i: (0, 0)),
            pl.BlockSpec((1, 1), lambda i: (0, 0)),
        ],
        out_specs=pl.BlockSpec((tn, 1), lambda i: (i, 0)),
        compiler_params=pltpu.CompilerParams(dimension_semantics=("parallel",)),
    )(x, w1, b1.reshape(1, H), w2, b2.reshape(1, 1))


def _pack_spectral_weights(w1r, w1i, w2r, w2i, G):
    """(I, O, m1, m2) x4 -> block-diagonal packed real weights (NG, 2*G*I, 2*G*O).

    Per mode m the packed real block is [[wr_m, wi_m], [-wi_m, wr_m]] so that
    [re|im] @ block = [re@wr - im@wi | re@wi + im@wr].  G modes are packed
    block-diagonally to make each MXU matmul 2*G*I x 2*G*O wide.  Done ONCE at init.
    """
    I, O, m1, m2 = w1r.shape

    def prep(w):  # (I, O, m1, m2) -> (m1*m2, I, O), mode order matches the activation slab
        return jnp.transpose(w, (2, 3, 0, 1)).reshape(m1 * m2, I, O)

    wr = jnp.concatenate([prep(w1r), prep(w2r)], axis=0)            # (M, I, O)
    wi = jnp.concatenate([prep(w1i), prep(w2i)], axis=0)
    blk = jnp.concatenate(
        [jnp.concatenate([wr, wi], axis=2),
         jnp.concatenate([-wi, wr], axis=2)], axis=1)               # (M, 2I, 2O)

    M = 2 * m1 * m2
    M_pad = ((M + G - 1) // G) * G
    blk = jnp.pad(blk, ((0, M_pad - M), (0, 0), (0, 0)))
    NG = M_pad // G
    blk = blk.reshape(NG, G, 2 * I, 2 * O)
    eye = jnp.eye(G, dtype=blk.dtype)
    bd = jnp.einsum("ngkm,gh->ngkhm", blk, eye)                     # (NG, G, 2I, G, 2O)
    return bd.reshape(NG, 2 * G * I, 2 * G * O)


def spectral_conv2d(x, wpk, m1, m2):
    """SpectralConv2d.forward on NHWC input x: (B, Hp, Wp, C) with packed weights wpk."""
    B, Hp, Wp, C = x.shape
    NG, K2, N2 = wpk.shape
    G = K2 // (2 * C)
    O = N2 // (2 * G)
    M = 2 * m1 * m2
    M_pad = NG * G

    # TODO(synk): rfft2/irfft2 have no Pallas TPU primitive; they stay in XLA (jnp.fft).
    x_ft = jnp.fft.rfft2(x, axes=(1, 2))                            # (B, Hp, Wf, C) c64
    top = x_ft[:, :m1, :m2, :]
    bot = x_ft[:, Hp - m1:, :m2, :]
    a = jnp.concatenate([top, bot], axis=1)                         # (B, 2*m1, m2, C)
    a = jnp.transpose(a, (1, 2, 0, 3)).reshape(M, B, C)             # modes-major
    lhs = jnp.concatenate([jnp.real(a), jnp.imag(a)], axis=-1).astype(jnp.float32)  # (M,B,2C)
    lhs = jnp.pad(lhs, ((0, M_pad - M), (0, 0), (0, 0)))
    lhs = lhs.reshape(NG, G, B, 2 * C).transpose(0, 2, 1, 3).reshape(NG, B, 2 * G * C)

    nsplit = 2 if NG % 2 == 0 else 1      # >=2 parallel blocks so both v7x TCs get work
    gpb = NG // nsplit
    out = pl.pallas_call(
        _spectral_kernel,
        out_shape=jax.ShapeDtypeStruct((NG, B, 2 * G * O), jnp.float32),
        grid=(nsplit,),
        in_specs=[pl.BlockSpec((gpb, B, 2 * G * C), lambda s: (s, 0, 0)),
                  pl.BlockSpec((gpb, 2 * G * C, 2 * G * O), lambda s: (s, 0, 0))],
        out_specs=pl.BlockSpec((gpb, B, 2 * G * O), lambda s: (s, 0, 0)),
        compiler_params=pltpu.CompilerParams(dimension_semantics=("parallel",)),
    )(lhs, wpk)

    out = out.reshape(NG, B, G, 2 * O).transpose(0, 2, 1, 3).reshape(M_pad, B, 2 * O)[:M]
    out_c = (out[..., :O] + 1j * out[..., O:]).astype(jnp.complex64)        # (M, B, O)
    out_c = out_c.reshape(2 * m1, m2, B, O).transpose(2, 0, 1, 3)           # (B, 2m1, m2, O)

    # Build out_ft with pad + concat (no zeros + scatter).
    Wf = Wp // 2 + 1
    topo = jnp.pad(out_c[:, :m1], ((0, 0), (0, 0), (0, Wf - m2), (0, 0)))
    boto = jnp.pad(out_c[:, m1:], ((0, 0), (0, 0), (0, Wf - m2), (0, 0)))
    mid = jnp.zeros((B, Hp - 2 * m1, Wf, O), jnp.complex64)
    out_ft = jnp.concatenate([topo, mid, boto], axis=1)
    return jnp.fft.irfft2(out_ft, s=(Hp, Wp), axes=(1, 2)).astype(jnp.float32)


# ----------------------------------------------------------------------------- model
def init_params(key, in_ch, width, modes1, modes2):
    keys = iter(jax.random.split(key, 40))
    scale = 1.0 / (width * width)
    # G modes packed per block-diag group -> 2*G*width ~= 128 lanes (good on v5e/v6e/v7x).
    G = max(1, 128 // (2 * width))
    p = {
        "fc0_w": 0.1 * jax.random.normal(next(keys), (in_ch, width), jnp.float32),
        "fc0_b": 0.1 * jax.random.normal(next(keys), (width,), jnp.float32),
    }
    for l in range(4):
        raw = {}
        for wn in ("w1r", "w1i", "w2r", "w2i"):
            raw[wn] = scale * jax.random.uniform(
                next(keys), (width, width, modes1, modes2), jnp.float32)
        # Precompute (hoist) the packed block-diagonal spectral weights once.
        p[f"conv{l}_wpk"] = _pack_spectral_weights(
            raw["w1r"], raw["w1i"], raw["w2r"], raw["w2i"], G)
        p[f"w{l}_w"] = 0.1 * jax.random.normal(next(keys), (width, width), jnp.float32)
        p[f"w{l}_b"] = 0.1 * jax.random.normal(next(keys), (width,), jnp.float32)
    p["fc1_w"] = 0.1 * jax.random.normal(next(keys), (width, 128), jnp.float32)
    p["fc1_b"] = 0.1 * jax.random.normal(next(keys), (128,), jnp.float32)
    p["fc2_w"] = 0.1 * jax.random.normal(next(keys), (128, 1), jnp.float32)
    p["fc2_b"] = 0.1 * jax.random.normal(next(keys), (1,), jnp.float32)
    return p


def nors_forward(params, x, modes1, modes2, padding=9):
    B, Sx, Sy, _ = x.shape
    # get_grid + concat along channel axis (torch cat(..., dim=-1))
    gridx = jnp.broadcast_to(
        jnp.linspace(0.0, 1.0, Sx, dtype=jnp.float32).reshape(1, Sx, 1, 1), (B, Sx, Sy, 1))
    gridy = jnp.broadcast_to(
        jnp.linspace(0.0, 1.0, Sy, dtype=jnp.float32).reshape(1, 1, Sy, 1), (B, Sx, Sy, 1))
    h = jnp.concatenate([x, gridx, gridy], axis=-1).astype(jnp.float32)

    width = params["fc0_w"].shape[1]
    # fc0
    h = linear_pallas(h.reshape(B * Sx * Sy, -1), params["fc0_w"], params["fc0_b"])
    h = h.reshape(B, Sx, Sy, width)
    # F.pad(x, [0, pad, 0, pad]) on NCHW == pad bottom/right of spatial dims in NHWC
    h = jnp.pad(h, ((0, 0), (0, padding), (0, padding), (0, 0)))
    Hp, Wp = Sx + padding, Sy + padding

    for l in range(4):
        x1 = spectral_conv2d(h, params[f"conv{l}_wpk"], modes1, modes2)
        flat = h.reshape(B * Hp * Wp, width)
        x1f = x1.reshape(B * Hp * Wp, width)
        # 1x1 conv (channel matmul) fused with residual add and GELU (no GELU after layer 3)
        h = linear_pallas(flat, params[f"w{l}_w"], params[f"w{l}_b"], add=x1f, gelu=(l < 3))
        h = h.reshape(B, Hp, Wp, width)

    # crop x[..., :-pad, :-pad]
    h = h[:, :Sx, :Sy, :]
    flat = h.reshape(B * Sx * Sy, width)
    # fused fc1 (+GELU) -> fc2
    out = fc1_fc2_pallas(flat, params["fc1_w"], params["fc1_b"],
                         params["fc2_w"], params["fc2_b"])
    return out.reshape(B, Sx, Sy, 1)


# ----------------------------------------------------------------------------- main
if __name__ == "__main__":
    key = jax.random.PRNGKey(0)
    kx, kp = jax.random.split(key)

    B, S, C = 2, 16, 3          # input (batch, x=s, y=s, c=num_tree+2 -> here 3)
    modes1 = modes2 = 4
    width = 16

    x = jax.random.normal(kx, (B, S, S, C), jnp.float32)
    params = init_params(kp, C + 2, width, modes1, modes2)

    fwd = jax.jit(functools.partial(nors_forward, modes1=modes1, modes2=modes2))
    out = fwd(params, x)
    jax.block_until_ready(out)

    assert out.shape == (B, S, S, 1), out.shape
    assert out.dtype == jnp.float32
    print("KERNEL_OK")
</pallas_src>

<mosaic_0001>
module attributes {stable_mosaic.version = 11 : i64} {
  func.func @_linear_kernel(%arg0: i32, %arg1: memref<256x5xf32, #tpu.memory_space<vmem>>, %arg2: memref<5x16xf32, #tpu.memory_space<vmem>>, %arg3: memref<1x16xf32, #tpu.memory_space<vmem>>, %arg4: memref<256x16xf32, #tpu.memory_space<vmem>>) attributes {dimension_semantics = [#tpu.dimension_semantics<parallel>], iteration_bounds = array<i64: 2>, scalar_prefetch = 0 : i64, scratch_operands = 0 : i64, tpu.core_type = #tpu.core_type<tc>, window_params = [{transform_indices = @transform_0, window_bounds = array<i64: 256, 5>}, {pipeline_mode = #tpu.pipeline_mode<synchronous>, transform_indices = @transform_1, window_bounds = array<i64: 5, 16>}, {pipeline_mode = #tpu.pipeline_mode<synchronous>, transform_indices = @transform_2, window_bounds = array<i64: 1, 16>}, {transform_indices = @transform_3, window_bounds = array<i64: 256, 16>}]} {
    %c0 = arith.constant 0 : index
    %c0_0 = arith.constant 0 : index
    %0 = vector.load %arg1[%c0, %c0_0] : memref<256x5xf32, #tpu.memory_space<vmem>>, vector<256x5xf32>
    %c0_1 = arith.constant 0 : index
    %c0_2 = arith.constant 0 : index
    %1 = vector.load %arg2[%c0_1, %c0_2] : memref<5x16xf32, #tpu.memory_space<vmem>>, vector<5x16xf32>
    %cst = arith.constant dense<0.000000e+00> : vector<256x16xf32>
    %2 = tpu.matmul %0, %1, %cst {dimension_numbers = #tpu.dot_dimension_numbers<[1], [0], [0], [1], [0, 0, 1, 1], [], []>} : vector<256x5xf32>, vector<5x16xf32>, vector<256x16xf32> -> vector<256x16xf32>
    %c0_3 = arith.constant 0 : index
    %c0_4 = arith.constant 0 : index
    %3 = vector.load %arg3[%c0_3, %c0_4] : memref<1x16xf32, #tpu.memory_space<vmem>>, vector<1x16xf32>
    %4 = vector.broadcast %3 : vector<1x16xf32> to vector<256x16xf32>
    %5 = arith.addf %2, %4 : vector<256x16xf32>
    %c0_5 = arith.constant 0 : index
    %c0_6 = arith.constant 0 : index
    %6 = vector.load %arg4[%c0_5, %c0_6] : memref<256x16xf32, #tpu.memory_space<vmem>>, vector<256x16xf32>
    tpu.vector_store %arg4[%c0_5, %c0_6], %5 {strides = array<i32>} : memref<256x16xf32, #tpu.memory_space<vmem>>, vector<256x16xf32>,
    return
  }
  func.func @transform_0(%arg0: i32) -> (i32, i32) {
    %c0_i32 = arith.constant 0 : i32
    %c0_i32_0 = arith.constant 0 : i32
    return %arg0, %c0_i32 : i32, i32
  }
  func.func @transform_1(%arg0: i32) -> (i32, i32) {
    %c0_i32 = arith.constant 0 : i32
    %c0_i32_0 = arith.constant 0 : i32
    %c0_i32_1 = arith.constant 0 : i32
    return %c0_i32, %c0_i32_0 : i32, i32
  }
  func.func @transform_2(%arg0: i32) -> (i32, i32) {
    %c0_i32 = arith.constant 0 : i32
    %c0_i32_0 = arith.constant 0 : i32
    %c0_i32_1 = arith.constant 0 : i32
    return %c0_i32, %c0_i32_0 : i32, i32
  }
  func.func @transform_3(%arg0: i32) -> (i32, i32) {
    %c0_i32 = arith.constant 0 : i32
    %c0_i32_0 = arith.constant 0 : i32
    return %arg0, %c0_i32 : i32, i32
  }
}

module attributes {stable_mosaic.version = 11 : i64} {
  func.func @_spectral_kernel(%arg0: i32, %arg1: memref<4x2x128xf32, #tpu.memory_space<vmem>>, %arg2: memref<4x128x128xf32, #tpu.memory_space<vmem>>, %arg3: memref<4x2x128xf32, #tpu.memory_space<vmem>>) attributes {dimension_semantics = [#tpu.dimension_semantics<parallel>], iteration_bounds = array<i64: 2>, scalar_prefetch = 0 : i64, scratch_operands = 0 : i64, tpu.core_type = #tpu.core_type<tc>, window_params = [{transform_indices = @transform_0, window_bounds = array<i64: 4, 2, 128>}, {transform_indices = @transform_1, window_bounds = array<i64: 4, 128, 128>}, {transform_indices = @transform_2, window_bounds = array<i64: 4, 2, 128>}]} {
    %c0 = arith.constant 0 : index
    %c0_0 = arith.constant 0 : index
    %c0_1 = arith.constant 0 : index
    %0 = vector.load %arg1[%c0, %c0_0, %c0_1] : memref<4x2x128xf32, #tpu.memory_space<vmem>>, vector<4x2x128xf32>
    %c0_2 = arith.constant 0 : index
    %c0_3 = arith.constant 0 : index
    %c0_4 = arith.constant 0 : index
    %1 = vector.load %arg2[%c0_2, %c0_3, %c0_4] : memref<4x128x128xf32, #tpu.memory_space<vmem>>, vector<4x128x128xf32>
    "tpu.trace_start"() <{level = 10 : i32, message = "gbk,gkn->gbn"}> : () -> ()
    %cst = arith.constant dense<0.000000e+00> : vector<4x2x128xf32>
    %2 = tpu.matmul %0, %1, %cst {dimension_numbers = #tpu.dot_dimension_numbers<[2], [1], [1], [2], [0, 0, 0, 1, 1, 2], [0], [0]>} : vector<4x2x128xf32>, vector<4x128x128xf32>, vector<4x2x128xf32> -> vector<4x2x128xf32>
    "tpu.trace_stop"() : () -> ()
    %c0_5 = arith.constant 0 : index
    %c0_6 = arith.constant 0 : index
    %c0_7 = arith.constant 0 : index
    %3 = vector.load %arg3[%c0_5, %c0_6, %c0_7] : memref<4x2x128xf32, #tpu.memory_space<vmem>>, vector<4x2x128xf32>
    tpu.vector_store %arg3[%c0_5, %c0_6, %c0_7], %2 {strides = array<i32>} : memref<4x2x128xf32, #tpu.memory_space<vmem>>, vector<4x2x128xf32>,
    return
  }
  func.func @transform_0(%arg0: i32) -> (i32, i32, i32) {
    %c0_i32 = arith.constant 0 : i32
    %c0_i32_0 = arith.constant 0 : i32
    %c0_i32_1 = arith.constant 0 : i32
    return %arg0, %c0_i32, %c0_i32_0 : i32, i32, i32
  }
  func.func @transform_1(%arg0: i32) -> (i32, i32, i32) {
    %c0_i32 = arith.constant 0 : i32
    %c0_i32_0 = arith.constant 0 : i32
    %c0_i32_1 = arith.constant 0 : i32
    return %arg0, %c0_i32, %c0_i32_0 : i32, i32, i32
  }
  func.func @transform_2(%arg0: i32) -> (i32, i32, i32) {
    %c0_i32 = arith.constant 0 : i32
    %c0_i32_0 = arith.constant 0 : i32
    %c0_i32_1 = arith.constant 0 : i32
    return %arg0, %c0_i32, %c0_i32_0 : i32, i32, i32
  }
}

module attributes {stable_mosaic.version = 11 : i64} {
  func.func @_linear_kernel(%arg0: i32, %arg1: memref<256x16xf32, #tpu.memory_space<vmem>>, %arg2: memref<16x16xf32, #tpu.memory_space<vmem>>, %arg3: memref<1x16xf32, #tpu.memory_space<vmem>>, %arg4: memref<256x16xf32, #tpu.memory_space<vmem>>, %arg5: memref<256x16xf32, #tpu.memory_space<vmem>>) attributes {dimension_semantics = [#tpu.dimension_semantics<parallel>], iteration_bounds = array<i64: 5>, scalar_prefetch = 0 : i64, scratch_operands = 0 : i64, tpu.core_type = #tpu.core_type<tc>, window_params = [{transform_indices = @transform_0, window_bounds = array<i64: 256, 16>}, {pipeline_mode = #tpu.pipeline_mode<synchronous>, transform_indices = @transform_1, window_bounds = array<i64: 16, 16>}, {pipeline_mode = #tpu.pipeline_mode<synchronous>, transform_indices = @transform_2, window_bounds = array<i64: 1, 16>}, {transform_indices = @transform_3, window_bounds = array<i64: 256, 16>}, {transform_indices = @transform_4, window_bounds = array<i64: 256, 16>}]} {
    %c0 = arith.constant 0 : index
    %c0_0 = arith.constant 0 : index
    %0 = vector.load %arg1[%c0, %c0_0] : memref<256x16xf32, #tpu.memory_space<vmem>>, vector<256x16xf32>
    %c0_1 = arith.constant 0 : index
    %c0_2 = arith.constant 0 : index
    %1 = vector.load %arg2[%c0_1, %c0_2] : memref<16x16xf32, #tpu.memory_space<vmem>>, vector<16x16xf32>
    %cst = arith.constant dense<0.000000e+00> : vector<256x16xf32>
    %2 = tpu.matmul %0, %1, %cst {dimension_numbers = #tpu.dot_dimension_numbers<[1], [0], [0], [1], [0, 0, 1, 1], [], []>} : vector<256x16xf32>, vector<16x16xf32>, vector<256x16xf32> -> vector<256x16xf32>
    %c0_3 = arith.constant 0 : index
    %c0_4 = arith.constant 0 : index
    %3 = vector.load %arg3[%c0_3, %c0_4] : memref<1x16xf32, #tpu.memory_space<vmem>>, vector<1x16xf32>
    %4 = vector.broadcast %3 : vector<1x16xf32> to vector<256x16xf32>
    %5 = arith.addf %2, %4 : vector<256x16xf32>
    %c0_5 = arith.constant 0 : index
    %c0_6 = arith.constant 0 : index
    %6 = vector.load %arg4[%c0_5, %c0_6] : memref<256x16xf32, #tpu.memory_space<vmem>>, vector<256x16xf32>
    %7 = arith.addf %5, %6 : vector<256x16xf32>
    %cst_7 = arith.constant 5.000000e-01 : f32
    %8 = vector.broadcast %cst_7 : f32 to vector<256x16xf32>
    %9 = arith.mulf %8, %7 : vector<256x16xf32>
    %cst_8 = arith.constant 0.707106769 : f32
    %10 = vector.broadcast %cst_8 : f32 to vector<256x16xf32>
    %11 = arith.mulf %7, %10 : vector<256x16xf32>
    %12 = math.erf %11 : vector<256x16xf32>
    %cst_9 = arith.constant 1.000000e+00 : f32
    %13 = vector.broadcast %cst_9 : f32 to vector<256x16xf32>
    %14 = arith.addf %13, %12 : vector<256x16xf32>
    %15 = arith.mulf %9, %14 : vector<256x16xf32>
    %c0_10 = arith.constant 0 : index
    %c0_11 = arith.constant 0 : index
    %16 = vector.load %arg5[%c0_10, %c0_11] : memref<256x16xf32, #tpu.memory_space<vmem>>, vector<256x16xf32>
    tpu.vector_store %arg5[%c0_10, %c0_11], %15 {strides = array<i32>} : memref<256x16xf32, #tpu.memory_space<vmem>>, vector<256x16xf32>,
    return
  }
  func.func @transform_0(%arg0: i32) -> (i32, i32) {
    %c0_i32 = arith.constant 0 : i32
    %c0_i32_0 = arith.constant 0 : i32
    return %arg0, %c0_i32 : i32, i32
  }
  func.func @transform_1(%arg0: i32) -> (i32, i32) {
    %c0_i32 = arith.constant 0 : i32
    %c0_i32_0 = arith.constant 0 : i32
    %c0_i32_1 = arith.constant 0 : i32
    return %c0_i32, %c0_i32_0 : i32, i32
  }
  func.func @transform_2(%arg0: i32) -> (i32, i32) {
    %c0_i32 = arith.constant 0 : i32
    %c0_i32_0 = arith.constant 0 : i32
    %c0_i32_1 = arith.constant 0 : i32
    return %c0_i32, %c0_i32_0 : i32, i32
  }
  func.func @transform_3(%arg0: i32) -> (i32, i32) {
    %c0_i32 = arith.constant 0 : i32
    %c0_i32_0 = arith.constant 0 : i32
    return %arg0, %c0_i32 : i32, i32
  }
  func.func @transform_4(%arg0: i32) -> (i32, i32) {
    %c0_i32 = arith.constant 0 : i32
    %c0_i32_0 = arith.constant 0 : i32
    return %arg0, %c0_i32 : i32, i32
  }
}

module attributes {stable_mosaic.version = 11 : i64} {
  func.func @_linear_kernel(%arg0: i32, %arg1: memref<256x16xf32, #tpu.memory_space<vmem>>, %arg2: memref<16x16xf32, #tpu.memory_space<vmem>>, %arg3: memref<1x16xf32, #tpu.memory_space<vmem>>, %arg4: memref<256x16xf32, #tpu.memory_space<vmem>>, %arg5: memref<256x16xf32, #tpu.memory_space<vmem>>) attributes {dimension_semantics = [#tpu.dimension_semantics<parallel>], iteration_bounds = array<i64: 5>, scalar_prefetch = 0 : i64, scratch_operands = 0 : i64, tpu.core_type = #tpu.core_type<tc>, window_params = [{transform_indices = @transform_0, window_bounds = array<i64: 256, 16>}, {pipeline_mode = #tpu.pipeline_mode<synchronous>, transform_indices = @transform_1, window_bounds = array<i64: 16, 16>}, {pipeline_mode = #tpu.pipeline_mode<synchronous>, transform_indices = @transform_2, window_bounds = array<i64: 1, 16>}, {transform_indices = @transform_3, window_bounds = array<i64: 256, 16>}, {transform_indices = @transform_4, window_bounds = array<i64: 256, 16>}]} {
    %c0 = arith.constant 0 : index
    %c0_0 = arith.constant 0 : index
    %0 = vector.load %arg1[%c0, %c0_0] : memref<256x16xf32, #tpu.memory_space<vmem>>, vector<256x16xf32>
    %c0_1 = arith.constant 0 : index
    %c0_2 = arith.constant 0 : index
    %1 = vector.load %arg2[%c0_1, %c0_2] : memref<16x16xf32, #tpu.memory_space<vmem>>, vector<16x16xf32>
    %cst = arith.constant dense<0.000000e+00> : vector<256x16xf32>
    %2 = tpu.matmul %0, %1, %cst {dimension_numbers = #tpu.dot_dimension_numbers<[1], [0], [0], [1], [0, 0, 1, 1], [], []>} : vector<256x16xf32>, vector<16x16xf32>, vector<256x16xf32> -> vector<256x16xf32>
    %c0_3 = arith.constant 0 : index
    %c0_4 = arith.constant 0 : index
    %3 = vector.load %arg3[%c0_3, %c0_4] : memref<1x16xf32, #tpu.memory_space<vmem>>, vector<1x16xf32>
    %4 = vector.broadcast %3 : vector<1x16xf32> to vector<256x16xf32>
    %5 = arith.addf %2, %4 : vector<256x16xf32>
    %c0_5 = arith.constant 0 : index
    %c0_6 = arith.constant 0 : index
    %6 = vector.load %arg4[%c0_5, %c0_6] : memref<256x16xf32, #tpu.memory_space<vmem>>, vector<256x16xf32>
    %7 = arith.addf %5, %6 : vector<256x16xf32>
    %c0_7 = arith.constant 0 : index
    %c0_8 = arith.constant 0 : index
    %8 = vector.load %arg5[%c0_7, %c0_8] : memref<256x16xf32, #tpu.memory_space<vmem>>, vector<256x16xf32>
    tpu.vector_store %arg5[%c0_7, %c0_8], %7 {strides = array<i32>} : memref<256x16xf32, #tpu.memory_space<vmem>>, vector<256x16xf32>,
    return
  }
  func.func @transform_0(%arg0: i32) -> (i32, i32) {
    %c0_i32 = arith.constant 0 : i32
    %c0_i32_0 = arith.constant 0 : i32
    return %arg0, %c0_i32 : i32, i32
  }
  func.func @transform_1(%arg0: i32) -> (i32, i32) {
    %c0_i32 = arith.constant 0 : i32
    %c0_i32_0 = arith.constant 0 : i32
    %c0_i32_1 = arith.constant 0 : i32
    return %c0_i32, %c0_i32_0 : i32, i32
  }
  func.func @transform_2(%arg0: i32) -> (i32, i32) {
    %c0_i32 = arith.constant 0 : i32
    %c0_i32_0 = arith.constant 0 : i32
    %c0_i32_1 = arith.constant 0 : i32
    return %c0_i32, %c0_i32_0 : i32, i32
  }
  func.func @transform_3(%arg0: i32) -> (i32, i32) {
    %c0_i32 = arith.constant 0 : i32
    %c0_i32_0 = arith.constant 0 : i32
    return %arg0, %c0_i32 : i32, i32
  }
  func.func @transform_4(%arg0: i32) -> (i32, i32) {
    %c0_i32 = arith.constant 0 : i32
    %c0_i32_0 = arith.constant 0 : i32
    return %arg0, %c0_i32 : i32, i32
  }
}

module attributes {stable_mosaic.version = 11 : i64} {
  func.func @_fc_head_kernel(%arg0: i32, %arg1: memref<256x16xf32, #tpu.memory_space<vmem>>, %arg2: memref<16x128xf32, #tpu.memory_space<vmem>>, %arg3: memref<1x128xf32, #tpu.memory_space<vmem>>, %arg4: memref<128x1xf32, #tpu.memory_space<vmem>>, %arg5: memref<1x1xf32, #tpu.memory_space<vmem>>, %arg6: memref<256x1xf32, #tpu.memory_space<vmem>>) attributes {dimension_semantics = [#tpu.dimension_semantics<parallel>], iteration_bounds = array<i64: 2>, scalar_prefetch = 0 : i64, scratch_operands = 0 : i64, tpu.core_type = #tpu.core_type<tc>, window_params = [{transform_indices = @transform_0, window_bounds = array<i64: 256, 16>}, {pipeline_mode = #tpu.pipeline_mode<synchronous>, transform_indices = @transform_1, window_bounds = array<i64: 16, 128>}, {pipeline_mode = #tpu.pipeline_mode<synchronous>, transform_indices = @transform_2, window_bounds = array<i64: 1, 128>}, {pipeline_mode = #tpu.pipeline_mode<synchronous>, transform_indices = @transform_3, window_bounds = array<i64: 128, 1>}, {pipeline_mode = #tpu.pipeline_mode<synchronous>, transform_indices = @transform_4, window_bounds = array<i64: 1, 1>}, {transform_indices = @transform_5, window_bounds = array<i64: 256, 1>}]} {
    %c0 = arith.constant 0 : index
    %c0_0 = arith.constant 0 : index
    %0 = vector.load %arg1[%c0, %c0_0] : memref<256x16xf32, #tpu.memory_space<vmem>>, vector<256x16xf32>
    %c0_1 = arith.constant 0 : index
    %c0_2 = arith.constant 0 : index
    %1 = vector.load %arg2[%c0_1, %c0_2] : memref<16x128xf32, #tpu.memory_space<vmem>>, vector<16x128xf32>
    %cst = arith.constant dense<0.000000e+00> : vector<256x128xf32>
    %2 = tpu.matmul %0, %1, %cst {dimension_numbers = #tpu.dot_dimension_numbers<[1], [0], [0], [1], [0, 0, 1, 1], [], []>} : vector<256x16xf32>, vector<16x128xf32>, vector<256x128xf32> -> vector<256x128xf32>
    %c0_3 = arith.constant 0 : index
    %c0_4 = arith.constant 0 : index
    %3 = vector.load %arg3[%c0_3, %c0_4] : memref<1x128xf32, #tpu.memory_space<vmem>>, vector<1x128xf32>
    %4 = vector.broadcast %3 : vector<1x128xf32> to vector<256x128xf32>
    %5 = arith.addf %2, %4 : vector<256x128xf32>
    %cst_5 = arith.constant 5.000000e-01 : f32
    %6 = vector.broadcast %cst_5 : f32 to vector<256x128xf32>
    %7 = arith.mulf %6, %5 : vector<256x128xf32>
    %cst_6 = arith.constant 0.707106769 : f32
    %8 = vector.broadcast %cst_6 : f32 to vector<256x128xf32>
    %9 = arith.mulf %5, %8 : vector<256x128xf32>
    %10 = math.erf %9 : vector<256x128xf32>
    %cst_7 = arith.constant 1.000000e+00 : f32
    %11 = vector.broadcast %cst_7 : f32 to vector<256x128xf32>
    %12 = arith.addf %11, %10 : vector<256x128xf32>
    %13 = arith.mulf %7, %12 : vector<256x128xf32>
    %c0_8 = arith.constant 0 : index
    %c0_9 = arith.constant 0 : index
    %14 = vector.load %arg4[%c0_8, %c0_9] : memref<128x1xf32, #tpu.memory_space<vmem>>, vector<128x1xf32>
    %cst_10 = arith.constant dense<0.000000e+00> : vector<256x1xf32>
    %15 = tpu.matmul %13, %14, %cst_10 {dimension_numbers = #tpu.dot_dimension_numbers<[1], [0], [0], [1], [0, 0, 1, 1], [], []>} : vector<256x128xf32>, vector<128x1xf32>, vector<256x1xf32> -> vector<256x1xf32>
    %c0_11 = arith.constant 0 : index
    %c0_12 = arith.constant 0 : index
    %16 = vector.load %arg5[%c0_11, %c0_12] : memref<1x1xf32, #tpu.memory_space<vmem>>, vector<1x1xf32>
    %17 = vector.broadcast %16 : vector<1x1xf32> to vector<256x1xf32>
    %18 = arith.addf %15, %17 : vector<256x1xf32>
    %c0_13 = arith.constant 0 : index
    %c0_14 = arith.constant 0 : index
    %19 = vector.load %arg6[%c0_13, %c0_14] : memref<256x1xf32, #tpu.memory_space<vmem>>, vector<256x1xf32>
    tpu.vector_store %arg6[%c0_13, %c0_14], %18 {strides = array<i32>} : memref<256x1xf32, #tpu.memory_space<vmem>>, vector<256x1xf32>,
    return
  }
  func.func @transform_0(%arg0: i32) -> (i32, i32) {
    %c0_i32 = arith.constant 0 : i32
    %c0_i32_0 = arith.constant 0 : i32
    return %arg0, %c0_i32 : i32, i32
  }
  func.func @transform_1(%arg0: i32) -> (i32, i32) {
    %c0_i32 = arith.constant 0 : i32
    %c0_i32_0 = arith.constant 0 : i32
    %c0_i32_1 = arith.constant 0 : i32
    return %c0_i32, %c0_i32_0 : i32, i32
  }
  func.func @transform_2(%arg0: i32) -> (i32, i32) {
    %c0_i32 = arith.constant 0 : i32
    %c0_i32_0 = arith.constant 0 : i32
    %c0_i32_1 = arith.constant 0 : i32
    return %c0_i32, %c0_i32_0 : i32, i32
  }
  func.func @transform_3(%arg0: i32) -> (i32, i32) {
    %c0_i32 = arith.constant 0 : i32
    %c0_i32_0 = arith.constant 0 : i32
    %c0_i32_1 = arith.constant 0 : i32
    return %c0_i32, %c0_i32_0 : i32, i32
  }
  func.func @transform_4(%arg0: i32) -> (i32, i32) {
    %c0_i32 = arith.constant 0 : i32
    %c0_i32_0 = arith.constant 0 : i32
    %c0_i32_1 = arith.constant 0 : i32
    return %c0_i32, %c0_i32_0 : i32, i32
  }
  func.func @transform_5(%arg0: i32) -> (i32, i32) {
    %c0_i32 = arith.constant 0 : i32
    %c0_i32_0 = arith.constant 0 : i32
    return %arg0, %c0_i32 : i32, i32
  }
}

</mosaic_0001>

<llo_original>
// kernel: nors_forward.10
$region0: #{nors_forward.10}
  #allocation0 [shape = 'u32[]', space=smem, size = 0x4, offset = 0x4, fixed_abs, tag = 'smem constant byte address 0x4 - core index']
  #allocation1 [shape = 'u32[144,128]{1,0:T(1,128)}', space=vmem, size = 0x12000, scoped, tag = 'internal scratch']
  %s0 = inlined_call_operand.vmem [shape: f32[512,5], index: 0, kind: input, shape index: {}]
  %s1 = inlined_call_operand.vmem [shape: f32[5,16], index: 1, kind: input, shape index: {}]
  %s2 = inlined_call_operand.vmem [shape: f32[1,16], index: 2, kind: input, shape index: {}]
  %s3 = inlined_call_operand.vmem [shape: f32[512,16], index: 3, kind: output, shape index: {}]
  %s4 = sld [smem:[#allocation0]]
  $region45: #{nors_forward.10} parent=0
    _
  %s6 = ssub.s32 1, %s4
  %s7 = scalar_select 0, %s6, %s4
  loop: start=0, step=1, limit=4
  $region2: #{nors_forward.10} parent=0 // loop_pre_header
    _
  $region3: #{nors_forward.10} parent=0 // loop_header
    %s9 = sphi 0, %s13
    %p10 = scmp.ge.s32.totalorder %s9, 4
    %s19 = sphi 0, %s21
    %s22 = sphi 0, %s19
    %s23 = sphi 0, %s22
    %s39 = sphi 0, %s23
    %s43 = sphi 0, %s43
    %s45 = sphi 0, %s43
    %s46 = sphi 0, %s45
    %s60 = sphi 0, %s46
    %s64 = sphi 0, %s64
    %s66 = sphi 0, %s64
    %s67 = sphi 0, %s66
    %s81 = sphi 0, %s67
    %s87 = sphi 0, %s89
    %s90 = sphi 0, %s87
    %s91 = sphi 0, %s90
    %s107 = sphi 0, %s91
  $region4: #{nors_forward.10} parent=0 // loop_header_branch
    %12 = sbr.rel (%p10) target = $region8
  $region5: #{nors_forward.10} parent=0 // loop_body
    %s14 = ssub.s32 %s9, 1
    %s15 = ssub.s32 %s9, 2
    %s16 = sadd.s32 %s9, 1
    %s17 = ssub.s32 %s9, %s16
    %p18 = scmp.eq.s32.totalorder %s17, 0
    %s20 = sadd.s32 %s19, 1
    %s21 = scalar_select %p18, %s19, %s20
    %p24 = pneg %p18
    %p25 = scmp.eq.s32.totalorder %s9, 1
    %p26 = por %p24, %p25
    %p27 = scmp.ne.s32.totalorder %s19, %s22
    %p28 = scmp.eq.s32.totalorder %s9, 0
    %p29 = por %p27, %p28
    %p30 = scmp.ne.s32.totalorder %s19, %s22
    %p31 = scmp.eq.s32.totalorder %s14, 1
    %p32 = por %p30, %p31
    %p33 = scmp.ne.s32.totalorder %s22, %s23
    %p34 = scmp.eq.s32.totalorder %s14, 0
    %p35 = por %p33, %p34
    %p36 = scmp.ne.s32.totalorder %s22, %s23
    %p37 = scmp.eq.s32.totalorder %s15, 1
    %p38 = por %p36, %p37
    %p40 = scmp.ne.s32.totalorder %s23, %s39
    %p41 = scmp.eq.s32.totalorder %s15, 0
    %p42 = por %p40, %p41
    %s44 = sadd.s32 %s43, 1
    %p47 = scmp.eq.s32.totalorder %s9, 1
    %p48 = scmp.ne.s32.totalorder %s43, %s45
    %p49 = scmp.eq.s32.totalorder %s9, 0
    %p50 = por %p48, %p49
    %p51 = scmp.ne.s32.totalorder %s43, %s45
    %p52 = scmp.eq.s32.totalorder %s14, 1
    %p53 = por %p51, %p52
    %p54 = scmp.ne.s32.totalorder %s45, %s46
    %p55 = scmp.eq.s32.totalorder %s14, 0
    %p56 = por %p54, %p55
    %p57 = scmp.ne.s32.totalorder %s45, %s46
    %p58 = scmp.eq.s32.totalorder %s15, 1
    %p59 = por %p57, %p58
    %p61 = scmp.ne.s32.totalorder %s46, %s60
    %p62 = scmp.eq.s32.totalorder %s15, 0
    %p63 = por %p61, %p62
    %s65 = sadd.s32 %s64, 1
    %p68 = scmp.eq.s32.totalorder %s9, 1
    %p69 = scmp.ne.s32.totalorder %s64, %s66
    %p70 = scmp.eq.s32.totalorder %s9, 0
    %p71 = por %p69, %p70
    %p72 = scmp.ne.s32.totalorder %s64, %s66
    %p73 = scmp.eq.s32.totalorder %s14, 1
    %p74 = por %p72, %p73
    %p75 = scmp.ne.s32.totalorder %s66, %s67
    %p76 = scmp.eq.s32.totalorder %s14, 0
    %p77 = por %p75, %p76
    %p78 = scmp.ne.s32.totalorder %s66, %s67
    %p79 = scmp.eq.s32.totalorder %s15, 1
    %p80 = por %p78, %p79
    %p82 = scmp.ne.s32.totalorder %s67, %s81
    %p83 = scmp.eq.s32.totalorder %s15, 0
    %p84 = por %p82, %p83
    %s85 = ssub.s32 %s9, %s16
    %p86 = scmp.eq.s32.totalorder %s85, 0
    %s88 = sadd.s32 %s87, 1
    %s89 = scalar_select %p86, %s87, %s88
    %p92 = pneg %p86
    %p93 = scmp.eq.s32.totalorder %s9, 1
    %p94 = por %p92, %p93
    %p95 = scmp.ne.s32.totalorder %s87, %s90
    %p96 = scmp.eq.s32.totalorder %s9, 0
    %p97 = por %p95, %p96
    %p98 = scmp.ne.s32.totalorder %s87, %s90
    %p99 = scmp.eq.s32.totalorder %s14, 1
    %p100 = por %p98, %p99
    %p101 = scmp.ne.s32.totalorder %s90, %s91
    %p102 = scmp.eq.s32.totalorder %s14, 0
    %p103 = por %p101, %p102
    %p104 = scmp.ne.s32.totalorder %s90, %s91
    %p105 = scmp.eq.s32.totalorder %s15, 1
    %p106 = por %p104, %p105
    %p108 = scmp.ne.s32.totalorder %s91, %s107
    %p109 = scmp.eq.s32.totalorder %s15, 0
    %p110 = por %p108, %p109
    %p111 = scmp.le.s32.totalorder 1, %s9
    %p112 = scmp.lt.s32.totalorder %s9, 3
    %p113 = pnand %p111, %p112
    %p114 = pneg %p113
    // Predicated region
    $region9: #{nors_forward.10} parent=5 // pred_check
      _
    $region10: #{nors_forward.10} parent=5 // pred_check_branch
      %116 = sbr.rel (%p113) target = $region12
    $region11: #{nors_forward.10} parent=5 // pred_region
      %s117 = ssub.s32 %s9, 1
      // Predicated region
      $region13: #{nors_forward.10} parent=11 // pred_check
        %p118 = pneg %p56
      $region14: #{nors_forward.10} parent=11 // pred_check_branch
        %120 = sbr.rel (%p118) target = $region16
      $region15: #{nors_forward.10} parent=11 // pred_region
        _
      $region16: #{nors_forward.10} parent=11 // pred_fallthru
        _
      // Predicated region
      $region17: #{nors_forward.10} parent=11 // pred_check
        %p121 = pneg %p77
      $region18: #{nors_forward.10} parent=11 // pred_check_branch
        %123 = sbr.rel (%p121) target = $region20
      $region19: #{nors_forward.10} parent=11 // pred_region
        _
      $region20: #{nors_forward.10} parent=11 // pred_fallthru
        _
    $region12: #{nors_forward.10} parent=5 // pred_fallthru
      _
    %p124 = scmp.lt.s32.totalorder %s9, 2
    // Predicated region
    $region21: #{nors_forward.10} parent=5 // pred_check
      %p125 = pneg %p124
    $region22: #{nors_forward.10} parent=5 // pred_check_branch
      %127 = sbr.rel (%p125) target = $region24
    $region23: #{nors_forward.10} parent=5 // pred_region
      // Predicated region
      $region25: #{nors_forward.10} parent=23 // pred_check
        %p128 = pneg %p29
      $region26: #{nors_forward.10} parent=23 // pred_check_branch
        %130 = sbr.rel (%p128) target = $region28
      $region27: #{nors_forward.10} parent=23 // pred_region
        %s131 = smul.u32 32, %s9
        %p132 = scmp.lt.s32.totalorder %s131, 63
        %s133 = scalar_select %p132, %s131, 63
        %s134 = smul.addr %s133, 8
        %s135 = scalar_lea.vmem %s0, %s134
        %s136 = smul.u32 32, %s9
      $region28: #{nors_forward.10} parent=23 // pred_fallthru
        _
    $region24: #{nors_forward.10} parent=5 // pred_fallthru
      _
    %p137 = scmp.le.s32.totalorder 1, %s9
    %p138 = scmp.lt.s32.totalorder %s9, 3
    %p139 = pnand %p137, %p138
    %p140 = pneg %p139
    // Predicated region
    $region29: #{nors_forward.10} parent=5 // pred_check
      _
    $region30: #{nors_forward.10} parent=5 // pred_check_branch
      %142 = sbr.rel (%p139) target = $region32
    $region31: #{nors_forward.10} parent=5 // pred_region
      %s143 = ssub.s32 %s9, 1
      %s144 = smul.u32 32, %s14
      %p145 = scmp.lt.s32.totalorder %s144, 63
      %s146 = scalar_select %p145, %s144, 63
      %s147 = smul.addr %s146, 8
      %s148 = scalar_lea.vmem %s0, %s147
      %p149 = pneg %p35
      %p150 = pneg %p32
      %p151 = pneg %p56
      %p152 = pneg %p53
      %p153 = pneg %p77
      %p154 = pneg %p74
      %p155 = pneg %p103
      %p156 = pneg %p100
      %s157 = smul.u32 32, %s14
      %p158 = scmp.lt.s32.totalorder %s157, 63
      %s159 = scalar_select %p158, %s157, 63
      %s160 = smul.addr %s159, 8
      %s161 = scalar_lea.vmem %s3, %s160
      %s162 = smul.u32 32, %s14
      %p163 = scmp.lt.s32.totalorder %s162, 63
      %s164 = scalar_select %p163, %s162, 63
      %s165 = smul.addr %s164, 8
      %s166 = scalar_lea.vmem %s0, %s165
      %s167 = smul.u32 32, %s14
      %s168 = smul.u32 32, %s14
      %p169 = scmp.lt.s32.totalorder %s168, 63
      %s170 = scalar_select %p169, %s168, 63
      %s171 = smul.addr %s170, 8
      %s172 = scalar_lea.vmem %s3, %s171
      %s173 = smul.u32 32, %s14
      %v174 = vld [vmem:[%s166] sm:$0xff]
      %v175 = vld [vmem:[%s166 + $0x8] sm:$0xff]
      %v176 = vld [vmem:[%s166 + $0x10] sm:$0xff]
      %v177 = vld [vmem:[%s166 + $0x18] sm:$0xff]
      %v178 = vld [vmem:[%s166 + $0x20] sm:$0xff]
      %v179 = vld [vmem:[%s166 + $0x28] sm:$0xff]
      %v180 = vld [vmem:[%s166 + $0x30] sm:$0xff]
      %v181 = vld [vmem:[%s166 + $0x38] sm:$0xff]
      %v182 = vld [vmem:[%s166 + $0x40] sm:$0xff]
      %v183 = vld [vmem:[%s166 + $0x48] sm:$0xff]
      %v184 = vld [vmem:[%s166 + $0x50] sm:$0xff]
      %v185 = vld [vmem:[%s166 + $0x58] sm:$0xff]
      %v186 = vld [vmem:[%s166 + $0x60] sm:$0xff]
      %v187 = vld [vmem:[%s166 + $0x68] sm:$0xff]
      %v188 = vld [vmem:[%s166 + $0x70] sm:$0xff]
      %v189 = vld [vmem:[%s166 + $0x78] sm:$0xff]
      %v190 = vld [vmem:[%s166 + $0x80] sm:$0xff]
      %v191 = vld [vmem:[%s166 + $0x88] sm:$0xff]
      %v192 = vld [vmem:[%s166 + $0x90] sm:$0xff]
      %v193 = vld [vmem:[%s166 + $0x98] sm:$0xff]
      %v194 = vld [vmem:[%s166 + $0xa0] sm:$0xff]
      %v195 = vld [vmem:[%s166 + $0xa8] sm:$0xff]
      %v196 = vld [vmem:[%s166 + $0xb0] sm:$0xff]
      %v197 = vld [vmem:[%s166 + $0xb8] sm:$0xff]
      %v198 = vld [vmem:[%s166 + $0xc0] sm:$0xff]
      %v199 = vld [vmem:[%s166 + $0xc8] sm:$0xff]
      %v200 = vld [vmem:[%s166 + $0xd0] sm:$0xff]
      %v201 = vld [vmem:[%s166 + $0xd8] sm:$0xff]
      %v202 = vld [vmem:[%s166 + $0xe0] sm:$0xff]
      %v203 = vld [vmem:[%s166 + $0xe8] sm:$0xff]
      %v204 = vld [vmem:[%s166 + $0xf0] sm:$0xff]
      %v205 = vld [vmem:[%s166 + $0xf8] sm:$0xff]
      %v206 = vld [vmem:[%s1] sm:$0x1f]
      %v207 = vld [vmem:[%s2] sm:$0x1]
      %v209 = vlaneseq
      %v210 = vshrl.u32 %v209, 7
      %v211 = vsub.s32 0, %v210
      %v212 = vrot.slane %v207, %v211
      %vm214 = vcmask 39936
      %v216 = vsel %vm214, %v174, 0
      %v219 = vsel %vm214, %v175, 0
      %v222 = vsel %vm214, %v176, 0
      %v225 = vsel %vm214, %v177, 0
      %v228 = vsel %vm214, %v178, 0
      %v231 = vsel %vm214, %v179, 0
      %v234 = vsel %vm214, %v180, 0
      %v237 = vsel %vm214, %v181, 0
      %v240 = vsel %vm214, %v182, 0
      %v243 = vsel %vm214, %v183, 0
      %v246 = vsel %vm214, %v184, 0
      %v249 = vsel %vm214, %v185, 0
      %v252 = vsel %vm214, %v186, 0
      %v255 = vsel %vm214, %v187, 0
      %v258 = vsel %vm214, %v188, 0
      %v261 = vsel %vm214, %v189, 0
      %v264 = vsel %vm214, %v190, 0
      %v267 = vsel %vm214, %v191, 0
      %v270 = vsel %vm214, %v192, 0
      %v273 = vsel %vm214, %v193, 0
      %v276 = vsel %vm214, %v194, 0
      %v279 = vsel %vm214, %v195, 0
      %v282 = vsel %vm214, %v196, 0
      %v285 = vsel %vm214, %v197, 0
      %v288 = vsel %vm214, %v198, 0
      %v291 = vsel %vm214, %v199, 0
      %v294 = vsel %vm214, %v200, 0
      %v297 = vsel %vm214, %v201, 0
      %v300 = vsel %vm214, %v202, 0
      %v303 = vsel %vm214, %v203, 0
      %v306 = vsel %vm214, %v204, 0
      %v309 = vsel %vm214, %v205, 0
      %vm311 = vcmask 1044480
      %v313 = vsel %vm311, %v206, 0
      %315 = vmatprep.subr.mxu0 0.0
      %316 = vmatpush1.msra.mxu0 %v313
      %317 = vmatprep.subr.mxu0 0.0
      %318 = vmatpush1.msra.mxu0 0.0
      %319 = vmatprep.subr.mxu0 0.0
      %320 = vmatpush1.msra.mxu0 0.0
      %321 = vmatprep.subr.mxu0 0.0
      %322 = vmatpush1.msra.mxu0 0.0
      %323 = vmatprep.subr.mxu0 0.0
      %324 = vmatpush1.msra.mxu0 0.0
      %325 = vmatprep.subr.mxu0 0.0
      %326 = vmatpush1.msra.mxu0 0.0
      %327 = vmatprep.subr.mxu0 0.0
      %328 = vmatpush1.msra.mxu0 0.0
      %329 = vmatprep.subr.mxu0 0.0
      %330 = vmatpush1.msra.mxu0 0.0
      %331 = vmatprep.subr.mxu0 0.0
      %332 = vmatpush1.msra.mxu0 0.0
      %333 = vmatprep.subr.mxu0 0.0
      %334 = vmatpush1.msra.mxu0 0.0
      %335 = vmatprep.subr.mxu0 0.0
      %336 = vmatpush1.msra.mxu0 0.0
      %337 = vmatprep.subr.mxu0 0.0
      %338 = vmatpush1.msra.mxu0 0.0
      %339 = vmatprep.subr.mxu0 0.0
      %340 = vmatpush1.msra.mxu0 0.0
      %341 = vmatprep.subr.mxu0 0.0
      %342 = vmatpush1.msra.mxu0 0.0
      %343 = vmatprep.subr.mxu0 0.0
      %344 = vmatpush1.msra.mxu0 0.0
      %345 = vmatprep.subr.mxu0 0.0
      %346 = vmatpush1.msra.mxu0 0.0
      %347 = vmatprep.subr.mxu0 0.0
      %348 = vmatpush1.msra.mxu0 0.0
      %349 = vmatprep.subr.mxu0 0.0
      %350 = vmatpush1.msra.mxu0 0.0
      %351 = vmatprep.subr.mxu0 0.0
      %352 = vmatpush1.msra.mxu0 0.0
      %353 = vmatprep.subr.mxu0 0.0
      %354 = vmatpush1.msra.mxu0 0.0
      %355 = vmatprep.subr.mxu0 0.0
      %356 = vmatpush1.msra.mxu0 0.0
      %357 = vmatprep.subr.mxu0 0.0
      %358 = vmatpush1.msra.mxu0 0.0
      %359 = vmatprep.subr.mxu0 0.0
      %360 = vmatpush1.msra.mxu0 0.0
      %361 = vmatprep.subr.mxu0 0.0
      %362 = vmatpush1.msra.mxu0 0.0
      %363 = vmatprep.subr.mxu0 0.0
      %364 = vmatpush1.msra.mxu0 0.0
      %365 = vmatprep.subr.mxu0 0.0
      %366 = vmatpush1.msra.mxu0 0.0
      %367 = vmatprep.subr.mxu0 0.0
      %368 = vmatpush1.msra.mxu0 0.0
      %369 = vmatprep.subr.mxu0 0.0
      %370 = vmatpush1.msra.mxu0 0.0
      %371 = vmatprep.subr.mxu0 0.0
      %372 = vmatpush1.msra.mxu0 0.0
      %373 = vmatprep.subr.mxu0 0.0
      %374 = vmatpush1.msra.mxu0 0.0
      %375 = vmatprep.subr.mxu0 0.0
      %376 = vmatpush1.msra.mxu0 0.0
      %377 = vmatprep.subr.mxu0 0.0
      %378 = vmatpush1.msra.mxu0 0.0
      %379 = vmatprep.mubr.f32.mxu0 0.0
      %380 = vmatmul.mubr.f32.gmra.mrb[0].mxu0 %v216
      %v381 = vpop.f32.mrb[0].mxu0
      %v382 = vadd.f32 %v212, %v381
      %v383 = vpop.f32.mrb[0].mxu0
      %384 = vmatprep.mubr.f32.mxu0 0.0
      %385 = vmatmul.mubr.f32.gmra.mrb[0].mxu0 %v219
      %v386 = vpop.f32.mrb[0].mxu0
      %v387 = vadd.f32 %v212, %v386
      %v388 = vpop.f32.mrb[0].mxu0
      %389 = vmatprep.mubr.f32.mxu0 0.0
      %390 = vmatmul.mubr.f32.gmra.mrb[0].mxu0 %v222
      %v391 = vpop.f32.mrb[0].mxu0
      %v392 = vadd.f32 %v212, %v391
      %v393 = vpop.f32.mrb[0].mxu0
      %394 = vmatprep.mubr.f32.mxu0 0.0
      %395 = vmatmul.mubr.f32.gmra.mrb[0].mxu0 %v225
      %v396 = vpop.f32.mrb[0].mxu0
      %v397 = vadd.f32 %v212, %v396
      %v398 = vpop.f32.mrb[0].mxu0
      %399 = vmatprep.mubr.f32.mxu0 0.0
      %400 = vmatmul.mubr.f32.gmra.mrb[0].mxu0 %v228
      %v401 = vpop.f32.mrb[0].mxu0
      %v402 = vadd.f32 %v212, %v401
      %v403 = vpop.f32.mrb[0].mxu0
      %404 = vmatprep.mubr.f32.mxu0 0.0
      %405 = vmatmul.mubr.f32.gmra.mrb[0].mxu0 %v231
      %v406 = vpop.f32.mrb[0].mxu0
      %v407 = vadd.f32 %v212, %v406
      %v408 = vpop.f32.mrb[0].mxu0
      %409 = vmatprep.mubr.f32.mxu0 0.0
      %410 = vmatmul.mubr.f32.gmra.mrb[0].mxu0 %v234
      %v411 = vpop.f32.mrb[0].mxu0
      %v412 = vadd.f32 %v212, %v411
      %v413 = vpop.f32.mrb[0].mxu0
      %414 = vmatprep.mubr.f32.mxu0 0.0
      %415 = vmatmul.mubr.f32.gmra.mrb[0].mxu0 %v237
      %v416 = vpop.f32.mrb[0].mxu0
      %v417 = vadd.f32 %v212, %v416
      %v418 = vpop.f32.mrb[0].mxu0
      %419 = vmatprep.mubr.f32.mxu0 0.0
      %420 = vmatmul.mubr.f32.gmra.mrb[0].mxu0 %v240
      %v421 = vpop.f32.mrb[0].mxu0
      %v422 = vadd.f32 %v212, %v421
      %v423 = vpop.f32.mrb[0].mxu0
      %424 = vmatprep.mubr.f32.mxu0 0.0
      %425 = vmatmul.mubr.f32.gmra.mrb[0].mxu0 %v243
      %v426 = vpop.f32.mrb[0].mxu0
      %v427 = vadd.f32 %v212, %v426
      %v428 = vpop.f32.mrb[0].mxu0
      %429 = vmatprep.mubr.f32.mxu0 0.0
      %430 = vmatmul.mubr.f32.gmra.mrb[0].mxu0 %v246
      %v431 = vpop.f32.mrb[0].mxu0
      %v432 = vadd.f32 %v212, %v431
      %v433 = vpop.f32.mrb[0].mxu0
      %434 = vmatprep.mubr.f32.mxu0 0.0
      %435 = vmatmul.mubr.f32.gmra.mrb[0].mxu0 %v249
      %v436 = vpop.f32.mrb[0].mxu0
      %v437 = vadd.f32 %v212, %v436
      %v438 = vpop.f32.mrb[0].mxu0
      %439 = vmatprep.mubr.f32.mxu0 0.0
      %440 = vmatmul.mubr.f32.gmra.mrb[0].mxu0 %v252
      %v441 = vpop.f32.mrb[0].mxu0
      %v442 = vadd.f32 %v212, %v441
      %v443 = vpop.f32.mrb[0].mxu0
      %444 = vmatprep.mubr.f32.mxu0 0.0
      %445 = vmatmul.mubr.f32.gmra.mrb[0].mxu0 %v255
      %v446 = vpop.f32.mrb[0].mxu0
      %v447 = vadd.f32 %v212, %v446
      %v448 = vpop.f32.mrb[0].mxu0
      %449 = vmatprep.mubr.f32.mxu0 0.0
      %450 = vmatmul.mubr.f32.gmra.mrb[0].mxu0 %v258
      %v451 = vpop.f32.mrb[0].mxu0
      %v452 = vadd.f32 %v212, %v451
      %v453 = vpop.f32.mrb[0].mxu0
      %454 = vmatprep.mubr.f32.mxu0 0.0
      %455 = vmatmul.mubr.f32.gmra.mrb[0].mxu0 %v261
      %v456 = vpop.f32.mrb[0].mxu0
      %v457 = vadd.f32 %v212, %v456
      %v458 = vpop.f32.mrb[0].mxu0
      %459 = vmatprep.mubr.f32.mxu0 0.0
      %460 = vmatmul.mubr.f32.gmra.mrb[0].mxu0 %v264
      %v461 = vpop.f32.mrb[0].mxu0
      %v462 = vadd.f32 %v212, %v461
      %v463 = vpop.f32.mrb[0].mxu0
      %464 = vmatprep.mubr.f32.mxu0 0.0
      %465 = vmatmul.mubr.f32.gmra.mrb[0].mxu0 %v267
      %v466 = vpop.f32.mrb[0].mxu0
      %v467 = vadd.f32 %v212, %v466
      %v468 = vpop.f32.mrb[0].mxu0
      %469 = vmatprep.mubr.f32.mxu0 0.0
      %470 = vmatmul.mubr.f32.gmra.mrb[0].mxu0 %v270
      %v471 = vpop.f32.mrb[0].mxu0
      %v472 = vadd.f32 %v212, %v471
      %v473 = vpop.f32.mrb[0].mxu0
      %474 = vmatprep.mubr.f32.mxu0 0.0
      %475 = vmatmul.mubr.f32.gmra.mrb[0].mxu0 %v273
      %v476 = vpop.f32.mrb[0].mxu0
      %v477 = vadd.f32 %v212, %v476
      %v478 = vpop.f32.mrb[0].mxu0
      %479 = vmatprep.mubr.f32.mxu0 0.0
      %480 = vmatmul.mubr.f32.gmra.mrb[0].mxu0 %v276
      %v481 = vpop.f32.mrb[0].mxu0
      %v482 = vadd.f32 %v212, %v481
      %v483 = vpop.f32.mrb[0].mxu0
      %484 = vmatprep.mubr.f32.mxu0 0.0
      %485 = vmatmul.mubr.f32.gmra.mrb[0].mxu0 %v279
      %v486 = vpop.f32.mrb[0].mxu0
      %v487 = vadd.f32 %v212, %v486
      %v488 = vpop.f32.mrb[0].mxu0
      %489 = vmatprep.mubr.f32.mxu0 0.0
      %490 = vmatmul.mubr.f32.gmra.mrb[0].mxu0 %v282
      %v491 = vpop.f32.mrb[0].mxu0
      %v492 = vadd.f32 %v212, %v491
      %v493 = vpop.f32.mrb[0].mxu0
      %494 = vmatprep.mubr.f32.mxu0 0.0
      %495 = vmatmul.mubr.f32.gmra.mrb[0].mxu0 %v285
      %v496 = vpop.f32.mrb[0].mxu0
      %v497 = vadd.f32 %v212, %v496
      %v498 = vpop.f32.mrb[0].mxu0
      %499 = vmatprep.mubr.f32.mxu0 0.0
      %500 = vmatmul.mubr.f32.gmra.mrb[0].mxu0 %v288
      %v501 = vpop.f32.mrb[0].mxu0
      %v502 = vadd.f32 %v212, %v501
      %v503 = vpop.f32.mrb[0].mxu0
      %504 = vmatprep.mubr.f32.mxu0 0.0
      %505 = vmatmul.mubr.f32.gmra.mrb[0].mxu0 %v291
      %v506 = vpop.f32.mrb[0].mxu0
      %v507 = vadd.f32 %v212, %v506
      %v508 = vpop.f32.mrb[0].mxu0
      %509 = vmatprep.mubr.f32.mxu0 0.0
      %510 = vmatmul.mubr.f32.gmra.mrb[0].mxu0 %v294
      %v511 = vpop.f32.mrb[0].mxu0
      %v512 = vadd.f32 %v212, %v511
      %v513 = vpop.f32.mrb[0].mxu0
      %514 = vmatprep.mubr.f32.mxu0 0.0
      %515 = vmatmul.mubr.f32.gmra.mrb[0].mxu0 %v297
      %v516 = vpop.f32.mrb[0].mxu0
      %v517 = vadd.f32 %v212, %v516
      %v518 = vpop.f32.mrb[0].mxu0
      %519 = vmatprep.mubr.f32.mxu0 0.0
      %520 = vmatmul.mubr.f32.gmra.mrb[0].mxu0 %v300
      %v521 = vpop.f32.mrb[0].mxu0
      %v522 = vadd.f32 %v212, %v521
      %v523 = vpop.f32.mrb[0].mxu0
      %524 = vmatprep.mubr.f32.mxu0 0.0
      %525 = vmatmul.mubr.f32.gmra.mrb[0].mxu0 %v303
      %v526 = vpop.f32.mrb[0].mxu0
      %v527 = vadd.f32 %v212, %v526
      %v528 = vpop.f32.mrb[0].mxu0
      %529 = vmatprep.mubr.f32.mxu0 0.0
      %530 = vmatmul.mubr.f32.gmra.mrb[0].mxu0 %v306
      %v531 = vpop.f32.mrb[0].mxu0
      %v532 = vadd.f32 %v212, %v531
      %v533 = vpop.f32.mrb[0].mxu0
      %534 = vmatprep.mubr.f32.mxu0 0.0
      %535 = vmatmul.mubr.f32.gmra.mrb[0].mxu0 %v309
      %v536 = vpop.f32.mrb[0].mxu0
      %v537 = vadd.f32 %v212, %v536
      %v538 = vpop.f32.mrb[0].mxu0
      %539 = vdwg.mxu0
      %vm540 = vcmask 130048
      %541 = vst.msk [vmem:[%s172] sm:$0xff] %vm540, %v382
      %542 = vst.msk [vmem:[%s172 + $0x8] sm:$0xff] %vm540, %v387
      %543 = vst.msk [vmem:[%s172 + $0x10] sm:$0xff] %vm540, %v392
      %544 = vst.msk [vmem:[%s172 + $0x18] sm:$0xff] %vm540, %v397
      %545 = vst.msk [vmem:[%s172 + $0x20] sm:$0xff] %vm540, %v402
      %546 = vst.msk [vmem:[%s172 + $0x28] sm:$0xff] %vm540, %v407
      %547 = vst.msk [vmem:[%s172 + $0x30] sm:$0xff] %vm540, %v412
      %548 = vst.msk [vmem:[%s172 + $0x38] sm:$0xff] %vm540, %v417
      %549 = vst.msk [vmem:[%s172 + $0x40] sm:$0xff] %vm540, %v422
      %550 = vst.msk [vmem:[%s172 + $0x48] sm:$0xff] %vm540, %v427
      %551 = vst.msk [vmem:[%s172 + $0x50] sm:$0xff] %vm540, %v432
      %552 = vst.msk [vmem:[%s172 + $0x58] sm:$0xff] %vm540, %v437
      %553 = vst.msk [vmem:[%s172 + $0x60] sm:$0xff] %vm540, %v442
      %554 = vst.msk [vmem:[%s172 + $0x68] sm:$0xff] %vm540, %v447
      %555 = vst.msk [vmem:[%s172 + $0x70] sm:$0xff] %vm540, %v452
      %556 = vst.msk [vmem:[%s172 + $0x78] sm:$0xff] %vm540, %v457
      %557 = vst.msk [vmem:[%s172 + $0x80] sm:$0xff] %vm540, %v462
      %558 = vst.msk [vmem:[%s172 + $0x88] sm:$0xff] %vm540, %v467
      %559 = vst.msk [vmem:[%s172 + $0x90] sm:$0xff] %vm540, %v472
      %560 = vst.msk [vmem:[%s172 + $0x98] sm:$0xff] %vm540, %v477
      %561 = vst.msk [vmem:[%s172 + $0xa0] sm:$0xff] %vm540, %v482
      %562 = vst.msk [vmem:[%s172 + $0xa8] sm:$0xff] %vm540, %v487
      %563 = vst.msk [vmem:[%s172 + $0xb0] sm:$0xff] %vm540, %v492
      %564 = vst.msk [vmem:[%s172 + $0xb8] sm:$0xff] %vm540, %v497
      %565 = vst.msk [vmem:[%s172 + $0xc0] sm:$0xff] %vm540, %v502
      %566 = vst.msk [vmem:[%s172 + $0xc8] sm:$0xff] %vm540, %v507
      %567 = vst.msk [vmem:[%s172 + $0xd0] sm:$0xff] %vm540, %v512
      %568 = vst.msk [vmem:[%s172 + $0xd8] sm:$0xff] %vm540, %v517
      %569 = vst.msk [vmem:[%s172 + $0xe0] sm:$0xff] %vm540, %v522
      %570 = vst.msk [vmem:[%s172 + $0xe8] sm:$0xff] %vm540, %v527
      %571 = vst.msk [vmem:[%s172 + $0xf0] sm:$0xff] %vm540, %v532
      %572 = vst.msk [vmem:[%s172 + $0xf8] sm:$0xff] %vm540, %v537
      %s573 = smul.u32 32, %s14
      %p574 = scmp.lt.s32.totalorder %s573, 63
      %s575 = scalar_select %p574, %s573, 63
      %s576 = smul.addr %s575, 8
      %s577 = scalar_lea.vmem %s3, %s576
      // Predicated region
      $region33: #{nors_forward.10} parent=31 // pred_check
        %p578 = pneg %p100
      $region34: #{nors_forward.10} parent=31 // pred_check_branch
        %580 = sbr.rel (%p578) target = $region36
      $region35: #{nors_forward.10} parent=31 // pred_region
        %s581 = smul.u32 32, %s14
      $region36: #{nors_forward.10} parent=31 // pred_fallthru
        _
    $region32: #{nors_forward.10} parent=5 // pred_fallthru
      _
    %p582 = scmp.le.s32.totalorder 2, %s9
    // Predicated region
    $region37: #{nors_forward.10} parent=5 // pred_check
      %p583 = pneg %p582
    $region38: #{nors_forward.10} parent=5 // pred_check_branch
      %585 = sbr.rel (%p583) target = $region40
    $region39: #{nors_forward.10} parent=5 // pred_region
      %s586 = ssub.s32 %s9, 2
      // Predicated region
      $region41: #{nors_forward.10} parent=39 // pred_check
        %p587 = pneg %p106
      $region42: #{nors_forward.10} parent=39 // pred_check_branch
        %589 = sbr.rel (%p587) target = $region44
      $region43: #{nors_forward.10} parent=39 // pred_region
        %s590 = smul.u32 32, %s15
        %p591 = scmp.lt.s32.totalorder %s590, 63
        %s592 = scalar_select %p591, %s590, 63
        %s593 = smul.addr %s592, 8
        %s594 = scalar_lea.vmem %s3, %s593
      $region44: #{nors_forward.10} parent=39 // pred_fallthru
        _
    $region40: #{nors_forward.10} parent=5 // pred_fallthru
      _
  $region6: #{nors_forward.10} parent=0 // loop_footer
    %s13 = sadd.s32 1, %s9
  $region7: #{nors_forward.10} parent=0 // loop_footer_branch
    %8 = sbr.rel target = $region3
  $region8: #{nors_forward.10} parent=0 // loop_exit
    _

// kernel: nors_forward.11
$region0: #{nors_forward.11}
  #allocation0 [shape = 'u32[]', space=smem, size = 0x4, offset = 0x4, fixed_abs, tag = 'smem constant byte address 0x4 - core index']
  #allocation1 [shape = 'u32[144,128]{1,0:T(1,128)}', space=vmem, size = 0x12000, scoped, tag = 'internal scratch']
  %s0 = inlined_call_operand.vmem [shape: f32[8,2,128], index: 0, kind: input, shape index: {}]
  %s1 = inlined_call_operand.vmem [shape: f32[8,128,128], index: 1, kind: input, shape index: {}]
  %s2 = inlined_call_operand.vmem [shape: f32[8,2,128], index: 2, kind: output, shape index: {}]
  %s3 = sld [smem:[#allocation0]]
  $region41: #{nors_forward.11} parent=0
    _
  %s5 = ssub.s32 1, %s3
  %s6 = scalar_select 0, %s5, %s3
  loop: start=0, step=1, limit=4
  $region2: #{nors_forward.11} parent=0 // loop_pre_header
    _
  $region3: #{nors_forward.11} parent=0 // loop_header
    %s8 = sphi 0, %s12
    %p9 = scmp.ge.s32.totalorder %s8, 4
    %s18 = sphi 0, %s20
    %s21 = sphi 0, %s18
    %s22 = sphi 0, %s21
    %s38 = sphi 0, %s22
    %s44 = sphi 0, %s46
    %s47 = sphi 0, %s44
    %s48 = sphi 0, %s47
    %s64 = sphi 0, %s48
    %s70 = sphi 0, %s72
    %s73 = sphi 0, %s70
    %s74 = sphi 0, %s73
    %s90 = sphi 0, %s74
  $region4: #{nors_forward.11} parent=0 // loop_header_branch
    %11 = sbr.rel (%p9) target = $region8
  $region5: #{nors_forward.11} parent=0 // loop_body
    %s13 = ssub.s32 %s8, 1
    %s14 = ssub.s32 %s8, 2
    %s15 = sadd.s32 %s8, 1
    %s16 = ssub.s32 %s8, %s15
    %p17 = scmp.eq.s32.totalorder %s16, 0
    %s19 = sadd.s32 %s18, 1
    %s20 = scalar_select %p17, %s18, %s19
    %p23 = pneg %p17
    %p24 = scmp.eq.s32.totalorder %s8, 1
    %p25 = por %p23, %p24
    %p26 = scmp.ne.s32.totalorder %s18, %s21
    %p27 = scmp.eq.s32.totalorder %s8, 0
    %p28 = por %p26, %p27
    %p29 = scmp.ne.s32.totalorder %s18, %s21
    %p30 = scmp.eq.s32.totalorder %s13, 1
    %p31 = por %p29, %p30
    %p32 = scmp.ne.s32.totalorder %s21, %s22
    %p33 = scmp.eq.s32.totalorder %s13, 0
    %p34 = por %p32, %p33
    %p35 = scmp.ne.s32.totalorder %s21, %s22
    %p36 = scmp.eq.s32.totalorder %s14, 1
    %p37 = por %p35, %p36
    %p39 = scmp.ne.s32.totalorder %s22, %s38
    %p40 = scmp.eq.s32.totalorder %s14, 0
    %p41 = por %p39, %p40
    %s42 = ssub.s32 %s8, %s15
    %p43 = scmp.eq.s32.totalorder %s42, 0
    %s45 = sadd.s32 %s44, 1
    %s46 = scalar_select %p43, %s44, %s45
    %p49 = pneg %p43
    %p50 = scmp.eq.s32.totalorder %s8, 1
    %p51 = por %p49, %p50
    %p52 = scmp.ne.s32.totalorder %s44, %s47
    %p53 = scmp.eq.s32.totalorder %s8, 0
    %p54 = por %p52, %p53
    %p55 = scmp.ne.s32.totalorder %s44, %s47
    %p56 = scmp.eq.s32.totalorder %s13, 1
    %p57 = por %p55, %p56
    %p58 = scmp.ne.s32.totalorder %s47, %s48
    %p59 = scmp.eq.s32.totalorder %s13, 0
    %p60 = por %p58, %p59
    %p61 = scmp.ne.s32.totalorder %s47, %s48
    %p62 = scmp.eq.s32.totalorder %s14, 1
    %p63 = por %p61, %p62
    %p65 = scmp.ne.s32.totalorder %s48, %s64
    %p66 = scmp.eq.s32.totalorder %s14, 0
    %p67 = por %p65, %p66
    %s68 = ssub.s32 %s8, %s15
    %p69 = scmp.eq.s32.totalorder %s68, 0
    %s71 = sadd.s32 %s70, 1
    %s72 = scalar_select %p69, %s70, %s71
    %p75 = pneg %p69
    %p76 = scmp.eq.s32.totalorder %s8, 1
    %p77 = por %p75, %p76
    %p78 = scmp.ne.s32.totalorder %s70, %s73
    %p79 = scmp.eq.s32.totalorder %s8, 0
    %p80 = por %p78, %p79
    %p81 = scmp.ne.s32.totalorder %s70, %s73
    %p82 = scmp.eq.s32.totalorder %s13, 1
    %p83 = por %p81, %p82
    %p84 = scmp.ne.s32.totalorder %s73, %s74
    %p85 = scmp.eq.s32.totalorder %s13, 0
    %p86 = por %p84, %p85
    %p87 = scmp.ne.s32.totalorder %s73, %s74
    %p88 = scmp.eq.s32.totalorder %s14, 1
    %p89 = por %p87, %p88
    %p91 = scmp.ne.s32.totalorder %s74, %s90
    %p92 = scmp.eq.s32.totalorder %s14, 0
    %p93 = por %p91, %p92
    %p94 = scmp.le.s32.totalorder 1, %s8
    %p95 = scmp.lt.s32.totalorder %s8, 3
    %p96 = pnand %p94, %p95
    %p97 = pneg %p96
    // Predicated region
    $region9: #{nors_forward.11} parent=5 // pred_check
      _
    $region10: #{nors_forward.11} parent=5 // pred_check_branch
      %99 = sbr.rel (%p96) target = $region12
    $region11: #{nors_forward.11} parent=5 // pred_region
      %s100 = ssub.s32 %s8, 1
    $region12: #{nors_forward.11} parent=5 // pred_fallthru
      _
    %p101 = scmp.lt.s32.totalorder %s8, 2
    // Predicated region
    $region13: #{nors_forward.11} parent=5 // pred_check
      %p102 = pneg %p101
    $region14: #{nors_forward.11} parent=5 // pred_check_branch
      %104 = sbr.rel (%p102) target = $region16
    $region15: #{nors_forward.11} parent=5 // pred_region
      // Predicated region
      $region17: #{nors_forward.11} parent=15 // pred_check
        %p105 = pneg %p28
      $region18: #{nors_forward.11} parent=15 // pred_check_branch
        %107 = sbr.rel (%p105) target = $region20
      $region19: #{nors_forward.11} parent=15 // pred_region
        %s108 = smul.u32 4, %s8
        %p109 = scmp.lt.s32.totalorder %s108, 7
        %s110 = scalar_select %p109, %s108, 7
        %s111 = smul.addr %s110, 2
        %s112 = scalar_lea.vmem %s0, %s111
        %s113 = smul.u32 4, %s8
      $region20: #{nors_forward.11} parent=15 // pred_fallthru
        _
      // Predicated region
      $region21: #{nors_forward.11} parent=15 // pred_check
        %p114 = pneg %p54
      $region22: #{nors_forward.11} parent=15 // pred_check_branch
        %116 = sbr.rel (%p114) target = $region24
      $region23: #{nors_forward.11} parent=15 // pred_region
        %s117 = smul.u32 4, %s8
        %p118 = scmp.lt.s32.totalorder %s117, 7
        %s119 = scalar_select %p118, %s117, 7
        %s120 = smul.addr %s119, 16
        %s121 = smul.addr %s120, 8
        %s122 = scalar_lea.vmem %s1, %s121
        %s123 = smul.u32 4, %s8
      $region24: #{nors_forward.11} parent=15 // pred_fallthru
        _
    $region16: #{nors_forward.11} parent=5 // pred_fallthru
      _
    %p124 = scmp.le.s32.totalorder 1, %s8
    %p125 = scmp.lt.s32.totalorder %s8, 3
    %p126 = pnand %p124, %p125
    %p127 = pneg %p126
    // Predicated region
    $region25: #{nors_forward.11} parent=5 // pred_check
      _
    $region26: #{nors_forward.11} parent=5 // pred_check_branch
      %129 = sbr.rel (%p126) target = $region28
    $region27: #{nors_forward.11} parent=5 // pred_region
      %s130 = ssub.s32 %s8, 1
      %s131 = smul.u32 4, %s13
      %p132 = scmp.lt.s32.totalorder %s131, 7
      %s133 = scalar_select %p132, %s131, 7
      %s134 = smul.addr %s133, 2
      %s135 = scalar_lea.vmem %s0, %s134
      %p136 = pneg %p34
      %p137 = pneg %p31
      %s138 = smul.u32 4, %s13
      %p139 = scmp.lt.s32.totalorder %s138, 7
      %s140 = scalar_select %p139, %s138, 7
      %s141 = smul.addr %s140, 16
      %s142 = smul.addr %s141, 8
      %s143 = scalar_lea.vmem %s1, %s142
      %p144 = pneg %p60
      %p145 = pneg %p57
      %p146 = pneg %p86
      %p147 = pneg %p83
      %s148 = smul.u32 4, %s13
      %p149 = scmp.lt.s32.totalorder %s148, 7
      %s150 = scalar_select %p149, %s148, 7
      %s151 = smul.addr %s150, 2
      %s152 = scalar_lea.vmem %s2, %s151
      %s153 = smul.u32 4, %s13
      %p154 = scmp.lt.s32.totalorder %s153, 7
      %s155 = scalar_select %p154, %s153, 7
      %s156 = smul.addr %s155, 2
      %s157 = scalar_lea.vmem %s0, %s156
      %s158 = smul.u32 4, %s13
      %s159 = smul.u32 4, %s13
      %p160 = scmp.lt.s32.totalorder %s159, 7
      %s161 = scalar_select %p160, %s159, 7
      %s162 = smul.addr %s161, 16
      %s163 = smul.addr %s162, 8
      %s164 = scalar_lea.vmem %s1, %s163
      %s165 = smul.u32 4, %s13
      %s166 = smul.u32 4, %s13
      %p167 = scmp.lt.s32.totalorder %s166, 7
      %s168 = scalar_select %p167, %s166, 7
      %s169 = smul.addr %s168, 2
      %s170 = scalar_lea.vmem %s2, %s169
      %s171 = smul.u32 4, %s13
      %v172 = vld [vmem:[%s157] sm:$0x3]
      %v173 = vld [vmem:[%s157 + $0x2] sm:$0x3]
      %v174 = vld [vmem:[%s157 + $0x4] sm:$0x3]
      %v175 = vld [vmem:[%s157 + $0x6] sm:$0x3]
      %v176 = vld [vmem:[%s164] sm:$0xff]
      %v177 = vld [vmem:[%s164 + $0x8] sm:$0xff]
      %v178 = vld [vmem:[%s164 + $0x10] sm:$0xff]
      %v179 = vld [vmem:[%s164 + $0x18] sm:$0xff]
      %v180 = vld [vmem:[%s164 + $0x20] sm:$0xff]
      %v181 = vld [vmem:[%s164 + $0x28] sm:$0xff]
      %v182 = vld [vmem:[%s164 + $0x30] sm:$0xff]
      %v183 = vld [vmem:[%s164 + $0x38] sm:$0xff]
      %v184 = vld [vmem:[%s164 + $0x40] sm:$0xff]
      %v185 = vld [vmem:[%s164 + $0x48] sm:$0xff]
      %v186 = vld [vmem:[%s164 + $0x50] sm:$0xff]
      %v187 = vld [vmem:[%s164 + $0x58] sm:$0xff]
      %v188 = vld [vmem:[%s164 + $0x60] sm:$0xff]
      %v189 = vld [vmem:[%s164 + $0x68] sm:$0xff]
      %v190 = vld [vmem:[%s164 + $0x70] sm:$0xff]
      %v191 = vld [vmem:[%s164 + $0x78] sm:$0xff]
      %v192 = vld [vmem:[%s164 + $0x80] sm:$0xff]
      %v193 = vld [vmem:[%s164 + $0x88] sm:$0xff]
      %v194 = vld [vmem:[%s164 + $0x90] sm:$0xff]
      %v195 = vld [vmem:[%s164 + $0x98] sm:$0xff]
      %v196 = vld [vmem:[%s164 + $0xa0] sm:$0xff]
      %v197 = vld [vmem:[%s164 + $0xa8] sm:$0xff]
      %v198 = vld [vmem:[%s164 + $0xb0] sm:$0xff]
      %v199 = vld [vmem:[%s164 + $0xb8] sm:$0xff]
      %v200 = vld [vmem:[%s164 + $0xc0] sm:$0xff]
      %v201 = vld [vmem:[%s164 + $0xc8] sm:$0xff]
      %v202 = vld [vmem:[%s164 + $0xd0] sm:$0xff]
      %v203 = vld [vmem:[%s164 + $0xd8] sm:$0xff]
      %v204 = vld [vmem:[%s164 + $0xe0] sm:$0xff]
      %v205 = vld [vmem:[%s164 + $0xe8] sm:$0xff]
      %v206 = vld [vmem:[%s164 + $0xf0] sm:$0xff]
      %v207 = vld [vmem:[%s164 + $0xf8] sm:$0xff]
      %v208 = vld [vmem:[%s164 + $0x100] sm:$0xff]
      %v209 = vld [vmem:[%s164 + $0x108] sm:$0xff]
      %v210 = vld [vmem:[%s164 + $0x110] sm:$0xff]
      %v211 = vld [vmem:[%s164 + $0x118] sm:$0xff]
      %v212 = vld [vmem:[%s164 + $0x120] sm:$0xff]
      %v213 = vld [vmem:[%s164 + $0x128] sm:$0xff]
      %v214 = vld [vmem:[%s164 + $0x130] sm:$0xff]
      %v215 = vld [vmem:[%s164 + $0x138] sm:$0xff]
      %v216 = vld [vmem:[%s164 + $0x140] sm:$0xff]
      %v217 = vld [vmem:[%s164 + $0x148] sm:$0xff]
      %v218 = vld [vmem:[%s164 + $0x150] sm:$0xff]
      %v219 = vld [vmem:[%s164 + $0x158] sm:$0xff]
      %v220 = vld [vmem:[%s164 + $0x160] sm:$0xff]
      %v221 = vld [vmem:[%s164 + $0x168] sm:$0xff]
      %v222 = vld [vmem:[%s164 + $0x170] sm:$0xff]
      %v223 = vld [vmem:[%s164 + $0x178] sm:$0xff]
      %v224 = vld [vmem:[%s164 + $0x180] sm:$0xff]
      %v225 = vld [vmem:[%s164 + $0x188] sm:$0xff]
      %v226 = vld [vmem:[%s164 + $0x190] sm:$0xff]
      %v227 = vld [vmem:[%s164 + $0x198] sm:$0xff]
      %v228 = vld [vmem:[%s164 + $0x1a0] sm:$0xff]
      %v229 = vld [vmem:[%s164 + $0x1a8] sm:$0xff]
      %v230 = vld [vmem:[%s164 + $0x1b0] sm:$0xff]
      %v231 = vld [vmem:[%s164 + $0x1b8] sm:$0xff]
      %v232 = vld [vmem:[%s164 + $0x1c0] sm:$0xff]
      %v233 = vld [vmem:[%s164 + $0x1c8] sm:$0xff]
      %v234 = vld [vmem:[%s164 + $0x1d0] sm:$0xff]
      %v235 = vld [vmem:[%s164 + $0x1d8] sm:$0xff]
      %v236 = vld [vmem:[%s164 + $0x1e0] sm:$0xff]
      %v237 = vld [vmem:[%s164 + $0x1e8] sm:$0xff]
      %v238 = vld [vmem:[%s164 + $0x1f0] sm:$0xff]
      %v239 = vld [vmem:[%s164 + $0x1f8] sm:$0xff]
      %240 = vmatprep.subr.mxu0 0.0
      %241 = vmatpush1.msra.mxu0 %v176
      %242 = vmatprep.subr.mxu0 0.0
      %243 = vmatpush1.msra.mxu0 %v177
      %244 = vmatprep.subr.mxu0 0.0
      %245 = vmatpush1.msra.mxu0 %v178
      %246 = vmatprep.subr.mxu0 0.0
      %247 = vmatpush1.msra.mxu0 %v179
      %248 = vmatprep.subr.mxu0 0.0
      %249 = vmatpush1.msra.mxu0 %v180
      %250 = vmatprep.subr.mxu0 0.0
      %251 = vmatpush1.msra.mxu0 %v181
      %252 = vmatprep.subr.mxu0 0.0
      %253 = vmatpush1.msra.mxu0 %v182
      %254 = vmatprep.subr.mxu0 0.0
      %255 = vmatpush1.msra.mxu0 %v183
      %256 = vmatprep.subr.mxu0 0.0
      %257 = vmatpush1.msra.mxu0 %v184
      %258 = vmatprep.subr.mxu0 0.0
      %259 = vmatpush1.msra.mxu0 %v185
      %260 = vmatprep.subr.mxu0 0.0
      %261 = vmatpush1.msra.mxu0 %v186
      %262 = vmatprep.subr.mxu0 0.0
      %263 = vmatpush1.msra.mxu0 %v187
      %264 = vmatprep.subr.mxu0 0.0
      %265 = vmatpush1.msra.mxu0 %v188
      %266 = vmatprep.subr.mxu0 0.0
      %267 = vmatpush1.msra.mxu0 %v189
      %268 = vmatprep.subr.mxu0 0.0
      %269 = vmatpush1.msra.mxu0 %v190
      %270 = vmatprep.subr.mxu0 0.0
      %271 = vmatpush1.msra.mxu0 %v191
      %272 = vmatprep.subr.mxu0 0.0
      %273 = vmatpush1.msra.mxu0 0.0
      %274 = vmatprep.subr.mxu0 0.0
      %275 = vmatpush1.msra.mxu0 0.0
      %276 = vmatprep.subr.mxu0 0.0
      %277 = vmatpush1.msra.mxu0 0.0
      %278 = vmatprep.subr.mxu0 0.0
      %279 = vmatpush1.msra.mxu0 0.0
      %280 = vmatprep.subr.mxu0 0.0
      %281 = vmatpush1.msra.mxu0 0.0
      %282 = vmatprep.subr.mxu0 0.0
      %283 = vmatpush1.msra.mxu0 0.0
      %284 = vmatprep.subr.mxu0 0.0
      %285 = vmatpush1.msra.mxu0 0.0
      %286 = vmatprep.subr.mxu0 0.0
      %287 = vmatpush1.msra.mxu0 0.0
      %288 = vmatprep.subr.mxu0 0.0
      %289 = vmatpush1.msra.mxu0 0.0
      %290 = vmatprep.subr.mxu0 0.0
      %291 = vmatpush1.msra.mxu0 0.0
      %292 = vmatprep.subr.mxu0 0.0
      %293 = vmatpush1.msra.mxu0 0.0
      %294 = vmatprep.subr.mxu0 0.0
      %295 = vmatpush1.msra.mxu0 0.0
      %296 = vmatprep.subr.mxu0 0.0
      %297 = vmatpush1.msra.mxu0 0.0
      %298 = vmatprep.subr.mxu0 0.0
      %299 = vmatpush1.msra.mxu0 0.0
      %300 = vmatprep.subr.mxu0 0.0
      %301 = vmatpush1.msra.mxu0 0.0
      %302 = vmatprep.subr.mxu0 0.0
      %303 = vmatpush1.msra.mxu0 0.0
      %304 = vmatprep.mubr.f32.mxu0 0.0
      %305 = vmatmul.mubr.f32.gmra.mrb[0].mxu0 %v172
      %v306 = vpop.f32.mrb[0].mxu0
      %v307 = vadd.f32 0.0, %v306
      %v308 = vpop.f32.mrb[0].mxu0
      %309 = vdwg.mxu0
      %310 = vmatprep.subr.mxu0 0.0
      %311 = vmatpush1.msra.mxu0 %v192
      %312 = vmatprep.subr.mxu0 0.0
      %313 = vmatpush1.msra.mxu0 %v193
      %314 = vmatprep.subr.mxu0 0.0
      %315 = vmatpush1.msra.mxu0 %v194
      %316 = vmatprep.subr.mxu0 0.0
      %317 = vmatpush1.msra.mxu0 %v195
      %318 = vmatprep.subr.mxu0 0.0
      %319 = vmatpush1.msra.mxu0 %v196
      %320 = vmatprep.subr.mxu0 0.0
      %321 = vmatpush1.msra.mxu0 %v197
      %322 = vmatprep.subr.mxu0 0.0
      %323 = vmatpush1.msra.mxu0 %v198
      %324 = vmatprep.subr.mxu0 0.0
      %325 = vmatpush1.msra.mxu0 %v199
      %326 = vmatprep.subr.mxu0 0.0
      %327 = vmatpush1.msra.mxu0 %v200
      %328 = vmatprep.subr.mxu0 0.0
      %329 = vmatpush1.msra.mxu0 %v201
      %330 = vmatprep.subr.mxu0 0.0
      %331 = vmatpush1.msra.mxu0 %v202
      %332 = vmatprep.subr.mxu0 0.0
      %333 = vmatpush1.msra.mxu0 %v203
      %334 = vmatprep.subr.mxu0 0.0
      %335 = vmatpush1.msra.mxu0 %v204
      %336 = vmatprep.subr.mxu0 0.0
      %337 = vmatpush1.msra.mxu0 %v205
      %338 = vmatprep.subr.mxu0 0.0
      %339 = vmatpush1.msra.mxu0 %v206
      %340 = vmatprep.subr.mxu0 0.0
      %341 = vmatpush1.msra.mxu0 %v207
      %342 = vmatprep.subr.mxu0 0.0
      %343 = vmatpush1.msra.mxu0 0.0
      %344 = vmatprep.subr.mxu0 0.0
      %345 = vmatpush1.msra.mxu0 0.0
      %346 = vmatprep.subr.mxu0 0.0
      %347 = vmatpush1.msra.mxu0 0.0
      %348 = vmatprep.subr.mxu0 0.0
      %349 = vmatpush1.msra.mxu0 0.0
      %350 = vmatprep.subr.mxu0 0.0
      %351 = vmatpush1.msra.mxu0 0.0
      %352 = vmatprep.subr.mxu0 0.0
      %353 = vmatpush1.msra.mxu0 0.0
      %354 = vmatprep.subr.mxu0 0.0
      %355 = vmatpush1.msra.mxu0 0.0
      %356 = vmatprep.subr.mxu0 0.0
      %357 = vmatpush1.msra.mxu0 0.0
      %358 = vmatprep.subr.mxu0 0.0
      %359 = vmatpush1.msra.mxu0 0.0
      %360 = vmatprep.subr.mxu0 0.0
      %361 = vmatpush1.msra.mxu0 0.0
      %362 = vmatprep.subr.mxu0 0.0
      %363 = vmatpush1.msra.mxu0 0.0
      %364 = vmatprep.subr.mxu0 0.0
      %365 = vmatpush1.msra.mxu0 0.0
      %366 = vmatprep.subr.mxu0 0.0
      %367 = vmatpush1.msra.mxu0 0.0
      %368 = vmatprep.subr.mxu0 0.0
      %369 = vmatpush1.msra.mxu0 0.0
      %370 = vmatprep.subr.mxu0 0.0
      %371 = vmatpush1.msra.mxu0 0.0
      %372 = vmatprep.subr.mxu0 0.0
      %373 = vmatpush1.msra.mxu0 0.0
      %374 = vmatprep.mubr.f32.mxu0 0.0
      %375 = vmatmul.mubr.f32.gmra.mrb[0].mxu0 %v173
      %v376 = vpop.f32.mrb[0].mxu0
      %v377 = vadd.f32 0.0, %v376
      %v378 = vpop.f32.mrb[0].mxu0
      %379 = vdwg.mxu0
      %380 = vmatprep.subr.mxu0 0.0
      %381 = vmatpush1.msra.mxu0 %v208
      %382 = vmatprep.subr.mxu0 0.0
      %383 = vmatpush1.msra.mxu0 %v209
      %384 = vmatprep.subr.mxu0 0.0
      %385 = vmatpush1.msra.mxu0 %v210
      %386 = vmatprep.subr.mxu0 0.0
      %387 = vmatpush1.msra.mxu0 %v211
      %388 = vmatprep.subr.mxu0 0.0
      %389 = vmatpush1.msra.mxu0 %v212
      %390 = vmatprep.subr.mxu0 0.0
      %391 = vmatpush1.msra.mxu0 %v213
      %392 = vmatprep.subr.mxu0 0.0
      %393 = vmatpush1.msra.mxu0 %v214
      %394 = vmatprep.subr.mxu0 0.0
      %395 = vmatpush1.msra.mxu0 %v215
      %396 = vmatprep.subr.mxu0 0.0
      %397 = vmatpush1.msra.mxu0 %v216
      %398 = vmatprep.subr.mxu0 0.0
      %399 = vmatpush1.msra.mxu0 %v217
      %400 = vmatprep.subr.mxu0 0.0
      %401 = vmatpush1.msra.mxu0 %v218
      %402 = vmatprep.subr.mxu0 0.0
      %403 = vmatpush1.msra.mxu0 %v219
      %404 = vmatprep.subr.mxu0 0.0
      %405 = vmatpush1.msra.mxu0 %v220
      %406 = vmatprep.subr.mxu0 0.0
      %407 = vmatpush1.msra.mxu0 %v221
      %408 = vmatprep.subr.mxu0 0.0
      %409 = vmatpush1.msra.mxu0 %v222
      %410 = vmatprep.subr.mxu0 0.0
      %411 = vmatpush1.msra.mxu0 %v223
      %412 = vmatprep.subr.mxu0 0.0
      %413 = vmatpush1.msra.mxu0 0.0
      %414 = vmatprep.subr.mxu0 0.0
      %415 = vmatpush1.msra.mxu0 0.0
      %416 = vmatprep.subr.mxu0 0.0
      %417 = vmatpush1.msra.mxu0 0.0
      %418 = vmatprep.subr.mxu0 0.0
      %419 = vmatpush1.msra.mxu0 0.0
      %420 = vmatprep.subr.mxu0 0.0
      %421 = vmatpush1.msra.mxu0 0.0
      %422 = vmatprep.subr.mxu0 0.0
      %423 = vmatpush1.msra.mxu0 0.0
      %424 = vmatprep.subr.mxu0 0.0
      %425 = vmatpush1.msra.mxu0 0.0
      %426 = vmatprep.subr.mxu0 0.0
      %427 = vmatpush1.msra.mxu0 0.0
      %428 = vmatprep.subr.mxu0 0.0
      %429 = vmatpush1.msra.mxu0 0.0
      %430 = vmatprep.subr.mxu0 0.0
      %431 = vmatpush1.msra.mxu0 0.0
      %432 = vmatprep.subr.mxu0 0.0
      %433 = vmatpush1.msra.mxu0 0.0
      %434 = vmatprep.subr.mxu0 0.0
      %435 = vmatpush1.msra.mxu0 0.0
      %436 = vmatprep.subr.mxu0 0.0
      %437 = vmatpush1.msra.mxu0 0.0
      %438 = vmatprep.subr.mxu0 0.0
      %439 = vmatpush1.msra.mxu0 0.0
      %440 = vmatprep.subr.mxu0 0.0
      %441 = vmatpush1.msra.mxu0 0.0
      %442 = vmatprep.subr.mxu0 0.0
      %443 = vmatpush1.msra.mxu0 0.0
      %444 = vmatprep.mubr.f32.mxu0 0.0
      %445 = vmatmul.mubr.f32.gmra.mrb[0].mxu0 %v174
      %v446 = vpop.f32.mrb[0].mxu0
      %v447 = vadd.f32 0.0, %v446
      %v448 = vpop.f32.mrb[0].mxu0
      %449 = vdwg.mxu0
      %450 = vmatprep.subr.mxu0 0.0
      %451 = vmatpush1.msra.mxu0 %v224
      %452 = vmatprep.subr.mxu0 0.0
      %453 = vmatpush1.msra.mxu0 %v225
      %454 = vmatprep.subr.mxu0 0.0
      %455 = vmatpush1.msra.mxu0 %v226
      %456 = vmatprep.subr.mxu0 0.0
      %457 = vmatpush1.msra.mxu0 %v227
      %458 = vmatprep.subr.mxu0 0.0
      %459 = vmatpush1.msra.mxu0 %v228
      %460 = vmatprep.subr.mxu0 0.0
      %461 = vmatpush1.msra.mxu0 %v229
      %462 = vmatprep.subr.mxu0 0.0
      %463 = vmatpush1.msra.mxu0 %v230
      %464 = vmatprep.subr.mxu0 0.0
      %465 = vmatpush1.msra.mxu0 %v231
      %466 = vmatprep.subr.mxu0 0.0
      %467 = vmatpush1.msra.mxu0 %v232
      %468 = vmatprep.subr.mxu0 0.0
      %469 = vmatpush1.msra.mxu0 %v233
      %470 = vmatprep.subr.mxu0 0.0
      %471 = vmatpush1.msra.mxu0 %v234
      %472 = vmatprep.subr.mxu0 0.0
      %473 = vmatpush1.msra.mxu0 %v235
      %474 = vmatprep.subr.mxu0 0.0
      %475 = vmatpush1.msra.mxu0 %v236
      %476 = vmatprep.subr.mxu0 0.0
      %477 = vmatpush1.msra.mxu0 %v237
      %478 = vmatprep.subr.mxu0 0.0
      %479 = vmatpush1.msra.mxu0 %v238
      %480 = vmatprep.subr.mxu0 0.0
      %481 = vmatpush1.msra.mxu0 %v239
      %482 = vmatprep.subr.mxu0 0.0
      %483 = vmatpush1.msra.mxu0 0.0
      %484 = vmatprep.subr.mxu0 0.0
      %485 = vmatpush1.msra.mxu0 0.0
      %486 = vmatprep.subr.mxu0 0.0
      %487 = vmatpush1.msra.mxu0 0.0
      %488 = vmatprep.subr.mxu0 0.0
      %489 = vmatpush1.msra.mxu0 0.0
      %490 = vmatprep.subr.mxu0 0.0
      %491 = vmatpush1.msra.mxu0 0.0
      %492 = vmatprep.subr.mxu0 0.0
      %493 = vmatpush1.msra.mxu0 0.0
      %494 = vmatprep.subr.mxu0 0.0
      %495 = vmatpush1.msra.mxu0 0.0
      %496 = vmatprep.subr.mxu0 0.0
      %497 = vmatpush1.msra.mxu0 0.0
      %498 = vmatprep.subr.mxu0 0.0
      %499 = vmatpush1.msra.mxu0 0.0
      %500 = vmatprep.subr.mxu0 0.0
      %501 = vmatpush1.msra.mxu0 0.0
      %502 = vmatprep.subr.mxu0 0.0
      %503 = vmatpush1.msra.mxu0 0.0
      %504 = vmatprep.subr.mxu0 0.0
      %505 = vmatpush1.msra.mxu0 0.0
      %506 = vmatprep.subr.mxu0 0.0
      %507 = vmatpush1.msra.mxu0 0.0
      %508 = vmatprep.subr.mxu0 0.0
      %509 = vmatpush1.msra.mxu0 0.0
      %510 = vmatprep.subr.mxu0 0.0
      %511 = vmatpush1.msra.mxu0 0.0
      %512 = vmatprep.subr.mxu0 0.0
      %513 = vmatpush1.msra.mxu0 0.0
      %514 = vmatprep.mubr.f32.mxu0 0.0
      %515 = vmatmul.mubr.f32.gmra.mrb[0].mxu0 %v175
      %v516 = vpop.f32.mrb[0].mxu0
      %v517 = vadd.f32 0.0, %v516
      %v518 = vpop.f32.mrb[0].mxu0
      %519 = vdwg.mxu0
      %520 = vst [vmem:[%s170] sm:$0x3] %v307
      %521 = vst [vmem:[%s170 + $0x2] sm:$0x3] %v377
      %522 = vst [vmem:[%s170 + $0x4] sm:$0x3] %v447
      %523 = vst [vmem:[%s170 + $0x6] sm:$0x3] %v517
      %s524 = smul.u32 4, %s13
      %p525 = scmp.lt.s32.totalorder %s524, 7
      %s526 = scalar_select %p525, %s524, 7
      %s527 = smul.addr %s526, 2
      %s528 = scalar_lea.vmem %s2, %s527
      // Predicated region
      $region29: #{nors_forward.11} parent=27 // pred_check
        %p529 = pneg %p83
      $region30: #{nors_forward.11} parent=27 // pred_check_branch
        %531 = sbr.rel (%p529) target = $region32
      $region31: #{nors_forward.11} parent=27 // pred_region
        %s532 = smul.u32 4, %s13
      $region32: #{nors_forward.11} parent=27 // pred_fallthru
        _
    $region28: #{nors_forward.11} parent=5 // pred_fallthru
      _
    %p533 = scmp.le.s32.totalorder 2, %s8
    // Predicated region
    $region33: #{nors_forward.11} parent=5 // pred_check
      %p534 = pneg %p533
    $region34: #{nors_forward.11} parent=5 // pred_check_branch
      %536 = sbr.rel (%p534) target = $region36
    $region35: #{nors_forward.11} parent=5 // pred_region
      %s537 = ssub.s32 %s8, 2
      // Predicated region
      $region37: #{nors_forward.11} parent=35 // pred_check
        %p538 = pneg %p89
      $region38: #{nors_forward.11} parent=35 // pred_check_branch
        %540 = sbr.rel (%p538) target = $region40
      $region39: #{nors_forward.11} parent=35 // pred_region
        %s541 = smul.u32 4, %s14
        %p542 = scmp.lt.s32.totalorder %s541, 7
        %s543 = scalar_select %p542, %s541, 7
        %s544 = smul.addr %s543, 2
        %s545 = scalar_lea.vmem %s2, %s544
      $region40: #{nors_forward.11} parent=35 // pred_fallthru
        _
    $region36: #{nors_forward.11} parent=5 // pred_fallthru
      _
  $region6: #{nors_forward.11} parent=0 // loop_footer
    %s12 = sadd.s32 1, %s8
  $region7: #{nors_forward.11} parent=0 // loop_footer_branch
    %7 = sbr.rel target = $region3
  $region8: #{nors_forward.11} parent=0 // loop_exit
    _

// kernel: reverse.8
$region0: #{reverse.8}
  #allocation0 [shape = 's32[1]{0}', space=sflag, size = 0x4, scoped, tag = 'scoped memory for reverse.8']
  %s0 = inlined_call_operand.vmem [shape: f32[2,16,25,12], index: 0, kind: input, shape index: {}]
  %s1 = inlined_call_operand.vmem [shape: f32[2,16,25,12], index: 1, kind: output, shape index: {}]
  %s2 = scalar_lea.vmem %s0, 176
  %v3 = vld [vmem:[%s2] sm:$0xff]
  %4 = vst [vmem:[%s1] sm:$0xff] %v3
  %s5 = scalar_lea.vmem %s0, 368
  %v6 = vld [vmem:[%s5] sm:$0xff]
  %s7 = scalar_lea.vmem %s1, 192
  %8 = vst [vmem:[%s7] sm:$0xff] %v6
  %s9 = scalar_lea.vmem %s0, 160
  %v10 = vld [vmem:[%s9] sm:$0xff]
  %s11 = scalar_lea.vmem %s1, 16
  %12 = vst [vmem:[%s11] sm:$0xff] %v10
  %s13 = scalar_lea.vmem %s0, 352
  %v14 = vld [vmem:[%s13] sm:$0xff]
  %s15 = scalar_lea.vmem %s1, 208
  %16 = vst [vmem:[%s15] sm:$0xff] %v14
  %s17 = scalar_lea.vmem %s0, 144
  %v18 = vld [vmem:[%s17] sm:$0xff]
  %s19 = scalar_lea.vmem %s1, 32
  %20 = vst [vmem:[%s19] sm:$0xff] %v18
  %s21 = scalar_lea.vmem %s0, 336
  %v22 = vld [vmem:[%s21] sm:$0xff]
  %s23 = scalar_lea.vmem %s1, 224
  %24 = vst [vmem:[%s23] sm:$0xff] %v22
  %s25 = scalar_lea.vmem %s0, 128
  %v26 = vld [vmem:[%s25] sm:$0xff]
  %s27 = scalar_lea.vmem %s1, 48
  %28 = vst [vmem:[%s27] sm:$0xff] %v26
  %s29 = scalar_lea.vmem %s0, 320
  %v30 = vld [vmem:[%s29] sm:$0xff]
  %s31 = scalar_lea.vmem %s1, 240
  %32 = vst [vmem:[%s31] sm:$0xff] %v30
  %s33 = scalar_lea.vmem %s0, 112
  %v34 = vld [vmem:[%s33] sm:$0xff]
  %s35 = scalar_lea.vmem %s1, 64
  %36 = vst [vmem:[%s35] sm:$0xff] %v34
  %s37 = scalar_lea.vmem %s0, 304
  %v38 = vld [vmem:[%s37] sm:$0xff]
  %s39 = scalar_lea.vmem %s1, 256
  %40 = vst [vmem:[%s39] sm:$0xff] %v38
  %s41 = scalar_lea.vmem %s0, 96
  %v42 = vld [vmem:[%s41] sm:$0xff]
  %s43 = scalar_lea.vmem %s1, 80
  %44 = vst [vmem:[%s43] sm:$0xff] %v42
  %s45 = scalar_lea.vmem %s0, 288
  %v46 = vld [vmem:[%s45] sm:$0xff]
  %s47 = scalar_lea.vmem %s1, 272
  %48 = vst [vmem:[%s47] sm:$0xff] %v46
  %s49 = scalar_lea.vmem %s0, 80
  %v50 = vld [vmem:[%s49] sm:$0xff]
  %s51 = scalar_lea.vmem %s1, 96
  %52 = vst [vmem:[%s51] sm:$0xff] %v50
  %s53 = scalar_lea.vmem %s0, 272
  %v54 = vld [vmem:[%s53] sm:$0xff]
  %s55 = scalar_lea.vmem %s1, 288
  %56 = vst [vmem:[%s55] sm:$0xff] %v54
  %s57 = scalar_lea.vmem %s0, 64
  %v58 = vld [vmem:[%s57] sm:$0xff]
  %s59 = scalar_lea.vmem %s1, 112
  %60 = vst [vmem:[%s59] sm:$0xff] %v58
  %s61 = scalar_lea.vmem %s0, 256
  %v62 = vld [vmem:[%s61] sm:$0xff]
  %s63 = scalar_lea.vmem %s1, 304
  %64 = vst [vmem:[%s63] sm:$0xff] %v62
  %s65 = scalar_lea.vmem %s0, 48
  %v66 = vld [vmem:[%s65] sm:$0xff]
  %s67 = scalar_lea.vmem %s1, 128
  %68 = vst [vmem:[%s67] sm:$0xff] %v66
  %s69 = scalar_lea.vmem %s0, 240
  %v70 = vld [vmem:[%s69] sm:$0xff]
  %s71 = scalar_lea.vmem %s1, 320
  %72 = vst [vmem:[%s71] sm:$0xff] %v70
  %s73 = scalar_lea.vmem %s0, 32
  %v74 = vld [vmem:[%s73] sm:$0xff]
  %s75 = scalar_lea.vmem %s1, 144
  %76 = vst [vmem:[%s75] sm:$0xff] %v74
  %s77 = scalar_lea.vmem %s0, 224
  %v78 = vld [vmem:[%s77] sm:$0xff]
  %s79 = scalar_lea.vmem %s1, 336
  %80 = vst [vmem:[%s79] sm:$0xff] %v78
  %s81 = scalar_lea.vmem %s0, 16
  %v82 = vld [vmem:[%s81] sm:$0xff]
  %s83 = scalar_lea.vmem %s1, 160
  %84 = vst [vmem:[%s83] sm:$0xff] %v82
  %s85 = scalar_lea.vmem %s0, 208
  %v86 = vld [vmem:[%s85] sm:$0xff]
  %s87 = scalar_lea.vmem %s1, 352
  %88 = vst [vmem:[%s87] sm:$0xff] %v86
  %v89 = vld [vmem:[%s0] sm:$0xff]
  %s90 = scalar_lea.vmem %s1, 176
  %91 = vst [vmem:[%s90] sm:$0xff] %v89
  %s92 = scalar_lea.vmem %s0, 192
  %v93 = vld [vmem:[%s92] sm:$0xff]
  %s94 = scalar_lea.vmem %s1, 368
  %95 = vst [vmem:[%s94] sm:$0xff] %v93
  %s96 = scalar_lea.vmem %s0, 184
  %v97 = vld [vmem:[%s96] sm:$0xff]
  %s98 = scalar_lea.vmem %s1, 8
  %99 = vst [vmem:[%s98] sm:$0xff] %v97
  %s100 = scalar_lea.vmem %s0, 376
  %v101 = vld [vmem:[%s100] sm:$0xff]
  %s102 = scalar_lea.vmem %s1, 200
  %103 = vst [vmem:[%s102] sm:$0xff] %v101
  %s104 = scalar_lea.vmem %s0, 168
  %v105 = vld [vmem:[%s104] sm:$0xff]
  %s106 = scalar_lea.vmem %s1, 24
  %107 = vst [vmem:[%s106] sm:$0xff] %v105
  %s108 = scalar_lea.vmem %s0, 360
  %v109 = vld [vmem:[%s108] sm:$0xff]
  %s110 = scalar_lea.vmem %s1, 216
  %111 = vst [vmem:[%s110] sm:$0xff] %v109
  %s112 = scalar_lea.vmem %s0, 152
  %v113 = vld [vmem:[%s112] sm:$0xff]
  %s114 = scalar_lea.vmem %s1, 40
  %115 = vst [vmem:[%s114] sm:$0xff] %v113
  %s116 = scalar_lea.vmem %s0, 344
  %v117 = vld [vmem:[%s116] sm:$0xff]
  %s118 = scalar_lea.vmem %s1, 232
  %119 = vst [vmem:[%s118] sm:$0xff] %v117
  %s120 = scalar_lea.vmem %s0, 136
  %v121 = vld [vmem:[%s120] sm:$0xff]
  %s122 = scalar_lea.vmem %s1, 56
  %123 = vst [vmem:[%s122] sm:$0xff] %v121
  %s124 = scalar_lea.vmem %s0, 328
  %v125 = vld [vmem:[%s124] sm:$0xff]
  %s126 = scalar_lea.vmem %s1, 248
  %127 = vst [vmem:[%s126] sm:$0xff] %v125
  %s128 = scalar_lea.vmem %s0, 120
  %v129 = vld [vmem:[%s128] sm:$0xff]
  %s130 = scalar_lea.vmem %s1, 72
  %131 = vst [vmem:[%s130] sm:$0xff] %v129
  %s132 = scalar_lea.vmem %s0, 312
  %v133 = vld [vmem:[%s132] sm:$0xff]
  %s134 = scalar_lea.vmem %s1, 264
  %135 = vst [vmem:[%s134] sm:$0xff] %v133
  %s136 = scalar_lea.vmem %s0, 104
  %v137 = vld [vmem:[%s136] sm:$0xff]
  %s138 = scalar_lea.vmem %s1, 88
  %139 = vst [vmem:[%s138] sm:$0xff] %v137
  %s140 = scalar_lea.vmem %s0, 296
  %v141 = vld [vmem:[%s140] sm:$0xff]
  %s142 = scalar_lea.vmem %s1, 280
  %143 = vst [vmem:[%s142] sm:$0xff] %v141
  %s144 = scalar_lea.vmem %s0, 88
  %v145 = vld [vmem:[%s144] sm:$0xff]
  %s146 = scalar_lea.vmem %s1, 104
  %147 = vst [vmem:[%s146] sm:$0xff] %v145
  %s148 = scalar_lea.vmem %s0, 280
  %v149 = vld [vmem:[%s148] sm:$0xff]
  %s150 = scalar_lea.vmem %s1, 296
  %151 = vst [vmem:[%s150] sm:$0xff] %v149
  %s152 = scalar_lea.vmem %s0, 72
  %v153 = vld [vmem:[%s152] sm:$0xff]
  %s154 = scalar_lea.vmem %s1, 120
  %155 = vst [vmem:[%s154] sm:$0xff] %v153
  %s156 = scalar_lea.vmem %s0, 264
  %v157 = vld [vmem:[%s156] sm:$0xff]
  %s158 = scalar_lea.vmem %s1, 312
  %159 = vst [vmem:[%s158] sm:$0xff] %v157
  %s160 = scalar_lea.vmem %s0, 56
  %v161 = vld [vmem:[%s160] sm:$0xff]
  %s162 = scalar_lea.vmem %s1, 136
  %163 = vst [vmem:[%s162] sm:$0xff] %v161
  %s164 = scalar_lea.vmem %s0, 248
  %v165 = vld [vmem:[%s164] sm:$0xff]
  %s166 = scalar_lea.vmem %s1, 328
  %167 = vst [vmem:[%s166] sm:$0xff] %v165
  %s168 = scalar_lea.vmem %s0, 40
  %v169 = vld [vmem:[%s168] sm:$0xff]
  %s170 = scalar_lea.vmem %s1, 152
  %171 = vst [vmem:[%s170] sm:$0xff] %v169
  %s172 = scalar_lea.vmem %s0, 232
  %v173 = vld [vmem:[%s172] sm:$0xff]
  %s174 = scalar_lea.vmem %s1, 344
  %175 = vst [vmem:[%s174] sm:$0xff] %v173
  %s176 = scalar_lea.vmem %s0, 24
  %v177 = vld [vmem:[%s176] sm:$0xff]
  %s178 = scalar_lea.vmem %s1, 168
  %179 = vst [vmem:[%s178] sm:$0xff] %v177
  %s180 = scalar_lea.vmem %s0, 216
  %v181 = vld [vmem:[%s180] sm:$0xff]
  %s182 = scalar_lea.vmem %s1, 360
  %183 = vst [vmem:[%s182] sm:$0xff] %v181
  %s184 = scalar_lea.vmem %s0, 8
  %v185 = vld [vmem:[%s184] sm:$0xff]
  %s186 = scalar_lea.vmem %s1, 184
  %187 = vst [vmem:[%s186] sm:$0xff] %v185
  %s188 = scalar_lea.vmem %s0, 200
  %v189 = vld [vmem:[%s188] sm:$0xff]
  %s190 = scalar_lea.vmem %s1, 376
  %191 = vst [vmem:[%s190] sm:$0xff] %v189

// kernel: nors_forward.12
$region0: #{nors_forward.12}
  #allocation0 [shape = 'u32[]', space=smem, size = 0x4, offset = 0x4, fixed_abs, tag = 'smem constant byte address 0x4 - core index']
  #allocation1 [shape = 'u32[144,128]{1,0:T(1,128)}', space=vmem, size = 0x12000, scoped, tag = 'internal scratch']
  %s0 = inlined_call_operand.vmem [shape: f32[1250,16], index: 0, kind: input, shape index: {}]
  %s1 = inlined_call_operand.vmem [shape: f32[16,16], index: 1, kind: input, shape index: {}]
  %s2 = inlined_call_operand.vmem [shape: f32[1,16], index: 2, kind: input, shape index: {}]
  %s3 = inlined_call_operand.vmem [shape: f32[1250,16], index: 3, kind: input, shape index: {}]
  %s4 = inlined_call_operand.vmem [shape: f32[1250,16], index: 4, kind: output, shape index: {}]
  %s5 = sld [smem:[#allocation0]]
  $region97: #{nors_forward.12} parent=0
    _
  %s7 = ssub.s32 1, %s5
  %s8 = scalar_select 0, %s7, %s5
  $region1: #{nors_forward.12} parent=0
    #allocation2 [shape = 'u8[262144]{0}', space=vmem, size = 0x40000, scoped, tag = 'output window, operand 0']
    loop: start=0, step=1, limit=7
    $region2: #{nors_forward.12} parent=1 // loop_pre_header
      _
    $region3: #{nors_forward.12} parent=1 // loop_header
      %s10 = sphi 0, %s14
      %p11 = scmp.ge.s32.totalorder %s10, 7
      %s20 = sphi 0, %s22
      %s23 = sphi 0, %s20
      %s24 = sphi 0, %s23
      %s40 = sphi 0, %s24
      %s44 = sphi 0, %s44
      %s46 = sphi 0, %s44
      %s47 = sphi 0, %s46
      %s61 = sphi 0, %s47
      %s65 = sphi 0, %s65
      %s67 = sphi 0, %s65
      %s68 = sphi 0, %s67
      %s82 = sphi 0, %s68
      %s88 = sphi 0, %s90
      %s91 = sphi 0, %s88
      %s92 = sphi 0, %s91
      %s108 = sphi 0, %s92
      %s114 = sphi 0, %s116
      %s117 = sphi 0, %s114
      %s118 = sphi 0, %s117
      %s134 = sphi 0, %s118
    $region4: #{nors_forward.12} parent=1 // loop_header_branch
      %13 = sbr.rel (%p11) target = $region8
    $region5: #{nors_forward.12} parent=1 // loop_body
      %s15 = ssub.s32 %s10, 1
      %s16 = ssub.s32 %s10, 2
      %s17 = sadd.s32 %s10, 1
      %s18 = ssub.s32 %s10, %s17
      %p19 = scmp.eq.s32.totalorder %s18, 0
      %s21 = sadd.s32 %s20, 1
      %s22 = scalar_select %p19, %s20, %s21
      %p25 = pneg %p19
      %p26 = scmp.eq.s32.totalorder %s10, 4
      %p27 = por %p25, %p26
      %p28 = scmp.ne.s32.totalorder %s20, %s23
      %p29 = scmp.eq.s32.totalorder %s10, 0
      %p30 = por %p28, %p29
      %p31 = scmp.ne.s32.totalorder %s20, %s23
      %p32 = scmp.eq.s32.totalorder %s15, 4
      %p33 = por %p31, %p32
      %p34 = scmp.ne.s32.totalorder %s23, %s24
      %p35 = scmp.eq.s32.totalorder %s15, 0
      %p36 = por %p34, %p35
      %p37 = scmp.ne.s32.totalorder %s23, %s24
      %p38 = scmp.eq.s32.totalorder %s16, 4
      %p39 = por %p37, %p38
      %p41 = scmp.ne.s32.totalorder %s24, %s40
      %p42 = scmp.eq.s32.totalorder %s16, 0
      %p43 = por %p41, %p42
      %s45 = sadd.s32 %s44, 1
      %p48 = scmp.eq.s32.totalorder %s10, 4
      %p49 = scmp.ne.s32.totalorder %s44, %s46
      %p50 = scmp.eq.s32.totalorder %s10, 0
      %p51 = por %p49, %p50
      %p52 = scmp.ne.s32.totalorder %s44, %s46
      %p53 = scmp.eq.s32.totalorder %s15, 4
      %p54 = por %p52, %p53
      %p55 = scmp.ne.s32.totalorder %s46, %s47
      %p56 = scmp.eq.s32.totalorder %s15, 0
      %p57 = por %p55, %p56
      %p58 = scmp.ne.s32.totalorder %s46, %s47
      %p59 = scmp.eq.s32.totalorder %s16, 4
      %p60 = por %p58, %p59
      %p62 = scmp.ne.s32.totalorder %s47, %s61
      %p63 = scmp.eq.s32.totalorder %s16, 0
      %p64 = por %p62, %p63
      %s66 = sadd.s32 %s65, 1
      %p69 = scmp.eq.s32.totalorder %s10, 4
      %p70 = scmp.ne.s32.totalorder %s65, %s67
      %p71 = scmp.eq.s32.totalorder %s10, 0
      %p72 = por %p70, %p71
      %p73 = scmp.ne.s32.totalorder %s65, %s67
      %p74 = scmp.eq.s32.totalorder %s15, 4
      %p75 = por %p73, %p74
      %p76 = scmp.ne.s32.totalorder %s67, %s68
      %p77 = scmp.eq.s32.totalorder %s15, 0
      %p78 = por %p76, %p77
      %p79 = scmp.ne.s32.totalorder %s67, %s68
      %p80 = scmp.eq.s32.totalorder %s16, 4
      %p81 = por %p79, %p80
      %p83 = scmp.ne.s32.totalorder %s68, %s82
      %p84 = scmp.eq.s32.totalorder %s16, 0
      %p85 = por %p83, %p84
      %s86 = ssub.s32 %s10, %s17
      %p87 = scmp.eq.s32.totalorder %s86, 0
      %s89 = sadd.s32 %s88, 1
      %s90 = scalar_select %p87, %s88, %s89
      %p93 = pneg %p87
      %p94 = scmp.eq.s32.totalorder %s10, 4
      %p95 = por %p93, %p94
      %p96 = scmp.ne.s32.totalorder %s88, %s91
      %p97 = scmp.eq.s32.totalorder %s10, 0
      %p98 = por %p96, %p97
      %p99 = scmp.ne.s32.totalorder %s88, %s91
      %p100 = scmp.eq.s32.totalorder %s15, 4
      %p101 = por %p99, %p100
      %p102 = scmp.ne.s32.totalorder %s91, %s92
      %p103 = scmp.eq.s32.totalorder %s15, 0
      %p104 = por %p102, %p103
      %p105 = scmp.ne.s32.totalorder %s91, %s92
      %p106 = scmp.eq.s32.totalorder %s16, 4
      %p107 = por %p105, %p106
      %p109 = scmp.ne.s32.totalorder %s92, %s108
      %p110 = scmp.eq.s32.totalorder %s16, 0
      %p111 = por %p109, %p110
      %s112 = ssub.s32 %s10, %s17
      %p113 = scmp.eq.s32.totalorder %s112, 0
      %s115 = sadd.s32 %s114, 1
      %s116 = scalar_select %p113, %s114, %s115
      %p119 = pneg %p113
      %p120 = scmp.eq.s32.totalorder %s10, 4
      %p121 = por %p119, %p120
      %p122 = scmp.ne.s32.totalorder %s114, %s117
      %p123 = scmp.eq.s32.totalorder %s10, 0
      %p124 = por %p122, %p123
      %p125 = scmp.ne.s32.totalorder %s114, %s117
      %p126 = scmp.eq.s32.totalorder %s15, 4
      %p127 = por %p125, %p126
      %p128 = scmp.ne.s32.totalorder %s117, %s118
      %p129 = scmp.eq.s32.totalorder %s15, 0
      %p130 = por %p128, %p129
      %p131 = scmp.ne.s32.totalorder %s117, %s118
      %p132 = scmp.eq.s32.totalorder %s16, 4
      %p133 = por %p131, %p132
      %p135 = scmp.ne.s32.totalorder %s118, %s134
      %p136 = scmp.eq.s32.totalorder %s16, 0
      %p137 = por %p135, %p136
      %p138 = scmp.le.s32.totalorder 1, %s10
      %p139 = scmp.lt.s32.totalorder %s10, 6
      %p140 = pnand %p138, %p139
      %p141 = pneg %p140
      // Predicated region
      $region9: #{nors_forward.12} parent=5 // pred_check
        _
      $region10: #{nors_forward.12} parent=5 // pred_check_branch
        %143 = sbr.rel (%p140) target = $region12
      $region11: #{nors_forward.12} parent=5 // pred_region
        %s144 = ssub.s32 %s10, 1
        // Predicated region
        $region13: #{nors_forward.12} parent=11 // pred_check
          %p145 = pneg %p57
        $region14: #{nors_forward.12} parent=11 // pred_check_branch
          %147 = sbr.rel (%p145) target = $region16
        $region15: #{nors_forward.12} parent=11 // pred_region
          _
        $region16: #{nors_forward.12} parent=11 // pred_fallthru
          _
        // Predicated region
        $region17: #{nors_forward.12} parent=11 // pred_check
          %p148 = pneg %p78
        $region18: #{nors_forward.12} parent=11 // pred_check_branch
          %150 = sbr.rel (%p148) target = $region20
        $region19: #{nors_forward.12} parent=11 // pred_region
          _
        $region20: #{nors_forward.12} parent=11 // pred_fallthru
          _
      $region12: #{nors_forward.12} parent=5 // pred_fallthru
        _
      %p151 = scmp.lt.s32.totalorder %s10, 5
      // Predicated region
      $region21: #{nors_forward.12} parent=5 // pred_check
        %p152 = pneg %p151
      $region22: #{nors_forward.12} parent=5 // pred_check_branch
        %154 = sbr.rel (%p152) target = $region24
      $region23: #{nors_forward.12} parent=5 // pred_region
        // Predicated region
        $region25: #{nors_forward.12} parent=23 // pred_check
          %p155 = pneg %p30
        $region26: #{nors_forward.12} parent=23 // pred_check_branch
          %157 = sbr.rel (%p155) target = $region28
        $region27: #{nors_forward.12} parent=23 // pred_region
          %s158 = smul.u32 32, %s10
          %s159 = ssub.s32 157, %s158
          %p160 = scmp.lt.s32.totalorder %s159, 32
          %s161 = scalar_select %p160, %s159, 32
          %s162 = smul.u32 128, %s161
          %p163 = scmp.lt.s32.totalorder %s158, 156
          %s164 = scalar_select %p163, %s158, 156
          %s165 = smul.addr %s164, 8
          %s166 = scalar_lea.vmem %s0, %s165
          %s167 = smul.u32 32, %s10
          %s168 = ssub.s32 157, %s167
          %p169 = scmp.lt.s32.totalorder %s168, 32
          %s170 = scalar_select %p169, %s168, 32
          %s171 = smul.u32 128, %s170
        $region28: #{nors_forward.12} parent=23 // pred_fallthru
          _
        // Predicated region
        $region29: #{nors_forward.12} parent=23 // pred_check
          %p172 = pneg %p98
        $region30: #{nors_forward.12} parent=23 // pred_check_branch
          %174 = sbr.rel (%p172) target = $region32
        $region31: #{nors_forward.12} parent=23 // pred_region
          %s175 = smul.u32 32, %s10
          %s176 = ssub.s32 157, %s175
          %p177 = scmp.lt.s32.totalorder %s176, 32
          %s178 = scalar_select %p177, %s176, 32
          %s179 = smul.u32 128, %s178
          %p180 = scmp.lt.s32.totalorder %s175, 156
          %s181 = scalar_select %p180, %s175, 156
          %s182 = smul.addr %s181, 8
          %s183 = scalar_lea.vmem %s3, %s182
          %s184 = smul.u32 32, %s10
          %s185 = ssub.s32 157, %s184
          %p186 = scmp.lt.s32.totalorder %s185, 32
          %s187 = scalar_select %p186, %s185, 32
          %s188 = smul.u32 128, %s187
        $region32: #{nors_forward.12} parent=23 // pred_fallthru
          _
      $region24: #{nors_forward.12} parent=5 // pred_fallthru
        _
      %p189 = scmp.le.s32.totalorder 1, %s10
      %p190 = scmp.lt.s32.totalorder %s10, 6
      %p191 = pnand %p189, %p190
      %p192 = pneg %p191
      // Predicated region
      $region33: #{nors_forward.12} parent=5 // pred_check
        _
      $region34: #{nors_forward.12} parent=5 // pred_check_branch
        %194 = sbr.rel (%p191) target = $region36
      $region35: #{nors_forward.12} parent=5 // pred_region
        %s195 = ssub.s32 %s10, 1
        %s196 = smul.u32 32, %s15
        %s197 = ssub.s32 157, %s196
        %p198 = scmp.lt.s32.totalorder %s197, 32
        %s199 = scalar_select %p198, %s197, 32
        %s200 = smul.u32 128, %s199
        %p201 = scmp.lt.s32.totalorder %s196, 156
        %s202 = scalar_select %p201, %s196, 156
        %s203 = smul.addr %s202, 8
        %s204 = scalar_lea.vmem %s0, %s203
        %p205 = pneg %p36
        %p206 = pneg %p33
        %p207 = pneg %p57
        %p208 = pneg %p54
        %p209 = pneg %p78
        %p210 = pneg %p75
        %s211 = smul.u32 32, %s15
        %s212 = ssub.s32 157, %s211
        %p213 = scmp.lt.s32.totalorder %s212, 32
        %s214 = scalar_select %p213, %s212, 32
        %s215 = smul.u32 128, %s214
        %p216 = scmp.lt.s32.totalorder %s211, 156
        %s217 = scalar_select %p216, %s211, 156
        %s218 = smul.addr %s217, 8
        %s219 = scalar_lea.vmem %s3, %s218
        %p220 = pneg %p104
        %p221 = pneg %p101
        %p222 = pneg %p130
        %p223 = pneg %p127
        %s224 = sand.u32 %s117, 1
        %s225 = sand.u32 %s117, 1
        %s226 = smul.addr %s225, 256
        %s227 = scalar_lea.vmem [#allocation2], %s226
        %s228 = smul.u32 32, %s15
        %s229 = ssub.s32 157, %s228
        %p230 = scmp.lt.s32.totalorder %s229, 32
        %s231 = scalar_select %p230, %s229, 32
        %s232 = smul.u32 128, %s231
        %p233 = scmp.lt.s32.totalorder %s228, 156
        %s234 = scalar_select %p233, %s228, 156
        %s235 = smul.addr %s234, 8
        %s236 = scalar_lea.vmem %s0, %s235
        %s237 = smul.u32 32, %s15
        %s238 = ssub.s32 157, %s237
        %p239 = scmp.lt.s32.totalorder %s238, 32
        %s240 = scalar_select %p239, %s238, 32
        %s241 = smul.u32 128, %s240
        %s242 = smul.u32 32, %s15
        %s243 = ssub.s32 157, %s242
        %p244 = scmp.lt.s32.totalorder %s243, 32
        %s245 = scalar_select %p244, %s243, 32
        %s246 = smul.u32 128, %s245
        %p247 = scmp.lt.s32.totalorder %s242, 156
        %s248 = scalar_select %p247, %s242, 156
        %s249 = smul.addr %s248, 8
        %s250 = scalar_lea.vmem %s3, %s249
        %s251 = smul.u32 32, %s15
        %s252 = ssub.s32 157, %s251
        %p253 = scmp.lt.s32.totalorder %s252, 32
        %s254 = scalar_select %p253, %s252, 32
        %s255 = smul.u32 128, %s254
        %s256 = smul.u32 32, %s15
        %s257 = ssub.s32 157, %s256
        %p258 = scmp.lt.s32.totalorder %s257, 32
        %s259 = scalar_select %p258, %s257, 32
        %s260 = smul.u32 128, %s259
        %v261 = vld [vmem:[%s236] sm:$0xff]
        %v262 = vld [vmem:[%s236 + $0x8] sm:$0xff]
        %v263 = vld [vmem:[%s236 + $0x10] sm:$0xff]
        %v264 = vld [vmem:[%s236 + $0x18] sm:$0xff]
        %v265 = vld [vmem:[%s236 + $0x20] sm:$0xff]
        %v266 = vld [vmem:[%s236 + $0x28] sm:$0xff]
        %v267 = vld [vmem:[%s236 + $0x30] sm:$0xff]
        %v268 = vld [vmem:[%s236 + $0x38] sm:$0xff]
        %v269 = vld [vmem:[%s236 + $0x40] sm:$0xff]
        %v270 = vld [vmem:[%s236 + $0x48] sm:$0xff]
        %v271 = vld [vmem:[%s236 + $0x50] sm:$0xff]
        %v272 = vld [vmem:[%s236 + $0x58] sm:$0xff]
        %v273 = vld [vmem:[%s236 + $0x60] sm:$0xff]
        %v274 = vld [vmem:[%s236 + $0x68] sm:$0xff]
        %v275 = vld [vmem:[%s236 + $0x70] sm:$0xff]
        %v276 = vld [vmem:[%s236 + $0x78] sm:$0xff]
        %v277 = vld [vmem:[%s236 + $0x80] sm:$0xff]
        %v278 = vld [vmem:[%s236 + $0x88] sm:$0xff]
        %v279 = vld [vmem:[%s236 + $0x90] sm:$0xff]
        %v280 = vld [vmem:[%s236 + $0x98] sm:$0xff]
        %v281 = vld [vmem:[%s236 + $0xa0] sm:$0xff]
        %v282 = vld [vmem:[%s236 + $0xa8] sm:$0xff]
        %v283 = vld [vmem:[%s236 + $0xb0] sm:$0xff]
        %v284 = vld [vmem:[%s236 + $0xb8] sm:$0xff]
        %v285 = vld [vmem:[%s236 + $0xc0] sm:$0xff]
        %v286 = vld [vmem:[%s236 + $0xc8] sm:$0xff]
        %v287 = vld [vmem:[%s236 + $0xd0] sm:$0xff]
        %v288 = vld [vmem:[%s236 + $0xd8] sm:$0xff]
        %v289 = vld [vmem:[%s236 + $0xe0] sm:$0xff]
        %v290 = vld [vmem:[%s236 + $0xe8] sm:$0xff]
        %v291 = vld [vmem:[%s236 + $0xf0] sm:$0xff]
        %v292 = vld [vmem:[%s236 + $0xf8] sm:$0xff]
        %v293 = vld [vmem:[%s1] sm:$0xff]
        %v294 = vld [vmem:[%s1 + $0x8] sm:$0xff]
        %v295 = vld [vmem:[%s2] sm:$0x1]
        %v297 = vlaneseq
        %v298 = vshrl.u32 %v297, 7
        %v299 = vsub.s32 0, %v298
        %v300 = vrot.slane %v295, %v299
        %vm302 = vcmask 130048
        %v304 = vsel %vm302, %v261, 0
        %v307 = vsel %vm302, %v262, 0
        %v310 = vsel %vm302, %v263, 0
        %v313 = vsel %vm302, %v264, 0
        %v316 = vsel %vm302, %v265, 0
        %v319 = vsel %vm302, %v266, 0
        %v322 = vsel %vm302, %v267, 0
        %v325 = vsel %vm302, %v268, 0
        %v328 = vsel %vm302, %v269, 0
        %v331 = vsel %vm302, %v270, 0
        %v334 = vsel %vm302, %v271, 0
        %v337 = vsel %vm302, %v272, 0
        %v340 = vsel %vm302, %v273, 0
        %v343 = vsel %vm302, %v274, 0
        %v346 = vsel %vm302, %v275, 0
        %v349 = vsel %vm302, %v276, 0
        %v352 = vsel %vm302, %v277, 0
        %v355 = vsel %vm302, %v278, 0
        %v358 = vsel %vm302, %v279, 0
        %v361 = vsel %vm302, %v280, 0
        %v364 = vsel %vm302, %v281, 0
        %v367 = vsel %vm302, %v282, 0
        %v370 = vsel %vm302, %v283, 0
        %v373 = vsel %vm302, %v284, 0
        %v376 = vsel %vm302, %v285, 0
        %v379 = vsel %vm302, %v286, 0
        %v382 = vsel %vm302, %v287, 0
        %v385 = vsel %vm302, %v288, 0
        %v388 = vsel %vm302, %v289, 0
        %v391 = vsel %vm302, %v290, 0
        %v394 = vsel %vm302, %v291, 0
        %v397 = vsel %vm302, %v292, 0
        %399 = vmatprep.subr.mxu0 0.0
        %400 = vmatpush1.msra.mxu0 %v293
        %401 = vmatprep.subr.mxu0 0.0
        %402 = vmatpush1.msra.mxu0 %v294
        %403 = vmatprep.subr.mxu0 0.0
        %404 = vmatpush1.msra.mxu0 0.0
        %405 = vmatprep.subr.mxu0 0.0
        %406 = vmatpush1.msra.mxu0 0.0
        %407 = vmatprep.subr.mxu0 0.0
        %408 = vmatpush1.msra.mxu0 0.0
        %409 = vmatprep.subr.mxu0 0.0
        %410 = vmatpush1.msra.mxu0 0.0
        %411 = vmatprep.subr.mxu0 0.0
        %412 = vmatpush1.msra.mxu0 0.0
        %413 = vmatprep.subr.mxu0 0.0
        %414 = vmatpush1.msra.mxu0 0.0
        %415 = vmatprep.subr.mxu0 0.0
        %416 = vmatpush1.msra.mxu0 0.0
        %417 = vmatprep.subr.mxu0 0.0
        %418 = vmatpush1.msra.mxu0 0.0
        %419 = vmatprep.subr.mxu0 0.0
        %420 = vmatpush1.msra.mxu0 0.0
        %421 = vmatprep.subr.mxu0 0.0
        %422 = vmatpush1.msra.mxu0 0.0
        %423 = vmatprep.subr.mxu0 0.0
        %424 = vmatpush1.msra.mxu0 0.0
        %425 = vmatprep.subr.mxu0 0.0
        %426 = vmatpush1.msra.mxu0 0.0
        %427 = vmatprep.subr.mxu0 0.0
        %428 = vmatpush1.msra.mxu0 0.0
        %429 = vmatprep.subr.mxu0 0.0
        %430 = vmatpush1.msra.mxu0 0.0
        %431 = vmatprep.subr.mxu0 0.0
        %432 = vmatpush1.msra.mxu0 0.0
        %433 = vmatprep.subr.mxu0 0.0
        %434 = vmatpush1.msra.mxu0 0.0
        %435 = vmatprep.subr.mxu0 0.0
        %436 = vmatpush1.msra.mxu0 0.0
        %437 = vmatprep.subr.mxu0 0.0
        %438 = vmatpush1.msra.mxu0 0.0
        %439 = vmatprep.subr.mxu0 0.0
        %440 = vmatpush1.msra.mxu0 0.0
        %441 = vmatprep.subr.mxu0 0.0
        %442 = vmatpush1.msra.mxu0 0.0
        %443 = vmatprep.subr.mxu0 0.0
        %444 = vmatpush1.msra.mxu0 0.0
        %445 = vmatprep.subr.mxu0 0.0
        %446 = vmatpush1.msra.mxu0 0.0
        %447 = vmatprep.subr.mxu0 0.0
        %448 = vmatpush1.msra.mxu0 0.0
        %449 = vmatprep.subr.mxu0 0.0
        %450 = vmatpush1.msra.mxu0 0.0
        %451 = vmatprep.subr.mxu0 0.0
        %452 = vmatpush1.msra.mxu0 0.0
        %453 = vmatprep.subr.mxu0 0.0
        %454 = vmatpush1.msra.mxu0 0.0
        %455 = vmatprep.subr.mxu0 0.0
        %456 = vmatpush1.msra.mxu0 0.0
        %457 = vmatprep.subr.mxu0 0.0
        %458 = vmatpush1.msra.mxu0 0.0
        %459 = vmatprep.subr.mxu0 0.0
        %460 = vmatpush1.msra.mxu0 0.0
        %461 = vmatprep.subr.mxu0 0.0
        %462 = vmatpush1.msra.mxu0 0.0
        %463 = vmatprep.mubr.f32.mxu0 0.0
        %464 = vmatmul.mubr.f32.gmra.mrb[0].mxu0 %v304
        %v465 = vpop.f32.mrb[0].mxu0
        %v466 = vadd.f32 %v300, %v465
        %v467 = vpop.f32.mrb[0].mxu0
        %468 = vmatprep.mubr.f32.mxu0 0.0
        %469 = vmatmul.mubr.f32.gmra.mrb[0].mxu0 %v307
        %v470 = vpop.f32.mrb[0].mxu0
        %v471 = vadd.f32 %v300, %v470
        %v472 = vpop.f32.mrb[0].mxu0
        %473 = vmatprep.mubr.f32.mxu0 0.0
        %474 = vmatmul.mubr.f32.gmra.mrb[0].mxu0 %v310
        %v475 = vpop.f32.mrb[0].mxu0
        %v476 = vadd.f32 %v300, %v475
        %v477 = vpop.f32.mrb[0].mxu0
        %478 = vmatprep.mubr.f32.mxu0 0.0
        %479 = vmatmul.mubr.f32.gmra.mrb[0].mxu0 %v313
        %v480 = vpop.f32.mrb[0].mxu0
        %v481 = vadd.f32 %v300, %v480
        %v482 = vpop.f32.mrb[0].mxu0
        %483 = vmatprep.mubr.f32.mxu0 0.0
        %484 = vmatmul.mubr.f32.gmra.mrb[0].mxu0 %v316
        %v485 = vpop.f32.mrb[0].mxu0
        %v486 = vadd.f32 %v300, %v485
        %v487 = vpop.f32.mrb[0].mxu0
        %488 = vmatprep.mubr.f32.mxu0 0.0
        %489 = vmatmul.mubr.f32.gmra.mrb[0].mxu0 %v319
        %v490 = vpop.f32.mrb[0].mxu0
        %v491 = vadd.f32 %v300, %v490
        %v492 = vpop.f32.mrb[0].mxu0
        %493 = vmatprep.mubr.f32.mxu0 0.0
        %494 = vmatmul.mubr.f32.gmra.mrb[0].mxu0 %v322
        %v495 = vpop.f32.mrb[0].mxu0
        %v496 = vadd.f32 %v300, %v495
        %v497 = vpop.f32.mrb[0].mxu0
        %498 = vmatprep.mubr.f32.mxu0 0.0
        %499 = vmatmul.mubr.f32.gmra.mrb[0].mxu0 %v325
        %v500 = vpop.f32.mrb[0].mxu0
        %v501 = vadd.f32 %v300, %v500
        %v502 = vpop.f32.mrb[0].mxu0
        %503 = vmatprep.mubr.f32.mxu0 0.0
        %504 = vmatmul.mubr.f32.gmra.mrb[0].mxu0 %v328
        %v505 = vpop.f32.mrb[0].mxu0
        %v506 = vadd.f32 %v300, %v505
        %v507 = vpop.f32.mrb[0].mxu0
        %508 = vmatprep.mubr.f32.mxu0 0.0
        %509 = vmatmul.mubr.f32.gmra.mrb[0].mxu0 %v331
        %v510 = vpop.f32.mrb[0].mxu0
        %v511 = vadd.f32 %v300, %v510
        %v512 = vpop.f32.mrb[0].mxu0
        %513 = vmatprep.mubr.f32.mxu0 0.0
        %514 = vmatmul.mubr.f32.gmra.mrb[0].mxu0 %v334
        %v515 = vpop.f32.mrb[0].mxu0
        %v516 = vadd.f32 %v300, %v515
        %v517 = vpop.f32.mrb[0].mxu0
        %518 = vmatprep.mubr.f32.mxu0 0.0
        %519 = vmatmul.mubr.f32.gmra.mrb[0].mxu0 %v337
        %v520 = vpop.f32.mrb[0].mxu0
        %v521 = vadd.f32 %v300, %v520
        %v522 = vpop.f32.mrb[0].mxu0
        %523 = vmatprep.mubr.f32.mxu0 0.0
        %524 = vmatmul.mubr.f32.gmra.mrb[0].mxu0 %v340
        %v525 = vpop.f32.mrb[0].mxu0
        %v526 = vadd.f32 %v300, %v525
        %v527 = vpop.f32.mrb[0].mxu0
        %528 = vmatprep.mubr.f32.mxu0 0.0
        %529 = vmatmul.mubr.f32.gmra.mrb[0].mxu0 %v343
        %v530 = vpop.f32.mrb[0].mxu0
        %v531 = vadd.f32 %v300, %v530
        %v532 = vpop.f32.mrb[0].mxu0
        %533 = vmatprep.mubr.f32.mxu0 0.0
        %534 = vmatmul.mubr.f32.gmra.mrb[0].mxu0 %v346
        %v535 = vpop.f32.mrb[0].mxu0
        %v536 = vadd.f32 %v300, %v535
        %v537 = vpop.f32.mrb[0].mxu0
        %538 = vmatprep.mubr.f32.mxu0 0.0
        %539 = vmatmul.mubr.f32.gmra.mrb[0].mxu0 %v349
        %v540 = vpop.f32.mrb[0].mxu0
        %v541 = vadd.f32 %v300, %v540
        %v542 = vpop.f32.mrb[0].mxu0
        %543 = vmatprep.mubr.f32.mxu0 0.0
        %544 = vmatmul.mubr.f32.gmra.mrb[0].mxu0 %v352
        %v545 = vpop.f32.mrb[0].mxu0
        %v546 = vadd.f32 %v300, %v545
        %v547 = vpop.f32.mrb[0].mxu0
        %548 = vmatprep.mubr.f32.mxu0 0.0
        %549 = vmatmul.mubr.f32.gmra.mrb[0].mxu0 %v355
        %v550 = vpop.f32.mrb[0].mxu0
        %v551 = vadd.f32 %v300, %v550
        %v552 = vpop.f32.mrb[0].mxu0
        %553 = vmatprep.mubr.f32.mxu0 0.0
        %554 = vmatmul.mubr.f32.gmra.mrb[0].mxu0 %v358
        %v555 = vpop.f32.mrb[0].mxu0
        %v556 = vadd.f32 %v300, %v555
        %v557 = vpop.f32.mrb[0].mxu0
        %558 = vmatprep.mubr.f32.mxu0 0.0
        %559 = vmatmul.mubr.f32.gmra.mrb[0].mxu0 %v361
        %v560 = vpop.f32.mrb[0].mxu0
        %v561 = vadd.f32 %v300, %v560
        %v562 = vpop.f32.mrb[0].mxu0
        %563 = vmatprep.mubr.f32.mxu0 0.0
        %564 = vmatmul.mubr.f32.gmra.mrb[0].mxu0 %v364
        %v565 = vpop.f32.mrb[0].mxu0
        %v566 = vadd.f32 %v300, %v565
        %v567 = vpop.f32.mrb[0].mxu0
        %568 = vmatprep.mubr.f32.mxu0 0.0
        %569 = vmatmul.mubr.f32.gmra.mrb[0].mxu0 %v367
        %v570 = vpop.f32.mrb[0].mxu0
        %v571 = vadd.f32 %v300, %v570
        %v572 = vpop.f32.mrb[0].mxu0
        %573 = vmatprep.mubr.f32.mxu0 0.0
        %574 = vmatmul.mubr.f32.gmra.mrb[0].mxu0 %v370
        %v575 = vpop.f32.mrb[0].mxu0
        %v576 = vadd.f32 %v300, %v575
        %v577 = vpop.f32.mrb[0].mxu0
        %578 = vmatprep.mubr.f32.mxu0 0.0
        %579 = vmatmul.mubr.f32.gmra.mrb[0].mxu0 %v373
        %v580 = vpop.f32.mrb[0].mxu0
        %v581 = vadd.f32 %v300, %v580
        %v582 = vpop.f32.mrb[0].mxu0
        %583 = vmatprep.mubr.f32.mxu0 0.0
        %584 = vmatmul.mubr.f32.gmra.mrb[0].mxu0 %v376
        %v585 = vpop.f32.mrb[0].mxu0
        %v586 = vadd.f32 %v300, %v585
        %v587 = vpop.f32.mrb[0].mxu0
        %588 = vmatprep.mubr.f32.mxu0 0.0
        %589 = vmatmul.mubr.f32.gmra.mrb[0].mxu0 %v379
        %v590 = vpop.f32.mrb[0].mxu0
        %v591 = vadd.f32 %v300, %v590
        %v592 = vpop.f32.mrb[0].mxu0
        %593 = vmatprep.mubr.f32.mxu0 0.0
        %594 = vmatmul.mubr.f32.gmra.mrb[0].mxu0 %v382
        %v595 = vpop.f32.mrb[0].mxu0
        %v596 = vadd.f32 %v300, %v595
        %v597 = vpop.f32.mrb[0].mxu0
        %598 = vmatprep.mubr.f32.mxu0 0.0
        %599 = vmatmul.mubr.f32.gmra.mrb[0].mxu0 %v385
        %v600 = vpop.f32.mrb[0].mxu0
        %v601 = vadd.f32 %v300, %v600
        %v602 = vpop.f32.mrb[0].mxu0
        %603 = vmatprep.mubr.f32.mxu0 0.0
        %604 = vmatmul.mubr.f32.gmra.mrb[0].mxu0 %v388
        %v605 = vpop.f32.mrb[0].mxu0
        %v606 = vadd.f32 %v300, %v605
        %v607 = vpop.f32.mrb[0].mxu0
        %608 = vmatprep.mubr.f32.mxu0 0.0
        %609 = vmatmul.mubr.f32.gmra.mrb[0].mxu0 %v391
        %v610 = vpop.f32.mrb[0].mxu0
        %v611 = vadd.f32 %v300, %v610
        %v612 = vpop.f32.mrb[0].mxu0
        %613 = vmatprep.mubr.f32.mxu0 0.0
        %614 = vmatmul.mubr.f32.gmra.mrb[0].mxu0 %v394
        %v615 = vpop.f32.mrb[0].mxu0
        %v616 = vadd.f32 %v300, %v615
        %v617 = vpop.f32.mrb[0].mxu0
        %618 = vmatprep.mubr.f32.mxu0 0.0
        %619 = vmatmul.mubr.f32.gmra.mrb[0].mxu0 %v397
        %v620 = vpop.f32.mrb[0].mxu0
        %v621 = vadd.f32 %v300, %v620
        %v622 = vpop.f32.mrb[0].mxu0
        %623 = vdwg.mxu0
        %v624 = vld [vmem:[%s250] sm:$0xff]
        %v625 = vld [vmem:[%s250 + $0x8] sm:$0xff]
        %v626 = vld [vmem:[%s250 + $0x10] sm:$0xff]
        %v627 = vld [vmem:[%s250 + $0x18] sm:$0xff]
        %v628 = vld [vmem:[%s250 + $0x20] sm:$0xff]
        %v629 = vld [vmem:[%s250 + $0x28] sm:$0xff]
        %v630 = vld [vmem:[%s250 + $0x30] sm:$0xff]
        %v631 = vld [vmem:[%s250 + $0x38] sm:$0xff]
        %v632 = vld [vmem:[%s250 + $0x40] sm:$0xff]
        %v633 = vld [vmem:[%s250 + $0x48] sm:$0xff]
        %v634 = vld [vmem:[%s250 + $0x50] sm:$0xff]
        %v635 = vld [vmem:[%s250 + $0x58] sm:$0xff]
        %v636 = vld [vmem:[%s250 + $0x60] sm:$0xff]
        %v637 = vld [vmem:[%s250 + $0x68] sm:$0xff]
        %v638 = vld [vmem:[%s250 + $0x70] sm:$0xff]
        %v639 = vld [vmem:[%s250 + $0x78] sm:$0xff]
        %v640 = vld [vmem:[%s250 + $0x80] sm:$0xff]
        %v641 = vld [vmem:[%s250 + $0x88] sm:$0xff]
        %v642 = vld [vmem:[%s250 + $0x90] sm:$0xff]
        %v643 = vld [vmem:[%s250 + $0x98] sm:$0xff]
        %v644 = vld [vmem:[%s250 + $0xa0] sm:$0xff]
        %v645 = vld [vmem:[%s250 + $0xa8] sm:$0xff]
        %v646 = vld [vmem:[%s250 + $0xb0] sm:$0xff]
        %v647 = vld [vmem:[%s250 + $0xb8] sm:$0xff]
        %v648 = vld [vmem:[%s250 + $0xc0] sm:$0xff]
        %v649 = vld [vmem:[%s250 + $0xc8] sm:$0xff]
        %v650 = vld [vmem:[%s250 + $0xd0] sm:$0xff]
        %v651 = vld [vmem:[%s250 + $0xd8] sm:$0xff]
        %v652 = vld [vmem:[%s250 + $0xe0] sm:$0xff]
        %v653 = vld [vmem:[%s250 + $0xe8] sm:$0xff]
        %v654 = vld [vmem:[%s250 + $0xf0] sm:$0xff]
        %v655 = vld [vmem:[%s250 + $0xf8] sm:$0xff]
        %v656 = vadd.f32 %v466, %v624
        %v657 = vadd.f32 %v471, %v625
        %v658 = vadd.f32 %v476, %v626
        %v659 = vadd.f32 %v481, %v627
        %v660 = vadd.f32 %v486, %v628
        %v661 = vadd.f32 %v491, %v629
        %v662 = vadd.f32 %v496, %v630
        %v663 = vadd.f32 %v501, %v631
        %v664 = vadd.f32 %v506, %v632
        %v665 = vadd.f32 %v511, %v633
        %v666 = vadd.f32 %v516, %v634
        %v667 = vadd.f32 %v521, %v635
        %v668 = vadd.f32 %v526, %v636
        %v669 = vadd.f32 %v531, %v637
        %v670 = vadd.f32 %v536, %v638
        %v671 = vadd.f32 %v541, %v639
        %v672 = vadd.f32 %v546, %v640
        %v673 = vadd.f32 %v551, %v641
        %v674 = vadd.f32 %v556, %v642
        %v675 = vadd.f32 %v561, %v643
        %v676 = vadd.f32 %v566, %v644
        %v677 = vadd.f32 %v571, %v645
        %v678 = vadd.f32 %v576, %v646
        %v679 = vadd.f32 %v581, %v647
        %v680 = vadd.f32 %v586, %v648
        %v681 = vadd.f32 %v591, %v649
        %v682 = vadd.f32 %v596, %v650
        %v683 = vadd.f32 %v601, %v651
        %v684 = vadd.f32 %v606, %v652
        %v685 = vadd.f32 %v611, %v653
        %v686 = vadd.f32 %v616, %v654
        %v687 = vadd.f32 %v621, %v655
        %v688 = vmul.f32 %v656, 0.5
        %v689 = vmul.f32 %v657, 0.5
        %v690 = vmul.f32 %v658, 0.5
        %v691 = vmul.f32 %v659, 0.5
        %v692 = vmul.f32 %v660, 0.5
        %v693 = vmul.f32 %v661, 0.5
        %v694 = vmul.f32 %v662, 0.5
        %v695 = vmul.f32 %v663, 0.5
        %v696 = vmul.f32 %v664, 0.5
        %v697 = vmul.f32 %v665, 0.5
        %v698 = vmul.f32 %v666, 0.5
        %v699 = vmul.f32 %v667, 0.5
        %v700 = vmul.f32 %v668, 0.5
        %v701 = vmul.f32 %v669, 0.5
        %v702 = vmul.f32 %v670, 0.5
        %v703 = vmul.f32 %v671, 0.5
        %v704 = vmul.f32 %v672, 0.5
        %v705 = vmul.f32 %v673, 0.5
        %v706 = vmul.f32 %v674, 0.5
        %v707 = vmul.f32 %v675, 0.5
        %v708 = vmul.f32 %v676, 0.5
        %v709 = vmul.f32 %v677, 0.5
        %v710 = vmul.f32 %v678, 0.5
        %v711 = vmul.f32 %v679, 0.5
        %v712 = vmul.f32 %v680, 0.5
        %v713 = vmul.f32 %v681, 0.5
        %v714 = vmul.f32 %v682, 0.5
        %v715 = vmul.f32 %v683, 0.5
        %v716 = vmul.f32 %v684, 0.5
        %v717 = vmul.f32 %v685, 0.5
        %v718 = vmul.f32 %v686, 0.5
        %v719 = vmul.f32 %v687, 0.5
        %v720 = vmul.f32 %v656, 0.70710677
        %v721 = vmul.f32 %v657, 0.70710677
        %v722 = vmul.f32 %v658, 0.70710677
        %v723 = vmul.f32 %v659, 0.70710677
        %v724 = vmul.f32 %v660, 0.70710677
        %v725 = vmul.f32 %v661, 0.70710677
        %v726 = vmul.f32 %v662, 0.70710677
        %v727 = vmul.f32 %v663, 0.70710677
        %v728 = vmul.f32 %v664, 0.70710677
        %v729 = vmul.f32 %v665, 0.70710677
        %v730 = vmul.f32 %v666, 0.70710677
        %v731 = vmul.f32 %v667, 0.70710677
        %v732 = vmul.f32 %v668, 0.70710677
        %v733 = vmul.f32 %v669, 0.70710677
        %v734 = vmul.f32 %v670, 0.70710677
        %v735 = vmul.f32 %v671, 0.70710677
        %v736 = vmul.f32 %v672, 0.70710677
        %v737 = vmul.f32 %v673, 0.70710677
        %v738 = vmul.f32 %v674, 0.70710677
        %v739 = vmul.f32 %v675, 0.70710677
        %v740 = vmul.f32 %v676, 0.70710677
        %v741 = vmul.f32 %v677, 0.70710677
        %v742 = vmul.f32 %v678, 0.70710677
        %v743 = vmul.f32 %v679, 0.70710677
        %v744 = vmul.f32 %v680, 0.70710677
        %v745 = vmul.f32 %v681, 0.70710677
        %v746 = vmul.f32 %v682, 0.70710677
        %v747 = vmul.f32 %v683, 0.70710677
        %v748 = vmul.f32 %v684, 0.70710677
        %v749 = vmul.f32 %v685, 0.70710677
        %v750 = vmul.f32 %v686, 0.70710677
        %v751 = vmul.f32 %v687, 0.70710677
        %v752 = verf.f32.pop %v720
        %v753 = verf.f32.pop %v721
        %v754 = verf.f32.pop %v722
        %v755 = verf.f32.pop %v723
        %v756 = verf.f32.pop %v724
        %v757 = verf.f32.pop %v725
        %v758 = verf.f32.pop %v726
        %v759 = verf.f32.pop %v727
        %v760 = verf.f32.pop %v728
        %v761 = verf.f32.pop %v729
        %v762 = verf.f32.pop %v730
        %v763 = verf.f32.pop %v731
        %v764 = verf.f32.pop %v732
        %v765 = verf.f32.pop %v733
        %v766 = verf.f32.pop %v734
        %v767 = verf.f32.pop %v735
        %v768 = verf.f32.pop %v736
        %v769 = verf.f32.pop %v737
        %v770 = verf.f32.pop %v738
        %v771 = verf.f32.pop %v739
        %v772 = verf.f32.pop %v740
        %v773 = verf.f32.pop %v741
        %v774 = verf.f32.pop %v742
        %v775 = verf.f32.pop %v743
        %v776 = verf.f32.pop %v744
        %v777 = verf.f32.pop %v745
        %v778 = verf.f32.pop %v746
        %v779 = verf.f32.pop %v747
        %v780 = verf.f32.pop %v748
        %v781 = verf.f32.pop %v749
        %v782 = verf.f32.pop %v750
        %v783 = verf.f32.pop %v751
        %v784 = vadd.f32 %v752, 1.0
        %v785 = vadd.f32 %v753, 1.0
        %v786 = vadd.f32 %v754, 1.0
        %v787 = vadd.f32 %v755, 1.0
        %v788 = vadd.f32 %v756, 1.0
        %v789 = vadd.f32 %v757, 1.0
        %v790 = vadd.f32 %v758, 1.0
        %v791 = vadd.f32 %v759, 1.0
        %v792 = vadd.f32 %v760, 1.0
        %v793 = vadd.f32 %v761, 1.0
        %v794 = vadd.f32 %v762, 1.0
        %v795 = vadd.f32 %v763, 1.0
        %v796 = vadd.f32 %v764, 1.0
        %v797 = vadd.f32 %v765, 1.0
        %v798 = vadd.f32 %v766, 1.0
        %v799 = vadd.f32 %v767, 1.0
        %v800 = vadd.f32 %v768, 1.0
        %v801 = vadd.f32 %v769, 1.0
        %v802 = vadd.f32 %v770, 1.0
        %v803 = vadd.f32 %v771, 1.0
        %v804 = vadd.f32 %v772, 1.0
        %v805 = vadd.f32 %v773, 1.0
        %v806 = vadd.f32 %v774, 1.0
        %v807 = vadd.f32 %v775, 1.0
        %v808 = vadd.f32 %v776, 1.0
        %v809 = vadd.f32 %v777, 1.0
        %v810 = vadd.f32 %v778, 1.0
        %v811 = vadd.f32 %v779, 1.0
        %v812 = vadd.f32 %v780, 1.0
        %v813 = vadd.f32 %v781, 1.0
        %v814 = vadd.f32 %v782, 1.0
        %v815 = vadd.f32 %v783, 1.0
        %v816 = vmul.f32 %v688, %v784
        %v817 = vmul.f32 %v689, %v785
        %v818 = vmul.f32 %v690, %v786
        %v819 = vmul.f32 %v691, %v787
        %v820 = vmul.f32 %v692, %v788
        %v821 = vmul.f32 %v693, %v789
        %v822 = vmul.f32 %v694, %v790
        %v823 = vmul.f32 %v695, %v791
        %v824 = vmul.f32 %v696, %v792
        %v825 = vmul.f32 %v697, %v793
        %v826 = vmul.f32 %v698, %v794
        %v827 = vmul.f32 %v699, %v795
        %v828 = vmul.f32 %v700, %v796
        %v829 = vmul.f32 %v701, %v797
        %v830 = vmul.f32 %v702, %v798
        %v831 = vmul.f32 %v703, %v799
        %v832 = vmul.f32 %v704, %v800
        %v833 = vmul.f32 %v705, %v801
        %v834 = vmul.f32 %v706, %v802
        %v835 = vmul.f32 %v707, %v803
        %v836 = vmul.f32 %v708, %v804
        %v837 = vmul.f32 %v709, %v805
        %v838 = vmul.f32 %v710, %v806
        %v839 = vmul.f32 %v711, %v807
        %v840 = vmul.f32 %v712, %v808
        %v841 = vmul.f32 %v713, %v809
        %v842 = vmul.f32 %v714, %v810
        %v843 = vmul.f32 %v715, %v811
        %v844 = vmul.f32 %v716, %v812
        %v845 = vmul.f32 %v717, %v813
        %v846 = vmul.f32 %v718, %v814
        %v847 = vmul.f32 %v719, %v815
        %848 = vst.msk [vmem:[%s227] sm:$0xff] %vm302, %v816
        %849 = vst.msk [vmem:[%s227 + $0x8] sm:$0xff] %vm302, %v817
        %850 = vst.msk [vmem:[%s227 + $0x10] sm:$0xff] %vm302, %v818
        %851 = vst.msk [vmem:[%s227 + $0x18] sm:$0xff] %vm302, %v819
        %852 = vst.msk [vmem:[%s227 + $0x20] sm:$0xff] %vm302, %v820
        %853 = vst.msk [vmem:[%s227 + $0x28] sm:$0xff] %vm302, %v821
        %854 = vst.msk [vmem:[%s227 + $0x30] sm:$0xff] %vm302, %v822
        %855 = vst.msk [vmem:[%s227 + $0x38] sm:$0xff] %vm302, %v823
        %856 = vst.msk [vmem:[%s227 + $0x40] sm:$0xff] %vm302, %v824
        %857 = vst.msk [vmem:[%s227 + $0x48] sm:$0xff] %vm302, %v825
        %858 = vst.msk [vmem:[%s227 + $0x50] sm:$0xff] %vm302, %v826
        %859 = vst.msk [vmem:[%s227 + $0x58] sm:$0xff] %vm302, %v827
        %860 = vst.msk [vmem:[%s227 + $0x60] sm:$0xff] %vm302, %v828
        %861 = vst.msk [vmem:[%s227 + $0x68] sm:$0xff] %vm302, %v829
        %862 = vst.msk [vmem:[%s227 + $0x70] sm:$0xff] %vm302, %v830
        %863 = vst.msk [vmem:[%s227 + $0x78] sm:$0xff] %vm302, %v831
        %864 = vst.msk [vmem:[%s227 + $0x80] sm:$0xff] %vm302, %v832
        %865 = vst.msk [vmem:[%s227 + $0x88] sm:$0xff] %vm302, %v833
        %866 = vst.msk [vmem:[%s227 + $0x90] sm:$0xff] %vm302, %v834
        %867 = vst.msk [vmem:[%s227 + $0x98] sm:$0xff] %vm302, %v835
        %868 = vst.msk [vmem:[%s227 + $0xa0] sm:$0xff] %vm302, %v836
        %869 = vst.msk [vmem:[%s227 + $0xa8] sm:$0xff] %vm302, %v837
        %870 = vst.msk [vmem:[%s227 + $0xb0] sm:$0xff] %vm302, %v838
        %871 = vst.msk [vmem:[%s227 + $0xb8] sm:$0xff] %vm302, %v839
        %872 = vst.msk [vmem:[%s227 + $0xc0] sm:$0xff] %vm302, %v840
        %873 = vst.msk [vmem:[%s227 + $0xc8] sm:$0xff] %vm302, %v841
        %874 = vst.msk [vmem:[%s227 + $0xd0] sm:$0xff] %vm302, %v842
        %875 = vst.msk [vmem:[%s227 + $0xd8] sm:$0xff] %vm302, %v843
        %876 = vst.msk [vmem:[%s227 + $0xe0] sm:$0xff] %vm302, %v844
        %877 = vst.msk [vmem:[%s227 + $0xe8] sm:$0xff] %vm302, %v845
        %878 = vst.msk [vmem:[%s227 + $0xf0] sm:$0xff] %vm302, %v846
        %879 = vst.msk [vmem:[%s227 + $0xf8] sm:$0xff] %vm302, %v847
        %s880 = sand.u32 %s117, 1
        %s881 = sand.u32 %s117, 1
        %s882 = smul.addr %s881, 256
        %s883 = scalar_lea.vmem [#allocation2], %s882
        // Predicated region
        $region37: #{nors_forward.12} parent=35 // pred_check
          %p884 = pneg %p127
        $region38: #{nors_forward.12} parent=35 // pred_check_branch
          %886 = sbr.rel (%p884) target = $region40
        $region39: #{nors_forward.12} parent=35 // pred_region
          %s887 = smul.u32 32, %s15
          %s888 = ssub.s32 157, %s887
          %p889 = scmp.lt.s32.totalorder %s888, 32
          %s890 = scalar_select %p889, %s888, 32
          %s891 = smul.u32 128, %s890
          %p892 = scmp.ne.s32.totalorder 0, %s891
          %s893 = smul.addr %s887, 8
          %s894 = scalar_lea.vmem %s4, %s893
          // Predicated region
          $region41: #{nors_forward.12} parent=39 // pred_check
            %p895 = pneg %p892
          $region42: #{nors_forward.12} parent=39 // pred_check_branch
            %897 = sbr.rel (%p895) target = $region44
          $region43: #{nors_forward.12} parent=39 // pred_region
            // Predicated region
            $region45: #{nors_forward.12} parent=43 // pred_check
              _
            $region46: #{nors_forward.12} parent=43 // pred_check_branch
              %899 = sbr.rel (0) target = $region48
            $region47: #{nors_forward.12} parent=43 // pred_region
              // Predicated region
              $region67: #{nors_forward.12} parent=47 // pred_check
                _
              $region68: #{nors_forward.12} parent=47 // pred_check_branch
                %1010 = sbr.rel (0) target = $region70
              $region69: #{nors_forward.12} parent=47 // pred_region
                %s1011 = sshrl.u32 %s890, 5
                // While loop
                $region71: #{nors_forward.12} parent=69 // loop_pre_header
                  _
                $region72: #{nors_forward.12} parent=69 // loop_header
                  %s1013 = sphi 0, %s1015
                  %p1014 = scmp.ge.s32.totalorder %s1013, %s1011
                  %s1018 = sphi 0, %s1087
                  %s1019 = sphi %s883, %s1090
                  %s1020 = sphi %s894, %s1091
                $region73: #{nors_forward.12} parent=69 // loop_header_branch
                  %1017 = sbr.rel (%p1014) target = $region77
                $region74: #{nors_forward.12} parent=69 // loop_body
                  %v1021 = vld [vmem:[%s1019] sm:$0xff]
                  %1022 = vst [vmem:[%s1020] sm:$0xff] %v1021
                  %v1023 = vld [vmem:[%s1019 + $0x8] sm:$0xff]
                  %1024 = vst [vmem:[%s1020 + $0x8] sm:$0xff] %v1023
                  %v1025 = vld [vmem:[%s1019 + $0x10] sm:$0xff]
                  %1026 = vst [vmem:[%s1020 + $0x10] sm:$0xff] %v1025
                  %v1027 = vld [vmem:[%s1019 + $0x18] sm:$0xff]
                  %1028 = vst [vmem:[%s1020 + $0x18] sm:$0xff] %v1027
                  %v1029 = vld [vmem:[%s1019 + $0x20] sm:$0xff]
                  %1030 = vst [vmem:[%s1020 + $0x20] sm:$0xff] %v1029
                  %v1031 = vld [vmem:[%s1019 + $0x28] sm:$0xff]
                  %1032 = vst [vmem:[%s1020 + $0x28] sm:$0xff] %v1031
                  %v1033 = vld [vmem:[%s1019 + $0x30] sm:$0xff]
                  %1034 = vst [vmem:[%s1020 + $0x30] sm:$0xff] %v1033
                  %v1035 = vld [vmem:[%s1019 + $0x38] sm:$0xff]
                  %1036 = vst [vmem:[%s1020 + $0x38] sm:$0xff] %v1035
                  %v1037 = vld [vmem:[%s1019 + $0x40] sm:$0xff]
                  %1038 = vst [vmem:[%s1020 + $0x40] sm:$0xff] %v1037
                  %v1039 = vld [vmem:[%s1019 + $0x48] sm:$0xff]
                  %1040 = vst [vmem:[%s1020 + $0x48] sm:$0xff] %v1039
                  %v1041 = vld [vmem:[%s1019 + $0x50] sm:$0xff]
                  %1042 = vst [vmem:[%s1020 + $0x50] sm:$0xff] %v1041
                  %v1043 = vld [vmem:[%s1019 + $0x58] sm:$0xff]
                  %1044 = vst [vmem:[%s1020 + $0x58] sm:$0xff] %v1043
                  %v1045 = vld [vmem:[%s1019 + $0x60] sm:$0xff]
                  %1046 = vst [vmem:[%s1020 + $0x60] sm:$0xff] %v1045
                  %v1047 = vld [vmem:[%s1019 + $0x68] sm:$0xff]
                  %1048 = vst [vmem:[%s1020 + $0x68] sm:$0xff] %v1047
                  %v1049 = vld [vmem:[%s1019 + $0x70] sm:$0xff]
                  %1050 = vst [vmem:[%s1020 + $0x70] sm:$0xff] %v1049
                  %v1051 = vld [vmem:[%s1019 + $0x78] sm:$0xff]
                  %1052 = vst [vmem:[%s1020 + $0x78] sm:$0xff] %v1051
                  %v1053 = vld [vmem:[%s1019 + $0x80] sm:$0xff]
                  %1054 = vst [vmem:[%s1020 + $0x80] sm:$0xff] %v1053
                  %v1055 = vld [vmem:[%s1019 + $0x88] sm:$0xff]
                  %1056 = vst [vmem:[%s1020 + $0x88] sm:$0xff] %v1055
                  %v1057 = vld [vmem:[%s1019 + $0x90] sm:$0xff]
                  %1058 = vst [vmem:[%s1020 + $0x90] sm:$0xff] %v1057
                  %v1059 = vld [vmem:[%s1019 + $0x98] sm:$0xff]
                  %1060 = vst [vmem:[%s1020 + $0x98] sm:$0xff] %v1059
                  %v1061 = vld [vmem:[%s1019 + $0xa0] sm:$0xff]
                  %1062 = vst [vmem:[%s1020 + $0xa0] sm:$0xff] %v1061
                  %v1063 = vld [vmem:[%s1019 + $0xa8] sm:$0xff]
                  %1064 = vst [vmem:[%s1020 + $0xa8] sm:$0xff] %v1063
                  %v1065 = vld [vmem:[%s1019 + $0xb0] sm:$0xff]
                  %1066 = vst [vmem:[%s1020 + $0xb0] sm:$0xff] %v1065
                  %v1067 = vld [vmem:[%s1019 + $0xb8] sm:$0xff]
                  %1068 = vst [vmem:[%s1020 + $0xb8] sm:$0xff] %v1067
                  %v1069 = vld [vmem:[%s1019 + $0xc0] sm:$0xff]
                  %1070 = vst [vmem:[%s1020 + $0xc0] sm:$0xff] %v1069
                  %v1071 = vld [vmem:[%s1019 + $0xc8] sm:$0xff]
                  %1072 = vst [vmem:[%s1020 + $0xc8] sm:$0xff] %v1071
                  %v1073 = vld [vmem:[%s1019 + $0xd0] sm:$0xff]
                  %1074 = vst [vmem:[%s1020 + $0xd0] sm:$0xff] %v1073
                  %v1075 = vld [vmem:[%s1019 + $0xd8] sm:$0xff]
                  %1076 = vst [vmem:[%s1020 + $0xd8] sm:$0xff] %v1075
                  %v1077 = vld [vmem:[%s1019 + $0xe0] sm:$0xff]
                  %1078 = vst [vmem:[%s1020 + $0xe0] sm:$0xff] %v1077
                  %v1079 = vld [vmem:[%s1019 + $0xe8] sm:$0xff]
                  %1080 = vst [vmem:[%s1020 + $0xe8] sm:$0xff] %v1079
                  %v1081 = vld [vmem:[%s1019 + $0xf0] sm:$0xff]
                  %1082 = vst [vmem:[%s1020 + $0xf0] sm:$0xff] %v1081
                  %v1083 = vld [vmem:[%s1019 + $0xf8] sm:$0xff]
                  %1084 = vst [vmem:[%s1020 + $0xf8] sm:$0xff] %v1083
                  %s1085 = sadd.s32 1, %s1018
                  %p1086 = scmp.ge.s32.totalorder %s1085, %s1011
                  %s1087 = scalar_select %p1086, 0, %s1085
                  %s1088 = smul.u32 %s1087, 256
                  %s1089 = smul.u32 %s1087, 256
                  %s1090 = scalar_lea.vmem %s883, %s1088 [#allocation2]
                  %s1091 = scalar_lea.vmem %s894, %s1089
                $region75: #{nors_forward.12} parent=69 // loop_footer
                  %s1015 = sadd.s32 %s1013, 1
                $region76: #{nors_forward.12} parent=69 // loop_footer_branch
                  %1012 = sbr.rel target = $region72
                $region77: #{nors_forward.12} parent=69 // loop_exit
                  _
                %s1092 = sshrl.u32 %s890, 5
                %s1093 = sand.u32 %s890, 31
                %s1094 = smul.u32 %s1092, 32
                %s1095 = smul.u32 8, %s1094
                %s1096 = scalar_lea.vmem %s883, %s1095 [#allocation2]
                %s1097 = smul.u32 8, %s1094
                %s1098 = scalar_lea.vmem %s894, %s1097
                // While loop
                $region78: #{nors_forward.12} parent=69 // loop_pre_header
                  _
                $region79: #{nors_forward.12} parent=69 // loop_header
                  %s1100 = sphi 0, %s1102
                  %p1101 = scmp.ge.s32.totalorder %s1100, %s1093
                  %s1105 = sphi 0, %s1112
                  %s1106 = sphi %s1096, %s1115
                  %s1107 = sphi %s1098, %s1116
                $region80: #{nors_forward.12} parent=69 // loop_header_branch
                  %1104 = sbr.rel (%p1101) target = $region84
                $region81: #{nors_forward.12} parent=69 // loop_body
                  %v1108 = vld [vmem:[%s1106] sm:$0xff]
                  %1109 = vst [vmem:[%s1107] sm:$0xff] %v1108
                  %s1110 = sadd.s32 1, %s1105
                  %p1111 = scmp.ge.s32.totalorder %s1110, %s1093
                  %s1112 = scalar_select %p1111, 0, %s1110
                  %s1113 = smul.u32 %s1112, 8
                  %s1114 = smul.u32 %s1112, 8
                  %s1115 = scalar_lea.vmem %s1096, %s1113 [#allocation2]
                  %s1116 = scalar_lea.vmem %s1098, %s1114
                $region82: #{nors_forward.12} parent=69 // loop_footer
                  %s1102 = sadd.s32 %s1100, 1
                $region83: #{nors_forward.12} parent=69 // loop_footer_branch
                  %1099 = sbr.rel target = $region79
                $region84: #{nors_forward.12} parent=69 // loop_exit
                  _
              $region70: #{nors_forward.12} parent=47 // pred_fallthru
                _
              // Predicated region
              $region85: #{nors_forward.12} parent=47 // pred_check
                _
              $region86: #{nors_forward.12} parent=47 // pred_check_branch
                %1118 = sbr.rel target = $region88
              $region87: #{nors_forward.12} parent=47 // pred_region
                _
              $region88: #{nors_forward.12} parent=47 // pred_fallthru
                _
            $region48: #{nors_forward.12} parent=43 // pred_fallthru
              _
            // Predicated region
            $region49: #{nors_forward.12} parent=43 // pred_check
              _
            $region50: #{nors_forward.12} parent=43 // pred_check_branch
              %901 = sbr.rel target = $region52
            $region51: #{nors_forward.12} parent=43 // pred_region
              %s903 = sshrl.u32 %s890, 5
              // While loop
              $region53: #{nors_forward.12} parent=51 // loop_pre_header
                _
              $region54: #{nors_forward.12} parent=51 // loop_header
                %s905 = sphi 0, %s907
                %p906 = scmp.ge.s32.totalorder %s905, %s903
                %s910 = sphi 0, %s979
                %s911 = sphi %s883, %s982
                %s912 = sphi %s894, %s983
              $region55: #{nors_forward.12} parent=51 // loop_header_branch
                %909 = sbr.rel (%p906) target = $region59
              $region56: #{nors_forward.12} parent=51 // loop_body
                %v913 = vld [vmem:[%s911] sm:$0xff]
                %914 = vst [vmem:[%s912] sm:$0xff] %v913
                %v915 = vld [vmem:[%s911 + $0x8] sm:$0xff]
                %916 = vst [vmem:[%s912 + $0x8] sm:$0xff] %v915
                %v917 = vld [vmem:[%s911 + $0x10] sm:$0xff]
                %918 = vst [vmem:[%s912 + $0x10] sm:$0xff] %v917
                %v919 = vld [vmem:[%s911 + $0x18] sm:$0xff]
                %920 = vst [vmem:[%s912 + $0x18] sm:$0xff] %v919
                %v921 = vld [vmem:[%s911 + $0x20] sm:$0xff]
                %922 = vst [vmem:[%s912 + $0x20] sm:$0xff] %v921
                %v923 = vld [vmem:[%s911 + $0x28] sm:$0xff]
                %924 = vst [vmem:[%s912 + $0x28] sm:$0xff] %v923
                %v925 = vld [vmem:[%s911 + $0x30] sm:$0xff]
                %926 = vst [vmem:[%s912 + $0x30] sm:$0xff] %v925
                %v927 = vld [vmem:[%s911 + $0x38] sm:$0xff]
                %928 = vst [vmem:[%s912 + $0x38] sm:$0xff] %v927
                %v929 = vld [vmem:[%s911 + $0x40] sm:$0xff]
                %930 = vst [vmem:[%s912 + $0x40] sm:$0xff] %v929
                %v931 = vld [vmem:[%s911 + $0x48] sm:$0xff]
                %932 = vst [vmem:[%s912 + $0x48] sm:$0xff] %v931
                %v933 = vld [vmem:[%s911 + $0x50] sm:$0xff]
                %934 = vst [vmem:[%s912 + $0x50] sm:$0xff] %v933
                %v935 = vld [vmem:[%s911 + $0x58] sm:$0xff]
                %936 = vst [vmem:[%s912 + $0x58] sm:$0xff] %v935
                %v937 = vld [vmem:[%s911 + $0x60] sm:$0xff]
                %938 = vst [vmem:[%s912 + $0x60] sm:$0xff] %v937
                %v939 = vld [vmem:[%s911 + $0x68] sm:$0xff]
                %940 = vst [vmem:[%s912 + $0x68] sm:$0xff] %v939
                %v941 = vld [vmem:[%s911 + $0x70] sm:$0xff]
                %942 = vst [vmem:[%s912 + $0x70] sm:$0xff] %v941
                %v943 = vld [vmem:[%s911 + $0x78] sm:$0xff]
                %944 = vst [vmem:[%s912 + $0x78] sm:$0xff] %v943
                %v945 = vld [vmem:[%s911 + $0x80] sm:$0xff]
                %946 = vst [vmem:[%s912 + $0x80] sm:$0xff] %v945
                %v947 = vld [vmem:[%s911 + $0x88] sm:$0xff]
                %948 = vst [vmem:[%s912 + $0x88] sm:$0xff] %v947
                %v949 = vld [vmem:[%s911 + $0x90] sm:$0xff]
                %950 = vst [vmem:[%s912 + $0x90] sm:$0xff] %v949
                %v951 = vld [vmem:[%s911 + $0x98] sm:$0xff]
                %952 = vst [vmem:[%s912 + $0x98] sm:$0xff] %v951
                %v953 = vld [vmem:[%s911 + $0xa0] sm:$0xff]
                %954 = vst [vmem:[%s912 + $0xa0] sm:$0xff] %v953
                %v955 = vld [vmem:[%s911 + $0xa8] sm:$0xff]
                %956 = vst [vmem:[%s912 + $0xa8] sm:$0xff] %v955
                %v957 = vld [vmem:[%s911 + $0xb0] sm:$0xff]
                %958 = vst [vmem:[%s912 + $0xb0] sm:$0xff] %v957
                %v959 = vld [vmem:[%s911 + $0xb8] sm:$0xff]
                %960 = vst [vmem:[%s912 + $0xb8] sm:$0xff] %v959
                %v961 = vld [vmem:[%s911 + $0xc0] sm:$0xff]
                %962 = vst [vmem:[%s912 + $0xc0] sm:$0xff] %v961
                %v963 = vld [vmem:[%s911 + $0xc8] sm:$0xff]
                %964 = vst [vmem:[%s912 + $0xc8] sm:$0xff] %v963
                %v965 = vld [vmem:[%s911 + $0xd0] sm:$0xff]
                %966 = vst [vmem:[%s912 + $0xd0] sm:$0xff] %v965
                %v967 = vld [vmem:[%s911 + $0xd8] sm:$0xff]
                %968 = vst [vmem:[%s912 + $0xd8] sm:$0xff] %v967
                %v969 = vld [vmem:[%s911 + $0xe0] sm:$0xff]
                %970 = vst [vmem:[%s912 + $0xe0] sm:$0xff] %v969
                %v971 = vld [vmem:[%s911 + $0xe8] sm:$0xff]
                %972 = vst [vmem:[%s912 + $0xe8] sm:$0xff] %v971
                %v973 = vld [vmem:[%s911 + $0xf0] sm:$0xff]
                %974 = vst [vmem:[%s912 + $0xf0] sm:$0xff] %v973
                %v975 = vld [vmem:[%s911 + $0xf8] sm:$0xff]
                %976 = vst [vmem:[%s912 + $0xf8] sm:$0xff] %v975
                %s977 = sadd.s32 1, %s910
                %p978 = scmp.ge.s32.totalorder %s977, %s903
                %s979 = scalar_select %p978, 0, %s977
                %s980 = smul.u32 %s979, 256
                %s981 = smul.u32 %s979, 256
                %s982 = scalar_lea.vmem %s883, %s980 [#allocation2]
                %s983 = scalar_lea.vmem %s894, %s981
              $region57: #{nors_forward.12} parent=51 // loop_footer
                %s907 = sadd.s32 %s905, 1
              $region58: #{nors_forward.12} parent=51 // loop_footer_branch
                %904 = sbr.rel target = $region54
              $region59: #{nors_forward.12} parent=51 // loop_exit
                _
              %s984 = sshrl.u32 %s890, 5
              %s985 = sand.u32 %s890, 31
              %s986 = smul.u32 %s984, 32
              %s987 = smul.u32 8, %s986
              %s988 = scalar_lea.vmem %s883, %s987 [#allocation2]
              %s989 = smul.u32 8, %s986
              %s990 = scalar_lea.vmem %s894, %s989
              // While loop
              $region60: #{nors_forward.12} parent=51 // loop_pre_header
                _
              $region61: #{nors_forward.12} parent=51 // loop_header
                %s992 = sphi 0, %s994
                %p993 = scmp.ge.s32.totalorder %s992, %s985
                %s997 = sphi 0, %s1004
                %s998 = sphi %s988, %s1007
                %s999 = sphi %s990, %s1008
              $region62: #{nors_forward.12} parent=51 // loop_header_branch
                %996 = sbr.rel (%p993) target = $region66
              $region63: #{nors_forward.12} parent=51 // loop_body
                %v1000 = vld [vmem:[%s998] sm:$0xff]
                %1001 = vst [vmem:[%s999] sm:$0xff] %v1000
                %s1002 = sadd.s32 1, %s997
                %p1003 = scmp.ge.s32.totalorder %s1002, %s985
                %s1004 = scalar_select %p1003, 0, %s1002
                %s1005 = smul.u32 %s1004, 8
                %s1006 = smul.u32 %s1004, 8
                %s1007 = scalar_lea.vmem %s988, %s1005 [#allocation2]
                %s1008 = scalar_lea.vmem %s990, %s1006
              $region64: #{nors_forward.12} parent=51 // loop_footer
                %s994 = sadd.s32 %s992, 1
              $region65: #{nors_forward.12} parent=51 // loop_footer_branch
                %991 = sbr.rel target = $region61
              $region66: #{nors_forward.12} parent=51 // loop_exit
                _
            $region52: #{nors_forward.12} parent=43 // pred_fallthru
              _
          $region44: #{nors_forward.12} parent=39 // pred_fallthru
            _
          %1119 = vnop
        $region40: #{nors_forward.12} parent=35 // pred_fallthru
          _
      $region36: #{nors_forward.12} parent=5 // pred_fallthru
        _
      %p1120 = scmp.le.s32.totalorder 2, %s10
      // Predicated region
      $region89: #{nors_forward.12} parent=5 // pred_check
        %p1121 = pneg %p1120
      $region90: #{nors_forward.12} parent=5 // pred_check_branch
        %1123 = sbr.rel (%p1121) target = $region92
      $region91: #{nors_forward.12} parent=5 // pred_region
        %s1124 = ssub.s32 %s10, 2
        // Predicated region
        $region93: #{nors_forward.12} parent=91 // pred_check
          %p1125 = pneg %p133
        $region94: #{nors_forward.12} parent=91 // pred_check_branch
          %1127 = sbr.rel (%p1125) target = $region96
        $region95: #{nors_forward.12} parent=91 // pred_region
          %s1128 = sand.u32 %s118, 1
          %s1129 = sand.u32 %s118, 1
          %s1130 = smul.addr %s1129, 256
          %s1131 = scalar_lea.vmem [#allocation2], %s1130
        $region96: #{nors_forward.12} parent=91 // pred_fallthru
          _
      $region92: #{nors_forward.12} parent=5 // pred_fallthru
        _
    $region6: #{nors_forward.12} parent=1 // loop_footer
      %s14 = sadd.s32 1, %s10
    $region7: #{nors_forward.12} parent=1 // loop_footer_branch
      %9 = sbr.rel target = $region3
    $region8: #{nors_forward.12} parent=1 // loop_exit
      _

// kernel: nors_forward.18
$region0: #{nors_forward.18}
  #allocation0 [shape = 'u32[]', space=smem, size = 0x4, offset = 0x4, fixed_abs, tag = 'smem constant byte address 0x4 - core index']
  #allocation1 [shape = 'u32[144,128]{1,0:T(1,128)}', space=vmem, size = 0x12000, scoped, tag = 'internal scratch']
  %s0 = inlined_call_operand.vmem [shape: f32[1250,16], index: 0, kind: input, shape index: {}]
  %s1 = inlined_call_operand.vmem [shape: f32[16,16], index: 1, kind: input, shape index: {}]
  %s2 = inlined_call_operand.vmem [shape: f32[1,16], index: 2, kind: input, shape index: {}]
  %s3 = inlined_call_operand.vmem [shape: f32[1250,16], index: 3, kind: input, shape index: {}]
  %s4 = inlined_call_operand.vmem [shape: f32[1250,16], index: 4, kind: output, shape index: {}]
  %s5 = sld [smem:[#allocation0]]
  $region97: #{nors_forward.18} parent=0
    _
  %s7 = ssub.s32 1, %s5
  %s8 = scalar_select 0, %s7, %s5
  $region1: #{nors_forward.18} parent=0
    #allocation2 [shape = 'u8[262144]{0}', space=vmem, size = 0x40000, scoped, tag = 'output window, operand 0']
    loop: start=0, step=1, limit=7
    $region2: #{nors_forward.18} parent=1 // loop_pre_header
      _
    $region3: #{nors_forward.18} parent=1 // loop_header
      %s10 = sphi 0, %s14
      %p11 = scmp.ge.s32.totalorder %s10, 7
      %s20 = sphi 0, %s22
      %s23 = sphi 0, %s20
      %s24 = sphi 0, %s23
      %s40 = sphi 0, %s24
      %s44 = sphi 0, %s44
      %s46 = sphi 0, %s44
      %s47 = sphi 0, %s46
      %s61 = sphi 0, %s47
      %s65 = sphi 0, %s65
      %s67 = sphi 0, %s65
      %s68 = sphi 0, %s67
      %s82 = sphi 0, %s68
      %s88 = sphi 0, %s90
      %s91 = sphi 0, %s88
      %s92 = sphi 0, %s91
      %s108 = sphi 0, %s92
      %s114 = sphi 0, %s116
      %s117 = sphi 0, %s114
      %s118 = sphi 0, %s117
      %s134 = sphi 0, %s118
    $region4: #{nors_forward.18} parent=1 // loop_header_branch
      %13 = sbr.rel (%p11) target = $region8
    $region5: #{nors_forward.18} parent=1 // loop_body
      %s15 = ssub.s32 %s10, 1
      %s16 = ssub.s32 %s10, 2
      %s17 = sadd.s32 %s10, 1
      %s18 = ssub.s32 %s10, %s17
      %p19 = scmp.eq.s32.totalorder %s18, 0
      %s21 = sadd.s32 %s20, 1
      %s22 = scalar_select %p19, %s20, %s21
      %p25 = pneg %p19
      %p26 = scmp.eq.s32.totalorder %s10, 4
      %p27 = por %p25, %p26
      %p28 = scmp.ne.s32.totalorder %s20, %s23
      %p29 = scmp.eq.s32.totalorder %s10, 0
      %p30 = por %p28, %p29
      %p31 = scmp.ne.s32.totalorder %s20, %s23
      %p32 = scmp.eq.s32.totalorder %s15, 4
      %p33 = por %p31, %p32
      %p34 = scmp.ne.s32.totalorder %s23, %s24
      %p35 = scmp.eq.s32.totalorder %s15, 0
      %p36 = por %p34, %p35
      %p37 = scmp.ne.s32.totalorder %s23, %s24
      %p38 = scmp.eq.s32.totalorder %s16, 4
      %p39 = por %p37, %p38
      %p41 = scmp.ne.s32.totalorder %s24, %s40
      %p42 = scmp.eq.s32.totalorder %s16, 0
      %p43 = por %p41, %p42
      %s45 = sadd.s32 %s44, 1
      %p48 = scmp.eq.s32.totalorder %s10, 4
      %p49 = scmp.ne.s32.totalorder %s44, %s46
      %p50 = scmp.eq.s32.totalorder %s10, 0
      %p51 = por %p49, %p50
      %p52 = scmp.ne.s32.totalorder %s44, %s46
      %p53 = scmp.eq.s32.totalorder %s15, 4
      %p54 = por %p52, %p53
      %p55 = scmp.ne.s32.totalorder %s46, %s47
      %p56 = scmp.eq.s32.totalorder %s15, 0
      %p57 = por %p55, %p56
      %p58 = scmp.ne.s32.totalorder %s46, %s47
      %p59 = scmp.eq.s32.totalorder %s16, 4
      %p60 = por %p58, %p59
      %p62 = scmp.ne.s32.totalorder %s47, %s61
      %p63 = scmp.eq.s32.totalorder %s16, 0
      %p64 = por %p62, %p63
      %s66 = sadd.s32 %s65, 1
      %p69 = scmp.eq.s32.totalorder %s10, 4
      %p70 = scmp.ne.s32.totalorder %s65, %s67
      %p71 = scmp.eq.s32.totalorder %s10, 0
      %p72 = por %p70, %p71
      %p73 = scmp.ne.s32.totalorder %s65, %s67
      %p74 = scmp.eq.s32.totalorder %s15, 4
      %p75 = por %p73, %p74
      %p76 = scmp.ne.s32.totalorder %s67, %s68
      %p77 = scmp.eq.s32.totalorder %s15, 0
      %p78 = por %p76, %p77
      %p79 = scmp.ne.s32.totalorder %s67, %s68
      %p80 = scmp.eq.s32.totalorder %s16, 4
      %p81 = por %p79, %p80
      %p83 = scmp.ne.s32.totalorder %s68, %s82
      %p84 = scmp.eq.s32.totalorder %s16, 0
      %p85 = por %p83, %p84
      %s86 = ssub.s32 %s10, %s17
      %p87 = scmp.eq.s32.totalorder %s86, 0
      %s89 = sadd.s32 %s88, 1
      %s90 = scalar_select %p87, %s88, %s89
      %p93 = pneg %p87
      %p94 = scmp.eq.s32.totalorder %s10, 4
      %p95 = por %p93, %p94
      %p96 = scmp.ne.s32.totalorder %s88, %s91
      %p97 = scmp.eq.s32.totalorder %s10, 0
      %p98 = por %p96, %p97
      %p99 = scmp.ne.s32.totalorder %s88, %s91
      %p100 = scmp.eq.s32.totalorder %s15, 4
      %p101 = por %p99, %p100
      %p102 = scmp.ne.s32.totalorder %s91, %s92
      %p103 = scmp.eq.s32.totalorder %s15, 0
      %p104 = por %p102, %p103
      %p105 = scmp.ne.s32.totalorder %s91, %s92
      %p106 = scmp.eq.s32.totalorder %s16, 4
      %p107 = por %p105, %p106
      %p109 = scmp.ne.s32.totalorder %s92, %s108
      %p110 = scmp.eq.s32.totalorder %s16, 0
      %p111 = por %p109, %p110
      %s112 = ssub.s32 %s10, %s17
      %p113 = scmp.eq.s32.totalorder %s112, 0
      %s115 = sadd.s32 %s114, 1
      %s116 = scalar_select %p113, %s114, %s115
      %p119 = pneg %p113
      %p120 = scmp.eq.s32.totalorder %s10, 4
      %p121 = por %p119, %p120
      %p122 = scmp.ne.s32.totalorder %s114, %s117
      %p123 = scmp.eq.s32.totalorder %s10, 0
      %p124 = por %p122, %p123
      %p125 = scmp.ne.s32.totalorder %s114, %s117
      %p126 = scmp.eq.s32.totalorder %s15, 4
      %p127 = por %p125, %p126
      %p128 = scmp.ne.s32.totalorder %s117, %s118
      %p129 = scmp.eq.s32.totalorder %s15, 0
      %p130 = por %p128, %p129
      %p131 = scmp.ne.s32.totalorder %s117, %s118
      %p132 = scmp.eq.s32.totalorder %s16, 4
      %p133 = por %p131, %p132
      %p135 = scmp.ne.s32.totalorder %s118, %s134
      %p136 = scmp.eq.s32.totalorder %s16, 0
      %p137 = por %p135, %p136
      %p138 = scmp.le.s32.totalorder 1, %s10
      %p139 = scmp.lt.s32.totalorder %s10, 6
      %p140 = pnand %p138, %p139
      %p141 = pneg %p140
      // Predicated region
      $region9: #{nors_forward.18} parent=5 // pred_check
        _
      $region10: #{nors_forward.18} parent=5 // pred_check_branch
        %143 = sbr.rel (%p140) target = $region12
      $region11: #{nors_forward.18} parent=5 // pred_region
        %s144 = ssub.s32 %s10, 1
        // Predicated region
        $region13: #{nors_forward.18} parent=11 // pred_check
          %p145 = pneg %p57
        $region14: #{nors_forward.18} parent=11 // pred_check_branch
          %147 = sbr.rel (%p145) target = $region16
        $region15: #{nors_forward.18} parent=11 // pred_region
          _
        $region16: #{nors_forward.18} parent=11 // pred_fallthru
          _
        // Predicated region
        $region17: #{nors_forward.18} parent=11 // pred_check
          %p148 = pneg %p78
        $region18: #{nors_forward.18} parent=11 // pred_check_branch
          %150 = sbr.rel (%p148) target = $region20
        $region19: #{nors_forward.18} parent=11 // pred_region
          _
        $region20: #{nors_forward.18} parent=11 // pred_fallthru
          _
      $region12: #{nors_forward.18} parent=5 // pred_fallthru
        _
      %p151 = scmp.lt.s32.totalorder %s10, 5
      // Predicated region
      $region21: #{nors_forward.18} parent=5 // pred_check
        %p152 = pneg %p151
      $region22: #{nors_forward.18} parent=5 // pred_check_branch
        %154 = sbr.rel (%p152) target = $region24
      $region23: #{nors_forward.18} parent=5 // pred_region
        // Predicated region
        $region25: #{nors_forward.18} parent=23 // pred_check
          %p155 = pneg %p30
        $region26: #{nors_forward.18} parent=23 // pred_check_branch
          %157 = sbr.rel (%p155) target = $region28
        $region27: #{nors_forward.18} parent=23 // pred_region
          %s158 = smul.u32 32, %s10
          %s159 = ssub.s32 157, %s158
          %p160 = scmp.lt.s32.totalorder %s159, 32
          %s161 = scalar_select %p160, %s159, 32
          %s162 = smul.u32 128, %s161
          %p163 = scmp.lt.s32.totalorder %s158, 156
          %s164 = scalar_select %p163, %s158, 156
          %s165 = smul.addr %s164, 8
          %s166 = scalar_lea.vmem %s0, %s165
          %s167 = smul.u32 32, %s10
          %s168 = ssub.s32 157, %s167
          %p169 = scmp.lt.s32.totalorder %s168, 32
          %s170 = scalar_select %p169, %s168, 32
          %s171 = smul.u32 128, %s170
        $region28: #{nors_forward.18} parent=23 // pred_fallthru
          _
        // Predicated region
        $region29: #{nors_forward.18} parent=23 // pred_check
          %p172 = pneg %p98
        $region30: #{nors_forward.18} parent=23 // pred_check_branch
          %174 = sbr.rel (%p172) target = $region32
        $region31: #{nors_forward.18} parent=23 // pred_region
          %s175 = smul.u32 32, %s10
          %s176 = ssub.s32 157, %s175
          %p177 = scmp.lt.s32.totalorder %s176, 32
          %s178 = scalar_select %p177, %s176, 32
          %s179 = smul.u32 128, %s178
          %p180 = scmp.lt.s32.totalorder %s175, 156
          %s181 = scalar_select %p180, %s175, 156
          %s182 = smul.addr %s181, 8
          %s183 = scalar_lea.vmem %s3, %s182
          %s184 = smul.u32 32, %s10
          %s185 = ssub.s32 157, %s184
          %p186 = scmp.lt.s32.totalorder %s185, 32
          %s187 = scalar_select %p186, %s185, 32
          %s188 = smul.u32 128, %s187
        $region32: #{nors_forward.18} parent=23 // pred_fallthru
          _
      $region24: #{nors_forward.18} parent=5 // pred_fallthru
        _
      %p189 = scmp.le.s32.totalorder 1, %s10
      %p190 = scmp.lt.s32.totalorder %s10, 6
      %p191 = pnand %p189, %p190
      %p192 = pneg %p191
      // Predicated region
      $region33: #{nors_forward.18} parent=5 // pred_check
        _
      $region34: #{nors_forward.18} parent=5 // pred_check_branch
        %194 = sbr.rel (%p191) target = $region36
      $region35: #{nors_forward.18} parent=5 // pred_region
        %s195 = ssub.s32 %s10, 1
        %s196 = smul.u32 32, %s15
        %s197 = ssub.s32 157, %s196
        %p198 = scmp.lt.s32.totalorder %s197, 32
        %s199 = scalar_select %p198, %s197, 32
        %s200 = smul.u32 128, %s199
        %p201 = scmp.lt.s32.totalorder %s196, 156
        %s202 = scalar_select %p201, %s196, 156
        %s203 = smul.addr %s202, 8
        %s204 = scalar_lea.vmem %s0, %s203
        %p205 = pneg %p36
        %p206 = pneg %p33
        %p207 = pneg %p57
        %p208 = pneg %p54
        %p209 = pneg %p78
        %p210 = pneg %p75
        %s211 = smul.u32 32, %s15
        %s212 = ssub.s32 157, %s211
        %p213 = scmp.lt.s32.totalorder %s212, 32
        %s214 = scalar_select %p213, %s212, 32
        %s215 = smul.u32 128, %s214
        %p216 = scmp.lt.s32.totalorder %s211, 156
        %s217 = scalar_select %p216, %s211, 156
        %s218 = smul.addr %s217, 8
        %s219 = scalar_lea.vmem %s3, %s218
        %p220 = pneg %p104
        %p221 = pneg %p101
        %p222 = pneg %p130
        %p223 = pneg %p127
        %s224 = sand.u32 %s117, 1
        %s225 = sand.u32 %s117, 1
        %s226 = smul.addr %s225, 256
        %s227 = scalar_lea.vmem [#allocation2], %s226
        %s228 = smul.u32 32, %s15
        %s229 = ssub.s32 157, %s228
        %p230 = scmp.lt.s32.totalorder %s229, 32
        %s231 = scalar_select %p230, %s229, 32
        %s232 = smul.u32 128, %s231
        %p233 = scmp.lt.s32.totalorder %s228, 156
        %s234 = scalar_select %p233, %s228, 156
        %s235 = smul.addr %s234, 8
        %s236 = scalar_lea.vmem %s0, %s235
        %s237 = smul.u32 32, %s15
        %s238 = ssub.s32 157, %s237
        %p239 = scmp.lt.s32.totalorder %s238, 32
        %s240 = scalar_select %p239, %s238, 32
        %s241 = smul.u32 128, %s240
        %s242 = smul.u32 32, %s15
        %s243 = ssub.s32 157, %s242
        %p244 = scmp.lt.s32.totalorder %s243, 32
        %s245 = scalar_select %p244, %s243, 32
        %s246 = smul.u32 128, %s245
        %p247 = scmp.lt.s32.totalorder %s242, 156
        %s248 = scalar_select %p247, %s242, 156
        %s249 = smul.addr %s248, 8
        %s250 = scalar_lea.vmem %s3, %s249
        %s251 = smul.u32 32, %s15
        %s252 = ssub.s32 157, %s251
        %p253 = scmp.lt.s32.totalorder %s252, 32
        %s254 = scalar_select %p253, %s252, 32
        %s255 = smul.u32 128, %s254
        %s256 = smul.u32 32, %s15
        %s257 = ssub.s32 157, %s256
        %p258 = scmp.lt.s32.totalorder %s257, 32
        %s259 = scalar_select %p258, %s257, 32
        %s260 = smul.u32 128, %s259
        %v261 = vld [vmem:[%s236] sm:$0xff]
        %v262 = vld [vmem:[%s236 + $0x8] sm:$0xff]
        %v263 = vld [vmem:[%s236 + $0x10] sm:$0xff]
        %v264 = vld [vmem:[%s236 + $0x18] sm:$0xff]
        %v265 = vld [vmem:[%s236 + $0x20] sm:$0xff]
        %v266 = vld [vmem:[%s236 + $0x28] sm:$0xff]
        %v267 = vld [vmem:[%s236 + $0x30] sm:$0xff]
        %v268 = vld [vmem:[%s236 + $0x38] sm:$0xff]
        %v269 = vld [vmem:[%s236 + $0x40] sm:$0xff]
        %v270 = vld [vmem:[%s236 + $0x48] sm:$0xff]
        %v271 = vld [vmem:[%s236 + $0x50] sm:$0xff]
        %v272 = vld [vmem:[%s236 + $0x58] sm:$0xff]
        %v273 = vld [vmem:[%s236 + $0x60] sm:$0xff]
        %v274 = vld [vmem:[%s236 + $0x68] sm:$0xff]
        %v275 = vld [vmem:[%s236 + $0x70] sm:$0xff]
        %v276 = vld [vmem:[%s236 + $0x78] sm:$0xff]
        %v277 = vld [vmem:[%s236 + $0x80] sm:$0xff]
        %v278 = vld [vmem:[%s236 + $0x88] sm:$0xff]
        %v279 = vld [vmem:[%s236 + $0x90] sm:$0xff]
        %v280 = vld [vmem:[%s236 + $0x98] sm:$0xff]
        %v281 = vld [vmem:[%s236 + $0xa0] sm:$0xff]
        %v282 = vld [vmem:[%s236 + $0xa8] sm:$0xff]
        %v283 = vld [vmem:[%s236 + $0xb0] sm:$0xff]
        %v284 = vld [vmem:[%s236 + $0xb8] sm:$0xff]
        %v285 = vld [vmem:[%s236 + $0xc0] sm:$0xff]
        %v286 = vld [vmem:[%s236 + $0xc8] sm:$0xff]
        %v287 = vld [vmem:[%s236 + $0xd0] sm:$0xff]
        %v288 = vld [vmem:[%s236 + $0xd8] sm:$0xff]
        %v289 = vld [vmem:[%s236 + $0xe0] sm:$0xff]
        %v290 = vld [vmem:[%s236 + $0xe8] sm:$0xff]
        %v291 = vld [vmem:[%s236 + $0xf0] sm:$0xff]
        %v292 = vld [vmem:[%s236 + $0xf8] sm:$0xff]
        %v293 = vld [vmem:[%s1] sm:$0xff]
        %v294 = vld [vmem:[%s1 + $0x8] sm:$0xff]
        %v295 = vld [vmem:[%s2] sm:$0x1]
        %v297 = vlaneseq
        %v298 = vshrl.u32 %v297, 7
        %v299 = vsub.s32 0, %v298
        %v300 = vrot.slane %v295, %v299
        %vm302 = vcmask 130048
        %v304 = vsel %vm302, %v261, 0
        %v307 = vsel %vm302, %v262, 0
        %v310 = vsel %vm302, %v263, 0
        %v313 = vsel %vm302, %v264, 0
        %v316 = vsel %vm302, %v265, 0
        %v319 = vsel %vm302, %v266, 0
        %v322 = vsel %vm302, %v267, 0
        %v325 = vsel %vm302, %v268, 0
        %v328 = vsel %vm302, %v269, 0
        %v331 = vsel %vm302, %v270, 0
        %v334 = vsel %vm302, %v271, 0
        %v337 = vsel %vm302, %v272, 0
        %v340 = vsel %vm302, %v273, 0
        %v343 = vsel %vm302, %v274, 0
        %v346 = vsel %vm302, %v275, 0
        %v349 = vsel %vm302, %v276, 0
        %v352 = vsel %vm302, %v277, 0
        %v355 = vsel %vm302, %v278, 0
        %v358 = vsel %vm302, %v279, 0
        %v361 = vsel %vm302, %v280, 0
        %v364 = vsel %vm302, %v281, 0
        %v367 = vsel %vm302, %v282, 0
        %v370 = vsel %vm302, %v283, 0
        %v373 = vsel %vm302, %v284, 0
        %v376 = vsel %vm302, %v285, 0
        %v379 = vsel %vm302, %v286, 0
        %v382 = vsel %vm302, %v287, 0
        %v385 = vsel %vm302, %v288, 0
        %v388 = vsel %vm302, %v289, 0
        %v391 = vsel %vm302, %v290, 0
        %v394 = vsel %vm302, %v291, 0
        %v397 = vsel %vm302, %v292, 0
        %399 = vmatprep.subr.mxu0 0.0
        %400 = vmatpush1.msra.mxu0 %v293
        %401 = vmatprep.subr.mxu0 0.0
        %402 = vmatpush1.msra.mxu0 %v294
        %403 = vmatprep.subr.mxu0 0.0
        %404 = vmatpush1.msra.mxu0 0.0
        %405 = vmatprep.subr.mxu0 0.0
        %406 = vmatpush1.msra.mxu0 0.0
        %407 = vmatprep.subr.mxu0 0.0
        %408 = vmatpush1.msra.mxu0 0.0
        %409 = vmatprep.subr.mxu0 0.0
        %410 = vmatpush1.msra.mxu0 0.0
        %411 = vmatprep.subr.mxu0 0.0
        %412 = vmatpush1.msra.mxu0 0.0
        %413 = vmatprep.subr.mxu0 0.0
        %414 = vmatpush1.msra.mxu0 0.0
        %415 = vmatprep.subr.mxu0 0.0
        %416 = vmatpush1.msra.mxu0 0.0
        %417 = vmatprep.subr.mxu0 0.0
        %418 = vmatpush1.msra.mxu0 0.0
        %419 = vmatprep.subr.mxu0 0.0
        %420 = vmatpush1.msra.mxu0 0.0
        %421 = vmatprep.subr.mxu0 0.0
        %422 = vmatpush1.msra.mxu0 0.0
        %423 = vmatprep.subr.mxu0 0.0
        %424 = vmatpush1.msra.mxu0 0.0
        %425 = vmatprep.subr.mxu0 0.0
        %426 = vmatpush1.msra.mxu0 0.0
        %427 = vmatprep.subr.mxu0 0.0
        %428 = vmatpush1.msra.mxu0 0.0
        %429 = vmatprep.subr.mxu0 0.0
        %430 = vmatpush1.msra.mxu0 0.0
        %431 = vmatprep.subr.mxu0 0.0
        %432 = vmatpush1.msra.mxu0 0.0
        %433 = vmatprep.subr.mxu0 0.0
        %434 = vmatpush1.msra.mxu0 0.0
        %435 = vmatprep.subr.mxu0 0.0
        %436 = vmatpush1.msra.mxu0 0.0
        %437 = vmatprep.subr.mxu0 0.0
        %438 = vmatpush1.msra.mxu0 0.0
        %439 = vmatprep.subr.mxu0 0.0
        %440 = vmatpush1.msra.mxu0 0.0
        %441 = vmatprep.subr.mxu0 0.0
        %442 = vmatpush1.msra.mxu0 0.0
        %443 = vmatprep.subr.mxu0 0.0
        %444 = vmatpush1.msra.mxu0 0.0
        %445 = vmatprep.subr.mxu0 0.0
        %446 = vmatpush1.msra.mxu0 0.0
        %447 = vmatprep.subr.mxu0 0.0
        %448 = vmatpush1.msra.mxu0 0.0
        %449 = vmatprep.subr.mxu0 0.0
        %450 = vmatpush1.msra.mxu0 0.0
        %451 = vmatprep.subr.mxu0 0.0
        %452 = vmatpush1.msra.mxu0 0.0
        %453 = vmatprep.subr.mxu0 0.0
        %454 = vmatpush1.msra.mxu0 0.0
        %455 = vmatprep.subr.mxu0 0.0
        %456 = vmatpush1.msra.mxu0 0.0
        %457 = vmatprep.subr.mxu0 0.0
        %458 = vmatpush1.msra.mxu0 0.0
        %459 = vmatprep.subr.mxu0 0.0
        %460 = vmatpush1.msra.mxu0 0.0
        %461 = vmatprep.subr.mxu0 0.0
        %462 = vmatpush1.msra.mxu0 0.0
        %463 = vmatprep.mubr.f32.mxu0 0.0
        %464 = vmatmul.mubr.f32.gmra.mrb[0].mxu0 %v304
        %v465 = vpop.f32.mrb[0].mxu0
        %v466 = vadd.f32 %v300, %v465
        %v467 = vpop.f32.mrb[0].mxu0
        %468 = vmatprep.mubr.f32.mxu0 0.0
        %469 = vmatmul.mubr.f32.gmra.mrb[0].mxu0 %v307
        %v470 = vpop.f32.mrb[0].mxu0
        %v471 = vadd.f32 %v300, %v470
        %v472 = vpop.f32.mrb[0].mxu0
        %473 = vmatprep.mubr.f32.mxu0 0.0
        %474 = vmatmul.mubr.f32.gmra.mrb[0].mxu0 %v310
        %v475 = vpop.f32.mrb[0].mxu0
        %v476 = vadd.f32 %v300, %v475
        %v477 = vpop.f32.mrb[0].mxu0
        %478 = vmatprep.mubr.f32.mxu0 0.0
        %479 = vmatmul.mubr.f32.gmra.mrb[0].mxu0 %v313
        %v480 = vpop.f32.mrb[0].mxu0
        %v481 = vadd.f32 %v300, %v480
        %v482 = vpop.f32.mrb[0].mxu0
        %483 = vmatprep.mubr.f32.mxu0 0.0
        %484 = vmatmul.mubr.f32.gmra.mrb[0].mxu0 %v316
        %v485 = vpop.f32.mrb[0].mxu0
        %v486 = vadd.f32 %v300, %v485
        %v487 = vpop.f32.mrb[0].mxu0
        %488 = vmatprep.mubr.f32.mxu0 0.0
        %489 = vmatmul.mubr.f32.gmra.mrb[0].mxu0 %v319
        %v490 = vpop.f32.mrb[0].mxu0
        %v491 = vadd.f32 %v300, %v490
        %v492 = vpop.f32.mrb[0].mxu0
        %493 = vmatprep.mubr.f32.mxu0 0.0
        %494 = vmatmul.mubr.f32.gmra.mrb[0].mxu0 %v322
        %v495 = vpop.f32.mrb[0].mxu0
        %v496 = vadd.f32 %v300, %v495
        %v497 = vpop.f32.mrb[0].mxu0
        %498 = vmatprep.mubr.f32.mxu0 0.0
        %499 = vmatmul.mubr.f32.gmra.mrb[0].mxu0 %v325
        %v500 = vpop.f32.mrb[0].mxu0
        %v501 = vadd.f32 %v300, %v500
        %v502 = vpop.f32.mrb[0].mxu0
        %503 = vmatprep.mubr.f32.mxu0 0.0
        %504 = vmatmul.mubr.f32.gmra.mrb[0].mxu0 %v328
        %v505 = vpop.f32.mrb[0].mxu0
        %v506 = vadd.f32 %v300, %v505
        %v507 = vpop.f32.mrb[0].mxu0
        %508 = vmatprep.mubr.f32.mxu0 0.0
        %509 = vmatmul.mubr.f32.gmra.mrb[0].mxu0 %v331
        %v510 = vpop.f32.mrb[0].mxu0
        %v511 = vadd.f32 %v300, %v510
        %v512 = vpop.f32.mrb[0].mxu0
        %513 = vmatprep.mubr.f32.mxu0 0.0
        %514 = vmatmul.mubr.f32.gmra.mrb[0].mxu0 %v334
        %v515 = vpop.f32.mrb[0].mxu0
        %v516 = vadd.f32 %v300, %v515
        %v517 = vpop.f32.mrb[0].mxu0
        %518 = vmatprep.mubr.f32.mxu0 0.0
        %519 = vmatmul.mubr.f32.gmra.mrb[0].mxu0 %v337
        %v520 = vpop.f32.mrb[0].mxu0
        %v521 = vadd.f32 %v300, %v520
        %v522 = vpop.f32.mrb[0].mxu0
        %523 = vmatprep.mubr.f32.mxu0 0.0
        %524 = vmatmul.mubr.f32.gmra.mrb[0].mxu0 %v340
        %v525 = vpop.f32.mrb[0].mxu0
        %v526 = vadd.f32 %v300, %v525
        %v527 = vpop.f32.mrb[0].mxu0
        %528 = vmatprep.mubr.f32.mxu0 0.0
        %529 = vmatmul.mubr.f32.gmra.mrb[0].mxu0 %v343
        %v530 = vpop.f32.mrb[0].mxu0
        %v531 = vadd.f32 %v300, %v530
        %v532 = vpop.f32.mrb[0].mxu0
        %533 = vmatprep.mubr.f32.mxu0 0.0
        %534 = vmatmul.mubr.f32.gmra.mrb[0].mxu0 %v346
        %v535 = vpop.f32.mrb[0].mxu0
        %v536 = vadd.f32 %v300, %v535
        %v537 = vpop.f32.mrb[0].mxu0
        %538 = vmatprep.mubr.f32.mxu0 0.0
        %539 = vmatmul.mubr.f32.gmra.mrb[0].mxu0 %v349
        %v540 = vpop.f32.mrb[0].mxu0
        %v541 = vadd.f32 %v300, %v540
        %v542 = vpop.f32.mrb[0].mxu0
        %543 = vmatprep.mubr.f32.mxu0 0.0
        %544 = vmatmul.mubr.f32.gmra.mrb[0].mxu0 %v352
        %v545 = vpop.f32.mrb[0].mxu0
        %v546 = vadd.f32 %v300, %v545
        %v547 = vpop.f32.mrb[0].mxu0
        %548 = vmatprep.mubr.f32.mxu0 0.0
        %549 = vmatmul.mubr.f32.gmra.mrb[0].mxu0 %v355
        %v550 = vpop.f32.mrb[0].mxu0
        %v551 = vadd.f32 %v300, %v550
        %v552 = vpop.f32.mrb[0].mxu0
        %553 = vmatprep.mubr.f32.mxu0 0.0
        %554 = vmatmul.mubr.f32.gmra.mrb[0].mxu0 %v358
        %v555 = vpop.f32.mrb[0].mxu0
        %v556 = vadd.f32 %v300, %v555
        %v557 = vpop.f32.mrb[0].mxu0
        %558 = vmatprep.mubr.f32.mxu0 0.0
        %559 = vmatmul.mubr.f32.gmra.mrb[0].mxu0 %v361
        %v560 = vpop.f32.mrb[0].mxu0
        %v561 = vadd.f32 %v300, %v560
        %v562 = vpop.f32.mrb[0].mxu0
        %563 = vmatprep.mubr.f32.mxu0 0.0
        %564 = vmatmul.mubr.f32.gmra.mrb[0].mxu0 %v364
        %v565 = vpop.f32.mrb[0].mxu0
        %v566 = vadd.f32 %v300, %v565
        %v567 = vpop.f32.mrb[0].mxu0
        %568 = vmatprep.mubr.f32.mxu0 0.0
        %569 = vmatmul.mubr.f32.gmra.mrb[0].mxu0 %v367
        %v570 = vpop.f32.mrb[0].mxu0
        %v571 = vadd.f32 %v300, %v570
        %v572 = vpop.f32.mrb[0].mxu0
        %573 = vmatprep.mubr.f32.mxu0 0.0
        %574 = vmatmul.mubr.f32.gmra.mrb[0].mxu0 %v370
        %v575 = vpop.f32.mrb[0].mxu0
        %v576 = vadd.f32 %v300, %v575
        %v577 = vpop.f32.mrb[0].mxu0
        %578 = vmatprep.mubr.f32.mxu0 0.0
        %579 = vmatmul.mubr.f32.gmra.mrb[0].mxu0 %v373
        %v580 = vpop.f32.mrb[0].mxu0
        %v581 = vadd.f32 %v300, %v580
        %v582 = vpop.f32.mrb[0].mxu0
        %583 = vmatprep.mubr.f32.mxu0 0.0
        %584 = vmatmul.mubr.f32.gmra.mrb[0].mxu0 %v376
        %v585 = vpop.f32.mrb[0].mxu0
        %v586 = vadd.f32 %v300, %v585
        %v587 = vpop.f32.mrb[0].mxu0
        %588 = vmatprep.mubr.f32.mxu0 0.0
        %589 = vmatmul.mubr.f32.gmra.mrb[0].mxu0 %v379
        %v590 = vpop.f32.mrb[0].mxu0
        %v591 = vadd.f32 %v300, %v590
        %v592 = vpop.f32.mrb[0].mxu0
        %593 = vmatprep.mubr.f32.mxu0 0.0
        %594 = vmatmul.mubr.f32.gmra.mrb[0].mxu0 %v382
        %v595 = vpop.f32.mrb[0].mxu0
        %v596 = vadd.f32 %v300, %v595
        %v597 = vpop.f32.mrb[0].mxu0
        %598 = vmatprep.mubr.f32.mxu0 0.0
        %599 = vmatmul.mubr.f32.gmra.mrb[0].mxu0 %v385
        %v600 = vpop.f32.mrb[0].mxu0
        %v601 = vadd.f32 %v300, %v600
        %v602 = vpop.f32.mrb[0].mxu0
        %603 = vmatprep.mubr.f32.mxu0 0.0
        %604 = vmatmul.mubr.f32.gmra.mrb[0].mxu0 %v388
        %v605 = vpop.f32.mrb[0].mxu0
        %v606 = vadd.f32 %v300, %v605
        %v607 = vpop.f32.mrb[0].mxu0
        %608 = vmatprep.mubr.f32.mxu0 0.0
        %609 = vmatmul.mubr.f32.gmra.mrb[0].mxu0 %v391
        %v610 = vpop.f32.mrb[0].mxu0
        %v611 = vadd.f32 %v300, %v610
        %v612 = vpop.f32.mrb[0].mxu0
        %613 = vmatprep.mubr.f32.mxu0 0.0
        %614 = vmatmul.mubr.f32.gmra.mrb[0].mxu0 %v394
        %v615 = vpop.f32.mrb[0].mxu0
        %v616 = vadd.f32 %v300, %v615
        %v617 = vpop.f32.mrb[0].mxu0
        %618 = vmatprep.mubr.f32.mxu0 0.0
        %619 = vmatmul.mubr.f32.gmra.mrb[0].mxu0 %v397
        %v620 = vpop.f32.mrb[0].mxu0
        %v621 = vadd.f32 %v300, %v620
        %v622 = vpop.f32.mrb[0].mxu0
        %623 = vdwg.mxu0
        %v624 = vld [vmem:[%s250] sm:$0xff]
        %v625 = vld [vmem:[%s250 + $0x8] sm:$0xff]
        %v626 = vld [vmem:[%s250 + $0x10] sm:$0xff]
        %v627 = vld [vmem:[%s250 + $0x18] sm:$0xff]
        %v628 = vld [vmem:[%s250 + $0x20] sm:$0xff]
        %v629 = vld [vmem:[%s250 + $0x28] sm:$0xff]
        %v630 = vld [vmem:[%s250 + $0x30] sm:$0xff]
        %v631 = vld [vmem:[%s250 + $0x38] sm:$0xff]
        %v632 = vld [vmem:[%s250 + $0x40] sm:$0xff]
        %v633 = vld [vmem:[%s250 + $0x48] sm:$0xff]
        %v634 = vld [vmem:[%s250 + $0x50] sm:$0xff]
        %v635 = vld [vmem:[%s250 + $0x58] sm:$0xff]
        %v636 = vld [vmem:[%s250 + $0x60] sm:$0xff]
        %v637 = vld [vmem:[%s250 + $0x68] sm:$0xff]
        %v638 = vld [vmem:[%s250 + $0x70] sm:$0xff]
        %v639 = vld [vmem:[%s250 + $0x78] sm:$0xff]
        %v640 = vld [vmem:[%s250 + $0x80] sm:$0xff]
        %v641 = vld [vmem:[%s250 + $0x88] sm:$0xff]
        %v642 = vld [vmem:[%s250 + $0x90] sm:$0xff]
        %v643 = vld [vmem:[%s250 + $0x98] sm:$0xff]
        %v644 = vld [vmem:[%s250 + $0xa0] sm:$0xff]
        %v645 = vld [vmem:[%s250 + $0xa8] sm:$0xff]
        %v646 = vld [vmem:[%s250 + $0xb0] sm:$0xff]
        %v647 = vld [vmem:[%s250 + $0xb8] sm:$0xff]
        %v648 = vld [vmem:[%s250 + $0xc0] sm:$0xff]
        %v649 = vld [vmem:[%s250 + $0xc8] sm:$0xff]
        %v650 = vld [vmem:[%s250 + $0xd0] sm:$0xff]
        %v651 = vld [vmem:[%s250 + $0xd8] sm:$0xff]
        %v652 = vld [vmem:[%s250 + $0xe0] sm:$0xff]
        %v653 = vld [vmem:[%s250 + $0xe8] sm:$0xff]
        %v654 = vld [vmem:[%s250 + $0xf0] sm:$0xff]
        %v655 = vld [vmem:[%s250 + $0xf8] sm:$0xff]
        %v656 = vadd.f32 %v466, %v624
        %v657 = vadd.f32 %v471, %v625
        %v658 = vadd.f32 %v476, %v626
        %v659 = vadd.f32 %v481, %v627
        %v660 = vadd.f32 %v486, %v628
        %v661 = vadd.f32 %v491, %v629
        %v662 = vadd.f32 %v496, %v630
        %v663 = vadd.f32 %v501, %v631
        %v664 = vadd.f32 %v506, %v632
        %v665 = vadd.f32 %v511, %v633
        %v666 = vadd.f32 %v516, %v634
        %v667 = vadd.f32 %v521, %v635
        %v668 = vadd.f32 %v526, %v636
        %v669 = vadd.f32 %v531, %v637
        %v670 = vadd.f32 %v536, %v638
        %v671 = vadd.f32 %v541, %v639
        %v672 = vadd.f32 %v546, %v640
        %v673 = vadd.f32 %v551, %v641
        %v674 = vadd.f32 %v556, %v642
        %v675 = vadd.f32 %v561, %v643
        %v676 = vadd.f32 %v566, %v644
        %v677 = vadd.f32 %v571, %v645
        %v678 = vadd.f32 %v576, %v646
        %v679 = vadd.f32 %v581, %v647
        %v680 = vadd.f32 %v586, %v648
        %v681 = vadd.f32 %v591, %v649
        %v682 = vadd.f32 %v596, %v650
        %v683 = vadd.f32 %v601, %v651
        %v684 = vadd.f32 %v606, %v652
        %v685 = vadd.f32 %v611, %v653
        %v686 = vadd.f32 %v616, %v654
        %v687 = vadd.f32 %v621, %v655
        %688 = vst.msk [vmem:[%s227] sm:$0xff] %vm302, %v656
        %689 = vst.msk [vmem:[%s227 + $0x8] sm:$0xff] %vm302, %v657
        %690 = vst.msk [vmem:[%s227 + $0x10] sm:$0xff] %vm302, %v658
        %691 = vst.msk [vmem:[%s227 + $0x18] sm:$0xff] %vm302, %v659
        %692 = vst.msk [vmem:[%s227 + $0x20] sm:$0xff] %vm302, %v660
        %693 = vst.msk [vmem:[%s227 + $0x28] sm:$0xff] %vm302, %v661
        %694 = vst.msk [vmem:[%s227 + $0x30] sm:$0xff] %vm302, %v662
        %695 = vst.msk [vmem:[%s227 + $0x38] sm:$0xff] %vm302, %v663
        %696 = vst.msk [vmem:[%s227 + $0x40] sm:$0xff] %vm302, %v664
        %697 = vst.msk [vmem:[%s227 + $0x48] sm:$0xff] %vm302, %v665
        %698 = vst.msk [vmem:[%s227 + $0x50] sm:$0xff] %vm302, %v666
        %699 = vst.msk [vmem:[%s227 + $0x58] sm:$0xff] %vm302, %v667
        %700 = vst.msk [vmem:[%s227 + $0x60] sm:$0xff] %vm302, %v668
        %701 = vst.msk [vmem:[%s227 + $0x68] sm:$0xff] %vm302, %v669
        %702 = vst.msk [vmem:[%s227 + $0x70] sm:$0xff] %vm302, %v670
        %703 = vst.msk [vmem:[%s227 + $0x78] sm:$0xff] %vm302, %v671
        %704 = vst.msk [vmem:[%s227 + $0x80] sm:$0xff] %vm302, %v672
        %705 = vst.msk [vmem:[%s227 + $0x88] sm:$0xff] %vm302, %v673
        %706 = vst.msk [vmem:[%s227 + $0x90] sm:$0xff] %vm302, %v674
        %707 = vst.msk [vmem:[%s227 + $0x98] sm:$0xff] %vm302, %v675
        %708 = vst.msk [vmem:[%s227 + $0xa0] sm:$0xff] %vm302, %v676
        %709 = vst.msk [vmem:[%s227 + $0xa8] sm:$0xff] %vm302, %v677
        %710 = vst.msk [vmem:[%s227 + $0xb0] sm:$0xff] %vm302, %v678
        %711 = vst.msk [vmem:[%s227 + $0xb8] sm:$0xff] %vm302, %v679
        %712 = vst.msk [vmem:[%s227 + $0xc0] sm:$0xff] %vm302, %v680
        %713 = vst.msk [vmem:[%s227 + $0xc8] sm:$0xff] %vm302, %v681
        %714 = vst.msk [vmem:[%s227 + $0xd0] sm:$0xff] %vm302, %v682
        %715 = vst.msk [vmem:[%s227 + $0xd8] sm:$0xff] %vm302, %v683
        %716 = vst.msk [vmem:[%s227 + $0xe0] sm:$0xff] %vm302, %v684
        %717 = vst.msk [vmem:[%s227 + $0xe8] sm:$0xff] %vm302, %v685
        %718 = vst.msk [vmem:[%s227 + $0xf0] sm:$0xff] %vm302, %v686
        %719 = vst.msk [vmem:[%s227 + $0xf8] sm:$0xff] %vm302, %v687
        %s720 = sand.u32 %s117, 1
        %s721 = sand.u32 %s117, 1
        %s722 = smul.addr %s721, 256
        %s723 = scalar_lea.vmem [#allocation2], %s722
        // Predicated region
        $region37: #{nors_forward.18} parent=35 // pred_check
          %p724 = pneg %p127
        $region38: #{nors_forward.18} parent=35 // pred_check_branch
          %726 = sbr.rel (%p724) target = $region40
        $region39: #{nors_forward.18} parent=35 // pred_region
          %s727 = smul.u32 32, %s15
          %s728 = ssub.s32 157, %s727
          %p729 = scmp.lt.s32.totalorder %s728, 32
          %s730 = scalar_select %p729, %s728, 32
          %s731 = smul.u32 128, %s730
          %p732 = scmp.ne.s32.totalorder 0, %s731
          %s733 = smul.addr %s727, 8
          %s734 = scalar_lea.vmem %s4, %s733
          // Predicated region
          $region41: #{nors_forward.18} parent=39 // pred_check
            %p735 = pneg %p732
          $region42: #{nors_forward.18} parent=39 // pred_check_branch
            %737 = sbr.rel (%p735) target = $region44
          $region43: #{nors_forward.18} parent=39 // pred_region
            // Predicated region
            $region45: #{nors_forward.18} parent=43 // pred_check
              _
            $region46: #{nors_forward.18} parent=43 // pred_check_branch
              %739 = sbr.rel (0) target = $region48
            $region47: #{nors_forward.18} parent=43 // pred_region
              // Predicated region
              $region67: #{nors_forward.18} parent=47 // pred_check
                _
              $region68: #{nors_forward.18} parent=47 // pred_check_branch
                %850 = sbr.rel (0) target = $region70
              $region69: #{nors_forward.18} parent=47 // pred_region
                %s851 = sshrl.u32 %s730, 5
                // While loop
                $region71: #{nors_forward.18} parent=69 // loop_pre_header
                  _
                $region72: #{nors_forward.18} parent=69 // loop_header
                  %s853 = sphi 0, %s855
                  %p854 = scmp.ge.s32.totalorder %s853, %s851
                  %s858 = sphi 0, %s927
                  %s859 = sphi %s723, %s930
                  %s860 = sphi %s734, %s931
                $region73: #{nors_forward.18} parent=69 // loop_header_branch
                  %857 = sbr.rel (%p854) target = $region77
                $region74: #{nors_forward.18} parent=69 // loop_body
                  %v861 = vld [vmem:[%s859] sm:$0xff]
                  %862 = vst [vmem:[%s860] sm:$0xff] %v861
                  %v863 = vld [vmem:[%s859 + $0x8] sm:$0xff]
                  %864 = vst [vmem:[%s860 + $0x8] sm:$0xff] %v863
                  %v865 = vld [vmem:[%s859 + $0x10] sm:$0xff]
                  %866 = vst [vmem:[%s860 + $0x10] sm:$0xff] %v865
                  %v867 = vld [vmem:[%s859 + $0x18] sm:$0xff]
                  %868 = vst [vmem:[%s860 + $0x18] sm:$0xff] %v867
                  %v869 = vld [vmem:[%s859 + $0x20] sm:$0xff]
                  %870 = vst [vmem:[%s860 + $0x20] sm:$0xff] %v869
                  %v871 = vld [vmem:[%s859 + $0x28] sm:$0xff]
                  %872 = vst [vmem:[%s860 + $0x28] sm:$0xff] %v871
                  %v873 = vld [vmem:[%s859 + $0x30] sm:$0xff]
                  %874 = vst [vmem:[%s860 + $0x30] sm:$0xff] %v873
                  %v875 = vld [vmem:[%s859 + $0x38] sm:$0xff]
                  %876 = vst [vmem:[%s860 + $0x38] sm:$0xff] %v875
                  %v877 = vld [vmem:[%s859 + $0x40] sm:$0xff]
                  %878 = vst [vmem:[%s860 + $0x40] sm:$0xff] %v877
                  %v879 = vld [vmem:[%s859 + $0x48] sm:$0xff]
                  %880 = vst [vmem:[%s860 + $0x48] sm:$0xff] %v879
                  %v881 = vld [vmem:[%s859 + $0x50] sm:$0xff]
                  %882 = vst [vmem:[%s860 + $0x50] sm:$0xff] %v881
                  %v883 = vld [vmem:[%s859 + $0x58] sm:$0xff]
                  %884 = vst [vmem:[%s860 + $0x58] sm:$0xff] %v883
                  %v885 = vld [vmem:[%s859 + $0x60] sm:$0xff]
                  %886 = vst [vmem:[%s860 + $0x60] sm:$0xff] %v885
                  %v887 = vld [vmem:[%s859 + $0x68] sm:$0xff]
                  %888 = vst [vmem:[%s860 + $0x68] sm:$0xff] %v887
                  %v889 = vld [vmem:[%s859 + $0x70] sm:$0xff]
                  %890 = vst [vmem:[%s860 + $0x70] sm:$0xff] %v889
                  %v891 = vld [vmem:[%s859 + $0x78] sm:$0xff]
                  %892 = vst [vmem:[%s860 + $0x78] sm:$0xff] %v891
                  %v893 = vld [vmem:[%s859 + $0x80] sm:$0xff]
                  %894 = vst [vmem:[%s860 + $0x80] sm:$0xff] %v893
                  %v895 = vld [vmem:[%s859 + $0x88] sm:$0xff]
                  %896 = vst [vmem:[%s860 + $0x88] sm:$0xff] %v895
                  %v897 = vld [vmem:[%s859 + $0x90] sm:$0xff]
                  %898 = vst [vmem:[%s860 + $0x90] sm:$0xff] %v897
                  %v899 = vld [vmem:[%s859 + $0x98] sm:$0xff]
                  %900 = vst [vmem:[%s860 + $0x98] sm:$0xff] %v899
                  %v901 = vld [vmem:[%s859 + $0xa0] sm:$0xff]
                  %902 = vst [vmem:[%s860 + $0xa0] sm:$0xff] %v901
                  %v903 = vld [vmem:[%s859 + $0xa8] sm:$0xff]
                  %904 = vst [vmem:[%s860 + $0xa8] sm:$0xff] %v903
                  %v905 = vld [vmem:[%s859 + $0xb0] sm:$0xff]
                  %906 = vst [vmem:[%s860 + $0xb0] sm:$0xff] %v905
                  %v907 = vld [vmem:[%s859 + $0xb8] sm:$0xff]
                  %908 = vst [vmem:[%s860 + $0xb8] sm:$0xff] %v907
                  %v909 = vld [vmem:[%s859 + $0xc0] sm:$0xff]
                  %910 = vst [vmem:[%s860 + $0xc0] sm:$0xff] %v909
                  %v911 = vld [vmem:[%s859 + $0xc8] sm:$0xff]
                  %912 = vst [vmem:[%s860 + $0xc8] sm:$0xff] %v911
                  %v913 = vld [vmem:[%s859 + $0xd0] sm:$0xff]
                  %914 = vst [vmem:[%s860 + $0xd0] sm:$0xff] %v913
                  %v915 = vld [vmem:[%s859 + $0xd8] sm:$0xff]
                  %916 = vst [vmem:[%s860 + $0xd8] sm:$0xff] %v915
                  %v917 = vld [vmem:[%s859 + $0xe0] sm:$0xff]
                  %918 = vst [vmem:[%s860 + $0xe0] sm:$0xff] %v917
                  %v919 = vld [vmem:[%s859 + $0xe8] sm:$0xff]
                  %920 = vst [vmem:[%s860 + $0xe8] sm:$0xff] %v919
                  %v921 = vld [vmem:[%s859 + $0xf0] sm:$0xff]
                  %922 = vst [vmem:[%s860 + $0xf0] sm:$0xff] %v921
                  %v923 = vld [vmem:[%s859 + $0xf8] sm:$0xff]
                  %924 = vst [vmem:[%s860 + $0xf8] sm:$0xff] %v923
                  %s925 = sadd.s32 1, %s858
                  %p926 = scmp.ge.s32.totalorder %s925, %s851
                  %s927 = scalar_select %p926, 0, %s925
                  %s928 = smul.u32 %s927, 256
                  %s929 = smul.u32 %s927, 256
                  %s930 = scalar_lea.vmem %s723, %s928 [#allocation2]
                  %s931 = scalar_lea.vmem %s734, %s929
                $region75: #{nors_forward.18} parent=69 // loop_footer
                  %s855 = sadd.s32 %s853, 1
                $region76: #{nors_forward.18} parent=69 // loop_footer_branch
                  %852 = sbr.rel target = $region72
                $region77: #{nors_forward.18} parent=69 // loop_exit
                  _
                %s932 = sshrl.u32 %s730, 5
                %s933 = sand.u32 %s730, 31
                %s934 = smul.u32 %s932, 32
                %s935 = smul.u32 8, %s934
                %s936 = scalar_lea.vmem %s723, %s935 [#allocation2]
                %s937 = smul.u32 8, %s934
                %s938 = scalar_lea.vmem %s734, %s937
                // While loop
                $region78: #{nors_forward.18} parent=69 // loop_pre_header
                  _
                $region79: #{nors_forward.18} parent=69 // loop_header
                  %s940 = sphi 0, %s942
                  %p941 = scmp.ge.s32.totalorder %s940, %s933
                  %s945 = sphi 0, %s952
                  %s946 = sphi %s936, %s955
                  %s947 = sphi %s938, %s956
                $region80: #{nors_forward.18} parent=69 // loop_header_branch
                  %944 = sbr.rel (%p941) target = $region84
                $region81: #{nors_forward.18} parent=69 // loop_body
                  %v948 = vld [vmem:[%s946] sm:$0xff]
                  %949 = vst [vmem:[%s947] sm:$0xff] %v948
                  %s950 = sadd.s32 1, %s945
                  %p951 = scmp.ge.s32.totalorder %s950, %s933
                  %s952 = scalar_select %p951, 0, %s950
                  %s953 = smul.u32 %s952, 8
                  %s954 = smul.u32 %s952, 8
                  %s955 = scalar_lea.vmem %s936, %s953 [#allocation2]
                  %s956 = scalar_lea.vmem %s938, %s954
                $region82: #{nors_forward.18} parent=69 // loop_footer
                  %s942 = sadd.s32 %s940, 1
                $region83: #{nors_forward.18} parent=69 // loop_footer_branch
                  %939 = sbr.rel target = $region79
                $region84: #{nors_forward.18} parent=69 // loop_exit
                  _
              $region70: #{nors_forward.18} parent=47 // pred_fallthru
                _
              // Predicated region
              $region85: #{nors_forward.18} parent=47 // pred_check
                _
              $region86: #{nors_forward.18} parent=47 // pred_check_branch
                %958 = sbr.rel target = $region88
              $region87: #{nors_forward.18} parent=47 // pred_region
                _
              $region88: #{nors_forward.18} parent=47 // pred_fallthru
                _
            $region48: #{nors_forward.18} parent=43 // pred_fallthru
              _
            // Predicated region
            $region49: #{nors_forward.18} parent=43 // pred_check
              _
            $region50: #{nors_forward.18} parent=43 // pred_check_branch
              %741 = sbr.rel target = $region52
            $region51: #{nors_forward.18} parent=43 // pred_region
              %s743 = sshrl.u32 %s730, 5
              // While loop
              $region53: #{nors_forward.18} parent=51 // loop_pre_header
                _
              $region54: #{nors_forward.18} parent=51 // loop_header
                %s745 = sphi 0, %s747
                %p746 = scmp.ge.s32.totalorder %s745, %s743
                %s750 = sphi 0, %s819
                %s751 = sphi %s723, %s822
                %s752 = sphi %s734, %s823
              $region55: #{nors_forward.18} parent=51 // loop_header_branch
                %749 = sbr.rel (%p746) target = $region59
              $region56: #{nors_forward.18} parent=51 // loop_body
                %v753 = vld [vmem:[%s751] sm:$0xff]
                %754 = vst [vmem:[%s752] sm:$0xff] %v753
                %v755 = vld [vmem:[%s751 + $0x8] sm:$0xff]
                %756 = vst [vmem:[%s752 + $0x8] sm:$0xff] %v755
                %v757 = vld [vmem:[%s751 + $0x10] sm:$0xff]
                %758 = vst [vmem:[%s752 + $0x10] sm:$0xff] %v757
                %v759 = vld [vmem:[%s751 + $0x18] sm:$0xff]
                %760 = vst [vmem:[%s752 + $0x18] sm:$0xff] %v759
                %v761 = vld [vmem:[%s751 + $0x20] sm:$0xff]
                %762 = vst [vmem:[%s752 + $0x20] sm:$0xff] %v761
                %v763 = vld [vmem:[%s751 + $0x28] sm:$0xff]
                %764 = vst [vmem:[%s752 + $0x28] sm:$0xff] %v763
                %v765 = vld [vmem:[%s751 + $0x30] sm:$0xff]
                %766 = vst [vmem:[%s752 + $0x30] sm:$0xff] %v765
                %v767 = vld [vmem:[%s751 + $0x38] sm:$0xff]
                %768 = vst [vmem:[%s752 + $0x38] sm:$0xff] %v767
                %v769 = vld [vmem:[%s751 + $0x40] sm:$0xff]
                %770 = vst [vmem:[%s752 + $0x40] sm:$0xff] %v769
                %v771 = vld [vmem:[%s751 + $0x48] sm:$0xff]
                %772 = vst [vmem:[%s752 + $0x48] sm:$0xff] %v771
                %v773 = vld [vmem:[%s751 + $0x50] sm:$0xff]
                %774 = vst [vmem:[%s752 + $0x50] sm:$0xff] %v773
                %v775 = vld [vmem:[%s751 + $0x58] sm:$0xff]
                %776 = vst [vmem:[%s752 + $0x58] sm:$0xff] %v775
                %v777 = vld [vmem:[%s751 + $0x60] sm:$0xff]
                %778 = vst [vmem:[%s752 + $0x60] sm:$0xff] %v777
                %v779 = vld [vmem:[%s751 + $0x68] sm:$0xff]
                %780 = vst [vmem:[%s752 + $0x68] sm:$0xff] %v779
                %v781 = vld [vmem:[%s751 + $0x70] sm:$0xff]
                %782 = vst [vmem:[%s752 + $0x70] sm:$0xff] %v781
                %v783 = vld [vmem:[%s751 + $0x78] sm:$0xff]
                %784 = vst [vmem:[%s752 + $0x78] sm:$0xff] %v783
                %v785 = vld [vmem:[%s751 + $0x80] sm:$0xff]
                %786 = vst [vmem:[%s752 + $0x80] sm:$0xff] %v785
                %v787 = vld [vmem:[%s751 + $0x88] sm:$0xff]
                %788 = vst [vmem:[%s752 + $0x88] sm:$0xff] %v787
                %v789 = vld [vmem:[%s751 + $0x90] sm:$0xff]
                %790 = vst [vmem:[%s752 + $0x90] sm:$0xff] %v789
                %v791 = vld [vmem:[%s751 + $0x98] sm:$0xff]
                %792 = vst [vmem:[%s752 + $0x98] sm:$0xff] %v791
                %v793 = vld [vmem:[%s751 + $0xa0] sm:$0xff]
                %794 = vst [vmem:[%s752 + $0xa0] sm:$0xff] %v793
                %v795 = vld [vmem:[%s751 + $0xa8] sm:$0xff]
                %796 = vst [vmem:[%s752 + $0xa8] sm:$0xff] %v795
                %v797 = vld [vmem:[%s751 + $0xb0] sm:$0xff]
                %798 = vst [vmem:[%s752 + $0xb0] sm:$0xff] %v797
                %v799 = vld [vmem:[%s751 + $0xb8] sm:$0xff]
                %800 = vst [vmem:[%s752 + $0xb8] sm:$0xff] %v799
                %v801 = vld [vmem:[%s751 + $0xc0] sm:$0xff]
                %802 = vst [vmem:[%s752 + $0xc0] sm:$0xff] %v801
                %v803 = vld [vmem:[%s751 + $0xc8] sm:$0xff]
                %804 = vst [vmem:[%s752 + $0xc8] sm:$0xff] %v803
                %v805 = vld [vmem:[%s751 + $0xd0] sm:$0xff]
                %806 = vst [vmem:[%s752 + $0xd0] sm:$0xff] %v805
                %v807 = vld [vmem:[%s751 + $0xd8] sm:$0xff]
                %808 = vst [vmem:[%s752 + $0xd8] sm:$0xff] %v807
                %v809 = vld [vmem:[%s751 + $0xe0] sm:$0xff]
                %810 = vst [vmem:[%s752 + $0xe0] sm:$0xff] %v809
                %v811 = vld [vmem:[%s751 + $0xe8] sm:$0xff]
                %812 = vst [vmem:[%s752 + $0xe8] sm:$0xff] %v811
                %v813 = vld [vmem:[%s751 + $0xf0] sm:$0xff]
                %814 = vst [vmem:[%s752 + $0xf0] sm:$0xff] %v813
                %v815 = vld [vmem:[%s751 + $0xf8] sm:$0xff]
                %816 = vst [vmem:[%s752 + $0xf8] sm:$0xff] %v815
                %s817 = sadd.s32 1, %s750
                %p818 = scmp.ge.s32.totalorder %s817, %s743
                %s819 = scalar_select %p818, 0, %s817
                %s820 = smul.u32 %s819, 256
                %s821 = smul.u32 %s819, 256
                %s822 = scalar_lea.vmem %s723, %s820 [#allocation2]
                %s823 = scalar_lea.vmem %s734, %s821
              $region57: #{nors_forward.18} parent=51 // loop_footer
                %s747 = sadd.s32 %s745, 1
              $region58: #{nors_forward.18} parent=51 // loop_footer_branch
                %744 = sbr.rel target = $region54
              $region59: #{nors_forward.18} parent=51 // loop_exit
                _
              %s824 = sshrl.u32 %s730, 5
              %s825 = sand.u32 %s730, 31
              %s826 = smul.u32 %s824, 32
              %s827 = smul.u32 8, %s826
              %s828 = scalar_lea.vmem %s723, %s827 [#allocation2]
              %s829 = smul.u32 8, %s826
              %s830 = scalar_lea.vmem %s734, %s829
              // While loop
              $region60: #{nors_forward.18} parent=51 // loop_pre_header
                _
              $region61: #{nors_forward.18} parent=51 // loop_header
                %s832 = sphi 0, %s834
                %p833 = scmp.ge.s32.totalorder %s832, %s825
                %s837 = sphi 0, %s844
                %s838 = sphi %s828, %s847
                %s839 = sphi %s830, %s848
              $region62: #{nors_forward.18} parent=51 // loop_header_branch
                %836 = sbr.rel (%p833) target = $region66
              $region63: #{nors_forward.18} parent=51 // loop_body
                %v840 = vld [vmem:[%s838] sm:$0xff]
                %841 = vst [vmem:[%s839] sm:$0xff] %v840
                %s842 = sadd.s32 1, %s837
                %p843 = scmp.ge.s32.totalorder %s842, %s825
                %s844 = scalar_select %p843, 0, %s842
                %s845 = smul.u32 %s844, 8
                %s846 = smul.u32 %s844, 8
                %s847 = scalar_lea.vmem %s828, %s845 [#allocation2]
                %s848 = scalar_lea.vmem %s830, %s846
              $region64: #{nors_forward.18} parent=51 // loop_footer
                %s834 = sadd.s32 %s832, 1
              $region65: #{nors_forward.18} parent=51 // loop_footer_branch
                %831 = sbr.rel target = $region61
              $region66: #{nors_forward.18} parent=51 // loop_exit
                _
            $region52: #{nors_forward.18} parent=43 // pred_fallthru
              _
          $region44: #{nors_forward.18} parent=39 // pred_fallthru
            _
          %959 = vnop
        $region40: #{nors_forward.18} parent=35 // pred_fallthru
          _
      $region36: #{nors_forward.18} parent=5 // pred_fallthru
        _
      %p960 = scmp.le.s32.totalorder 2, %s10
      // Predicated region
      $region89: #{nors_forward.18} parent=5 // pred_check
        %p961 = pneg %p960
      $region90: #{nors_forward.18} parent=5 // pred_check_branch
        %963 = sbr.rel (%p961) target = $region92
      $region91: #{nors_forward.18} parent=5 // pred_region
        %s964 = ssub.s32 %s10, 2
        // Predicated region
        $region93: #{nors_forward.18} parent=91 // pred_check
          %p965 = pneg %p133
        $region94: #{nors_forward.18} parent=91 // pred_check_branch
          %967 = sbr.rel (%p965) target = $region96
        $region95: #{nors_forward.18} parent=91 // pred_region
          %s968 = sand.u32 %s118, 1
          %s969 = sand.u32 %s118, 1
          %s970 = smul.addr %s969, 256
          %s971 = scalar_lea.vmem [#allocation2], %s970
        $region96: #{nors_forward.18} parent=91 // pred_fallthru
          _
      $region92: #{nors_forward.18} parent=5 // pred_fallthru
        _
    $region6: #{nors_forward.18} parent=1 // loop_footer
      %s14 = sadd.s32 1, %s10
    $region7: #{nors_forward.18} parent=1 // loop_footer_branch
      %9 = sbr.rel target = $region3
    $region8: #{nors_forward.18} parent=1 // loop_exit
      _

// kernel: nors_forward.19
$region0: #{nors_forward.19}
  #allocation0 [shape = 'u32[]', space=smem, size = 0x4, offset = 0x4, fixed_abs, tag = 'smem constant byte address 0x4 - core index']
  #allocation1 [shape = 'u32[144,128]{1,0:T(1,128)}', space=vmem, size = 0x12000, scoped, tag = 'internal scratch']
  #allocation2 [shape = 'f32[1,1]{1,0:T(1,128)S(1)}', space=vmem, size = 0x200, scoped, tag = 'scoped memory for nors_forward.19']
  %s0 = inlined_call_operand.vmem [shape: f32[512,16], index: 0, kind: input, shape index: {}]
  %s1 = inlined_call_operand.vmem [shape: f32[16,128], index: 1, kind: input, shape index: {}]
  %s2 = inlined_call_operand.vmem [shape: f32[1,128], index: 2, kind: input, shape index: {}]
  %s3 = inlined_call_operand.vmem [shape: f32[128,1], index: 3, kind: input, shape index: {}]
  %s4 = inlined_call_operand.<no memory space> [shape: f32[1,1], index: 4, kind: input, shape index: {}]
  %s5 = inlined_call_operand.vmem [shape: f32[512,1], index: 5, kind: output, shape index: {}]
  %s6 = sld [smem:[#allocation0]]
  $region53: #{nors_forward.19} parent=0
    _
  %s8 = ssub.s32 1, %s6
  %s9 = scalar_select 0, %s8, %s6
  %v10 = vstv %s4
  %11 = vst [vmem:[#allocation2] sm:$0x1] %v10
  loop: start=0, step=1, limit=4
  $region2: #{nors_forward.19} parent=0 // loop_pre_header
    _
  $region3: #{nors_forward.19} parent=0 // loop_header
    %s13 = sphi 0, %s17
    %p14 = scmp.ge.s32.totalorder %s13, 4
    %s23 = sphi 0, %s25
    %s26 = sphi 0, %s23
    %s27 = sphi 0, %s26
    %s43 = sphi 0, %s27
    %s47 = sphi 0, %s47
    %s49 = sphi 0, %s47
    %s50 = sphi 0, %s49
    %s64 = sphi 0, %s50
    %s68 = sphi 0, %s68
    %s70 = sphi 0, %s68
    %s71 = sphi 0, %s70
    %s85 = sphi 0, %s71
    %s89 = sphi 0, %s89
    %s91 = sphi 0, %s89
    %s92 = sphi 0, %s91
    %s106 = sphi 0, %s92
    %s110 = sphi 0, %s110
    %s112 = sphi 0, %s110
    %s113 = sphi 0, %s112
    %s127 = sphi 0, %s113
    %s133 = sphi 0, %s135
    %s136 = sphi 0, %s133
    %s137 = sphi 0, %s136
    %s153 = sphi 0, %s137
  $region4: #{nors_forward.19} parent=0 // loop_header_branch
    %16 = sbr.rel (%p14) target = $region8
  $region5: #{nors_forward.19} parent=0 // loop_body
    %s18 = ssub.s32 %s13, 1
    %s19 = ssub.s32 %s13, 2
    %s20 = sadd.s32 %s13, 1
    %s21 = ssub.s32 %s13, %s20
    %p22 = scmp.eq.s32.totalorder %s21, 0
    %s24 = sadd.s32 %s23, 1
    %s25 = scalar_select %p22, %s23, %s24
    %p28 = pneg %p22
    %p29 = scmp.eq.s32.totalorder %s13, 1
    %p30 = por %p28, %p29
    %p31 = scmp.ne.s32.totalorder %s23, %s26
    %p32 = scmp.eq.s32.totalorder %s13, 0
    %p33 = por %p31, %p32
    %p34 = scmp.ne.s32.totalorder %s23, %s26
    %p35 = scmp.eq.s32.totalorder %s18, 1
    %p36 = por %p34, %p35
    %p37 = scmp.ne.s32.totalorder %s26, %s27
    %p38 = scmp.eq.s32.totalorder %s18, 0
    %p39 = por %p37, %p38
    %p40 = scmp.ne.s32.totalorder %s26, %s27
    %p41 = scmp.eq.s32.totalorder %s19, 1
    %p42 = por %p40, %p41
    %p44 = scmp.ne.s32.totalorder %s27, %s43
    %p45 = scmp.eq.s32.totalorder %s19, 0
    %p46 = por %p44, %p45
    %s48 = sadd.s32 %s47, 1
    %p51 = scmp.eq.s32.totalorder %s13, 1
    %p52 = scmp.ne.s32.totalorder %s47, %s49
    %p53 = scmp.eq.s32.totalorder %s13, 0
    %p54 = por %p52, %p53
    %p55 = scmp.ne.s32.totalorder %s47, %s49
    %p56 = scmp.eq.s32.totalorder %s18, 1
    %p57 = por %p55, %p56
    %p58 = scmp.ne.s32.totalorder %s49, %s50
    %p59 = scmp.eq.s32.totalorder %s18, 0
    %p60 = por %p58, %p59
    %p61 = scmp.ne.s32.totalorder %s49, %s50
    %p62 = scmp.eq.s32.totalorder %s19, 1
    %p63 = por %p61, %p62
    %p65 = scmp.ne.s32.totalorder %s50, %s64
    %p66 = scmp.eq.s32.totalorder %s19, 0
    %p67 = por %p65, %p66
    %s69 = sadd.s32 %s68, 1
    %p72 = scmp.eq.s32.totalorder %s13, 1
    %p73 = scmp.ne.s32.totalorder %s68, %s70
    %p74 = scmp.eq.s32.totalorder %s13, 0
    %p75 = por %p73, %p74
    %p76 = scmp.ne.s32.totalorder %s68, %s70
    %p77 = scmp.eq.s32.totalorder %s18, 1
    %p78 = por %p76, %p77
    %p79 = scmp.ne.s32.totalorder %s70, %s71
    %p80 = scmp.eq.s32.totalorder %s18, 0
    %p81 = por %p79, %p80
    %p82 = scmp.ne.s32.totalorder %s70, %s71
    %p83 = scmp.eq.s32.totalorder %s19, 1
    %p84 = por %p82, %p83
    %p86 = scmp.ne.s32.totalorder %s71, %s85
    %p87 = scmp.eq.s32.totalorder %s19, 0
    %p88 = por %p86, %p87
    %s90 = sadd.s32 %s89, 1
    %p93 = scmp.eq.s32.totalorder %s13, 1
    %p94 = scmp.ne.s32.totalorder %s89, %s91
    %p95 = scmp.eq.s32.totalorder %s13, 0
    %p96 = por %p94, %p95
    %p97 = scmp.ne.s32.totalorder %s89, %s91
    %p98 = scmp.eq.s32.totalorder %s18, 1
    %p99 = por %p97, %p98
    %p100 = scmp.ne.s32.totalorder %s91, %s92
    %p101 = scmp.eq.s32.totalorder %s18, 0
    %p102 = por %p100, %p101
    %p103 = scmp.ne.s32.totalorder %s91, %s92
    %p104 = scmp.eq.s32.totalorder %s19, 1
    %p105 = por %p103, %p104
    %p107 = scmp.ne.s32.totalorder %s92, %s106
    %p108 = scmp.eq.s32.totalorder %s19, 0
    %p109 = por %p107, %p108
    %s111 = sadd.s32 %s110, 1
    %p114 = scmp.eq.s32.totalorder %s13, 1
    %p115 = scmp.ne.s32.totalorder %s110, %s112
    %p116 = scmp.eq.s32.totalorder %s13, 0
    %p117 = por %p115, %p116
    %p118 = scmp.ne.s32.totalorder %s110, %s112
    %p119 = scmp.eq.s32.totalorder %s18, 1
    %p120 = por %p118, %p119
    %p121 = scmp.ne.s32.totalorder %s112, %s113
    %p122 = scmp.eq.s32.totalorder %s18, 0
    %p123 = por %p121, %p122
    %p124 = scmp.ne.s32.totalorder %s112, %s113
    %p125 = scmp.eq.s32.totalorder %s19, 1
    %p126 = por %p124, %p125
    %p128 = scmp.ne.s32.totalorder %s113, %s127
    %p129 = scmp.eq.s32.totalorder %s19, 0
    %p130 = por %p128, %p129
    %s131 = ssub.s32 %s13, %s20
    %p132 = scmp.eq.s32.totalorder %s131, 0
    %s134 = sadd.s32 %s133, 1
    %s135 = scalar_select %p132, %s133, %s134
    %p138 = pneg %p132
    %p139 = scmp.eq.s32.totalorder %s13, 1
    %p140 = por %p138, %p139
    %p141 = scmp.ne.s32.totalorder %s133, %s136
    %p142 = scmp.eq.s32.totalorder %s13, 0
    %p143 = por %p141, %p142
    %p144 = scmp.ne.s32.totalorder %s133, %s136
    %p145 = scmp.eq.s32.totalorder %s18, 1
    %p146 = por %p144, %p145
    %p147 = scmp.ne.s32.totalorder %s136, %s137
    %p148 = scmp.eq.s32.totalorder %s18, 0
    %p149 = por %p147, %p148
    %p150 = scmp.ne.s32.totalorder %s136, %s137
    %p151 = scmp.eq.s32.totalorder %s19, 1
    %p152 = por %p150, %p151
    %p154 = scmp.ne.s32.totalorder %s137, %s153
    %p155 = scmp.eq.s32.totalorder %s19, 0
    %p156 = por %p154, %p155
    %p157 = scmp.le.s32.totalorder 1, %s13
    %p158 = scmp.lt.s32.totalorder %s13, 3
    %p159 = pnand %p157, %p158
    %p160 = pneg %p159
    // Predicated region
    $region9: #{nors_forward.19} parent=5 // pred_check
      _
    $region10: #{nors_forward.19} parent=5 // pred_check_branch
      %162 = sbr.rel (%p159) target = $region12
    $region11: #{nors_forward.19} parent=5 // pred_region
      %s163 = ssub.s32 %s13, 1
      // Predicated region
      $region13: #{nors_forward.19} parent=11 // pred_check
        %p164 = pneg %p60
      $region14: #{nors_forward.19} parent=11 // pred_check_branch
        %166 = sbr.rel (%p164) target = $region16
      $region15: #{nors_forward.19} parent=11 // pred_region
        _
      $region16: #{nors_forward.19} parent=11 // pred_fallthru
        _
      // Predicated region
      $region17: #{nors_forward.19} parent=11 // pred_check
        %p167 = pneg %p81
      $region18: #{nors_forward.19} parent=11 // pred_check_branch
        %169 = sbr.rel (%p167) target = $region20
      $region19: #{nors_forward.19} parent=11 // pred_region
        _
      $region20: #{nors_forward.19} parent=11 // pred_fallthru
        _
      // Predicated region
      $region21: #{nors_forward.19} parent=11 // pred_check
        %p170 = pneg %p102
      $region22: #{nors_forward.19} parent=11 // pred_check_branch
        %172 = sbr.rel (%p170) target = $region24
      $region23: #{nors_forward.19} parent=11 // pred_region
        _
      $region24: #{nors_forward.19} parent=11 // pred_fallthru
        _
      // Predicated region
      $region25: #{nors_forward.19} parent=11 // pred_check
        %p173 = pneg %p123
      $region26: #{nors_forward.19} parent=11 // pred_check_branch
        %175 = sbr.rel (%p173) target = $region28
      $region27: #{nors_forward.19} parent=11 // pred_region
        _
      $region28: #{nors_forward.19} parent=11 // pred_fallthru
        _
    $region12: #{nors_forward.19} parent=5 // pred_fallthru
      _
    %p176 = scmp.lt.s32.totalorder %s13, 2
    // Predicated region
    $region29: #{nors_forward.19} parent=5 // pred_check
      %p177 = pneg %p176
    $region30: #{nors_forward.19} parent=5 // pred_check_branch
      %179 = sbr.rel (%p177) target = $region32
    $region31: #{nors_forward.19} parent=5 // pred_region
      // Predicated region
      $region33: #{nors_forward.19} parent=31 // pred_check
        %p180 = pneg %p33
      $region34: #{nors_forward.19} parent=31 // pred_check_branch
        %182 = sbr.rel (%p180) target = $region36
      $region35: #{nors_forward.19} parent=31 // pred_region
        %s183 = smul.u32 32, %s13
        %p184 = scmp.lt.s32.totalorder %s183, 63
        %s185 = scalar_select %p184, %s183, 63
        %s186 = smul.addr %s185, 8
        %s187 = scalar_lea.vmem %s0, %s186
        %s188 = smul.u32 32, %s13
      $region36: #{nors_forward.19} parent=31 // pred_fallthru
        _
    $region32: #{nors_forward.19} parent=5 // pred_fallthru
      _
    %p189 = scmp.le.s32.totalorder 1, %s13
    %p190 = scmp.lt.s32.totalorder %s13, 3
    %p191 = pnand %p189, %p190
    %p192 = pneg %p191
    // Predicated region
    $region37: #{nors_forward.19} parent=5 // pred_check
      _
    $region38: #{nors_forward.19} parent=5 // pred_check_branch
      %194 = sbr.rel (%p191) target = $region40
    $region39: #{nors_forward.19} parent=5 // pred_region
      %s195 = ssub.s32 %s13, 1
      %s196 = smul.u32 32, %s18
      %p197 = scmp.lt.s32.totalorder %s196, 63
      %s198 = scalar_select %p197, %s196, 63
      %s199 = smul.addr %s198, 8
      %s200 = scalar_lea.vmem %s0, %s199
      %p201 = pneg %p39
      %p202 = pneg %p36
      %p203 = pneg %p60
      %p204 = pneg %p57
      %p205 = pneg %p81
      %p206 = pneg %p78
      %p207 = pneg %p102
      %p208 = pneg %p99
      %p209 = pneg %p123
      %p210 = pneg %p120
      %p211 = pneg %p149
      %p212 = pneg %p146
      %s213 = smul.u32 32, %s18
      %p214 = scmp.lt.s32.totalorder %s213, 63
      %s215 = scalar_select %p214, %s213, 63
      %s216 = smul.addr %s215, 8
      %s217 = scalar_lea.vmem %s5, %s216
      %s218 = smul.u32 32, %s18
      %p219 = scmp.lt.s32.totalorder %s218, 63
      %s220 = scalar_select %p219, %s218, 63
      %s221 = smul.addr %s220, 8
      %s222 = scalar_lea.vmem %s0, %s221
      %s223 = smul.u32 32, %s18
      %s224 = smul.u32 32, %s18
      %p225 = scmp.lt.s32.totalorder %s224, 63
      %s226 = scalar_select %p225, %s224, 63
      %s227 = smul.addr %s226, 8
      %s228 = scalar_lea.vmem %s5, %s227
      %s229 = smul.u32 32, %s18
      %v230 = vld [vmem:[%s222] sm:$0xff]
      %v231 = vld [vmem:[%s222 + $0x8] sm:$0xff]
      %v232 = vld [vmem:[%s222 + $0x10] sm:$0xff]
      %v233 = vld [vmem:[%s222 + $0x18] sm:$0xff]
      %v234 = vld [vmem:[%s222 + $0x20] sm:$0xff]
      %v235 = vld [vmem:[%s222 + $0x28] sm:$0xff]
      %v236 = vld [vmem:[%s222 + $0x30] sm:$0xff]
      %v237 = vld [vmem:[%s222 + $0x38] sm:$0xff]
      %v238 = vld [vmem:[%s222 + $0x40] sm:$0xff]
      %v239 = vld [vmem:[%s222 + $0x48] sm:$0xff]
      %v240 = vld [vmem:[%s222 + $0x50] sm:$0xff]
      %v241 = vld [vmem:[%s222 + $0x58] sm:$0xff]
      %v242 = vld [vmem:[%s222 + $0x60] sm:$0xff]
      %v243 = vld [vmem:[%s222 + $0x68] sm:$0xff]
      %v244 = vld [vmem:[%s222 + $0x70] sm:$0xff]
      %v245 = vld [vmem:[%s222 + $0x78] sm:$0xff]
      %v246 = vld [vmem:[%s222 + $0x80] sm:$0xff]
      %v247 = vld [vmem:[%s222 + $0x88] sm:$0xff]
      %v248 = vld [vmem:[%s222 + $0x90] sm:$0xff]
      %v249 = vld [vmem:[%s222 + $0x98] sm:$0xff]
      %v250 = vld [vmem:[%s222 + $0xa0] sm:$0xff]
      %v251 = vld [vmem:[%s222 + $0xa8] sm:$0xff]
      %v252 = vld [vmem:[%s222 + $0xb0] sm:$0xff]
      %v253 = vld [vmem:[%s222 + $0xb8] sm:$0xff]
      %v254 = vld [vmem:[%s222 + $0xc0] sm:$0xff]
      %v255 = vld [vmem:[%s222 + $0xc8] sm:$0xff]
      %v256 = vld [vmem:[%s222 + $0xd0] sm:$0xff]
      %v257 = vld [vmem:[%s222 + $0xd8] sm:$0xff]
      %v258 = vld [vmem:[%s222 + $0xe0] sm:$0xff]
      %v259 = vld [vmem:[%s222 + $0xe8] sm:$0xff]
      %v260 = vld [vmem:[%s222 + $0xf0] sm:$0xff]
      %v261 = vld [vmem:[%s222 + $0xf8] sm:$0xff]
      %v262 = vld [vmem:[%s1] sm:$0xff]
      %v263 = vld [vmem:[%s1 + $0x8] sm:$0xff]
      %v264 = vld [vmem:[%s2] sm:$0x1]
      %v266 = vlaneseq
      %v267 = vshrl.u32 %v266, 7
      %v268 = vsub.s32 0, %v267
      %v269 = vrot.slane %v264, %v268
      %vm271 = vcmask 130048
      %v273 = vsel %vm271, %v230, 0
      %v276 = vsel %vm271, %v231, 0
      %v279 = vsel %vm271, %v232, 0
      %v282 = vsel %vm271, %v233, 0
      %v285 = vsel %vm271, %v234, 0
      %v288 = vsel %vm271, %v235, 0
      %v291 = vsel %vm271, %v236, 0
      %v294 = vsel %vm271, %v237, 0
      %v297 = vsel %vm271, %v238, 0
      %v300 = vsel %vm271, %v239, 0
      %v303 = vsel %vm271, %v240, 0
      %v306 = vsel %vm271, %v241, 0
      %v309 = vsel %vm271, %v242, 0
      %v312 = vsel %vm271, %v243, 0
      %v315 = vsel %vm271, %v244, 0
      %v318 = vsel %vm271, %v245, 0
      %v321 = vsel %vm271, %v246, 0
      %v324 = vsel %vm271, %v247, 0
      %v327 = vsel %vm271, %v248, 0
      %v330 = vsel %vm271, %v249, 0
      %v333 = vsel %vm271, %v250, 0
      %v336 = vsel %vm271, %v251, 0
      %v339 = vsel %vm271, %v252, 0
      %v342 = vsel %vm271, %v253, 0
      %v345 = vsel %vm271, %v254, 0
      %v348 = vsel %vm271, %v255, 0
      %v351 = vsel %vm271, %v256, 0
      %v354 = vsel %vm271, %v257, 0
      %v357 = vsel %vm271, %v258, 0
      %v360 = vsel %vm271, %v259, 0
      %v363 = vsel %vm271, %v260, 0
      %v366 = vsel %vm271, %v261, 0
      %368 = vmatprep.subr.mxu0 0.0
      %369 = vmatpush1.msra.mxu0 %v262
      %370 = vmatprep.subr.mxu0 0.0
      %371 = vmatpush1.msra.mxu0 %v263
      %372 = vmatprep.subr.mxu0 0.0
      %373 = vmatpush1.msra.mxu0 0.0
      %374 = vmatprep.subr.mxu0 0.0
      %375 = vmatpush1.msra.mxu0 0.0
      %376 = vmatprep.subr.mxu0 0.0
      %377 = vmatpush1.msra.mxu0 0.0
      %378 = vmatprep.subr.mxu0 0.0
      %379 = vmatpush1.msra.mxu0 0.0
      %380 = vmatprep.subr.mxu0 0.0
      %381 = vmatpush1.msra.mxu0 0.0
      %382 = vmatprep.subr.mxu0 0.0
      %383 = vmatpush1.msra.mxu0 0.0
      %384 = vmatprep.subr.mxu0 0.0
      %385 = vmatpush1.msra.mxu0 0.0
      %386 = vmatprep.subr.mxu0 0.0
      %387 = vmatpush1.msra.mxu0 0.0
      %388 = vmatprep.subr.mxu0 0.0
      %389 = vmatpush1.msra.mxu0 0.0
      %390 = vmatprep.subr.mxu0 0.0
      %391 = vmatpush1.msra.mxu0 0.0
      %392 = vmatprep.subr.mxu0 0.0
      %393 = vmatpush1.msra.mxu0 0.0
      %394 = vmatprep.subr.mxu0 0.0
      %395 = vmatpush1.msra.mxu0 0.0
      %396 = vmatprep.subr.mxu0 0.0
      %397 = vmatpush1.msra.mxu0 0.0
      %398 = vmatprep.subr.mxu0 0.0
      %399 = vmatpush1.msra.mxu0 0.0
      %400 = vmatprep.subr.mxu0 0.0
      %401 = vmatpush1.msra.mxu0 0.0
      %402 = vmatprep.subr.mxu0 0.0
      %403 = vmatpush1.msra.mxu0 0.0
      %404 = vmatprep.subr.mxu0 0.0
      %405 = vmatpush1.msra.mxu0 0.0
      %406 = vmatprep.subr.mxu0 0.0
      %407 = vmatpush1.msra.mxu0 0.0
      %408 = vmatprep.subr.mxu0 0.0
      %409 = vmatpush1.msra.mxu0 0.0
      %410 = vmatprep.subr.mxu0 0.0
      %411 = vmatpush1.msra.mxu0 0.0
      %412 = vmatprep.subr.mxu0 0.0
      %413 = vmatpush1.msra.mxu0 0.0
      %414 = vmatprep.subr.mxu0 0.0
      %415 = vmatpush1.msra.mxu0 0.0
      %416 = vmatprep.subr.mxu0 0.0
      %417 = vmatpush1.msra.mxu0 0.0
      %418 = vmatprep.subr.mxu0 0.0
      %419 = vmatpush1.msra.mxu0 0.0
      %420 = vmatprep.subr.mxu0 0.0
      %421 = vmatpush1.msra.mxu0 0.0
      %422 = vmatprep.subr.mxu0 0.0
      %423 = vmatpush1.msra.mxu0 0.0
      %424 = vmatprep.subr.mxu0 0.0
      %425 = vmatpush1.msra.mxu0 0.0
      %426 = vmatprep.subr.mxu0 0.0
      %427 = vmatpush1.msra.mxu0 0.0
      %428 = vmatprep.subr.mxu0 0.0
      %429 = vmatpush1.msra.mxu0 0.0
      %430 = vmatprep.subr.mxu0 0.0
      %431 = vmatpush1.msra.mxu0 0.0
      %432 = vmatprep.mubr.f32.mxu0 0.0
      %433 = vmatmul.mubr.f32.gmra.mrb[0].mxu0 %v273
      %v434 = vpop.f32.mrb[0].mxu0
      %v435 = vadd.f32 %v269, %v434
      %v436 = vpop.f32.mrb[0].mxu0
      %437 = vmatprep.mubr.f32.mxu0 0.0
      %438 = vmatmul.mubr.f32.gmra.mrb[0].mxu0 %v276
      %v439 = vpop.f32.mrb[0].mxu0
      %v440 = vadd.f32 %v269, %v439
      %v441 = vpop.f32.mrb[0].mxu0
      %442 = vmatprep.mubr.f32.mxu0 0.0
      %443 = vmatmul.mubr.f32.gmra.mrb[0].mxu0 %v279
      %v444 = vpop.f32.mrb[0].mxu0
      %v445 = vadd.f32 %v269, %v444
      %v446 = vpop.f32.mrb[0].mxu0
      %447 = vmatprep.mubr.f32.mxu0 0.0
      %448 = vmatmul.mubr.f32.gmra.mrb[0].mxu0 %v282
      %v449 = vpop.f32.mrb[0].mxu0
      %v450 = vadd.f32 %v269, %v449
      %v451 = vpop.f32.mrb[0].mxu0
      %452 = vmatprep.mubr.f32.mxu0 0.0
      %453 = vmatmul.mubr.f32.gmra.mrb[0].mxu0 %v285
      %v454 = vpop.f32.mrb[0].mxu0
      %v455 = vadd.f32 %v269, %v454
      %v456 = vpop.f32.mrb[0].mxu0
      %457 = vmatprep.mubr.f32.mxu0 0.0
      %458 = vmatmul.mubr.f32.gmra.mrb[0].mxu0 %v288
      %v459 = vpop.f32.mrb[0].mxu0
      %v460 = vadd.f32 %v269, %v459
      %v461 = vpop.f32.mrb[0].mxu0
      %462 = vmatprep.mubr.f32.mxu0 0.0
      %463 = vmatmul.mubr.f32.gmra.mrb[0].mxu0 %v291
      %v464 = vpop.f32.mrb[0].mxu0
      %v465 = vadd.f32 %v269, %v464
      %v466 = vpop.f32.mrb[0].mxu0
      %467 = vmatprep.mubr.f32.mxu0 0.0
      %468 = vmatmul.mubr.f32.gmra.mrb[0].mxu0 %v294
      %v469 = vpop.f32.mrb[0].mxu0
      %v470 = vadd.f32 %v269, %v469
      %v471 = vpop.f32.mrb[0].mxu0
      %472 = vmatprep.mubr.f32.mxu0 0.0
      %473 = vmatmul.mubr.f32.gmra.mrb[0].mxu0 %v297
      %v474 = vpop.f32.mrb[0].mxu0
      %v475 = vadd.f32 %v269, %v474
      %v476 = vpop.f32.mrb[0].mxu0
      %477 = vmatprep.mubr.f32.mxu0 0.0
      %478 = vmatmul.mubr.f32.gmra.mrb[0].mxu0 %v300
      %v479 = vpop.f32.mrb[0].mxu0
      %v480 = vadd.f32 %v269, %v479
      %v481 = vpop.f32.mrb[0].mxu0
      %482 = vmatprep.mubr.f32.mxu0 0.0
      %483 = vmatmul.mubr.f32.gmra.mrb[0].mxu0 %v303
      %v484 = vpop.f32.mrb[0].mxu0
      %v485 = vadd.f32 %v269, %v484
      %v486 = vpop.f32.mrb[0].mxu0
      %487 = vmatprep.mubr.f32.mxu0 0.0
      %488 = vmatmul.mubr.f32.gmra.mrb[0].mxu0 %v306
      %v489 = vpop.f32.mrb[0].mxu0
      %v490 = vadd.f32 %v269, %v489
      %v491 = vpop.f32.mrb[0].mxu0
      %492 = vmatprep.mubr.f32.mxu0 0.0
      %493 = vmatmul.mubr.f32.gmra.mrb[0].mxu0 %v309
      %v494 = vpop.f32.mrb[0].mxu0
      %v495 = vadd.f32 %v269, %v494
      %v496 = vpop.f32.mrb[0].mxu0
      %497 = vmatprep.mubr.f32.mxu0 0.0
      %498 = vmatmul.mubr.f32.gmra.mrb[0].mxu0 %v312
      %v499 = vpop.f32.mrb[0].mxu0
      %v500 = vadd.f32 %v269, %v499
      %v501 = vpop.f32.mrb[0].mxu0
      %502 = vmatprep.mubr.f32.mxu0 0.0
      %503 = vmatmul.mubr.f32.gmra.mrb[0].mxu0 %v315
      %v504 = vpop.f32.mrb[0].mxu0
      %v505 = vadd.f32 %v269, %v504
      %v506 = vpop.f32.mrb[0].mxu0
      %507 = vmatprep.mubr.f32.mxu0 0.0
      %508 = vmatmul.mubr.f32.gmra.mrb[0].mxu0 %v318
      %v509 = vpop.f32.mrb[0].mxu0
      %v510 = vadd.f32 %v269, %v509
      %v511 = vpop.f32.mrb[0].mxu0
      %512 = vmatprep.mubr.f32.mxu0 0.0
      %513 = vmatmul.mubr.f32.gmra.mrb[0].mxu0 %v321
      %v514 = vpop.f32.mrb[0].mxu0
      %v515 = vadd.f32 %v269, %v514
      %v516 = vpop.f32.mrb[0].mxu0
      %517 = vmatprep.mubr.f32.mxu0 0.0
      %518 = vmatmul.mubr.f32.gmra.mrb[0].mxu0 %v324
      %v519 = vpop.f32.mrb[0].mxu0
      %v520 = vadd.f32 %v269, %v519
      %v521 = vpop.f32.mrb[0].mxu0
      %522 = vmatprep.mubr.f32.mxu0 0.0
      %523 = vmatmul.mubr.f32.gmra.mrb[0].mxu0 %v327
      %v524 = vpop.f32.mrb[0].mxu0
      %v525 = vadd.f32 %v269, %v524
      %v526 = vpop.f32.mrb[0].mxu0
      %527 = vmatprep.mubr.f32.mxu0 0.0
      %528 = vmatmul.mubr.f32.gmra.mrb[0].mxu0 %v330
      %v529 = vpop.f32.mrb[0].mxu0
      %v530 = vadd.f32 %v269, %v529
      %v531 = vpop.f32.mrb[0].mxu0
      %532 = vmatprep.mubr.f32.mxu0 0.0
      %533 = vmatmul.mubr.f32.gmra.mrb[0].mxu0 %v333
      %v534 = vpop.f32.mrb[0].mxu0
      %v535 = vadd.f32 %v269, %v534
      %v536 = vpop.f32.mrb[0].mxu0
      %537 = vmatprep.mubr.f32.mxu0 0.0
      %538 = vmatmul.mubr.f32.gmra.mrb[0].mxu0 %v336
      %v539 = vpop.f32.mrb[0].mxu0
      %v540 = vadd.f32 %v269, %v539
      %v541 = vpop.f32.mrb[0].mxu0
      %542 = vmatprep.mubr.f32.mxu0 0.0
      %543 = vmatmul.mubr.f32.gmra.mrb[0].mxu0 %v339
      %v544 = vpop.f32.mrb[0].mxu0
      %v545 = vadd.f32 %v269, %v544
      %v546 = vpop.f32.mrb[0].mxu0
      %547 = vmatprep.mubr.f32.mxu0 0.0
      %548 = vmatmul.mubr.f32.gmra.mrb[0].mxu0 %v342
      %v549 = vpop.f32.mrb[0].mxu0
      %v550 = vadd.f32 %v269, %v549
      %v551 = vpop.f32.mrb[0].mxu0
      %552 = vmatprep.mubr.f32.mxu0 0.0
      %553 = vmatmul.mubr.f32.gmra.mrb[0].mxu0 %v345
      %v554 = vpop.f32.mrb[0].mxu0
      %v555 = vadd.f32 %v269, %v554
      %v556 = vpop.f32.mrb[0].mxu0
      %557 = vmatprep.mubr.f32.mxu0 0.0
      %558 = vmatmul.mubr.f32.gmra.mrb[0].mxu0 %v348
      %v559 = vpop.f32.mrb[0].mxu0
      %v560 = vadd.f32 %v269, %v559
      %v561 = vpop.f32.mrb[0].mxu0
      %562 = vmatprep.mubr.f32.mxu0 0.0
      %563 = vmatmul.mubr.f32.gmra.mrb[0].mxu0 %v351
      %v564 = vpop.f32.mrb[0].mxu0
      %v565 = vadd.f32 %v269, %v564
      %v566 = vpop.f32.mrb[0].mxu0
      %567 = vmatprep.mubr.f32.mxu0 0.0
      %568 = vmatmul.mubr.f32.gmra.mrb[0].mxu0 %v354
      %v569 = vpop.f32.mrb[0].mxu0
      %v570 = vadd.f32 %v269, %v569
      %v571 = vpop.f32.mrb[0].mxu0
      %572 = vmatprep.mubr.f32.mxu0 0.0
      %573 = vmatmul.mubr.f32.gmra.mrb[0].mxu0 %v357
      %v574 = vpop.f32.mrb[0].mxu0
      %v575 = vadd.f32 %v269, %v574
      %v576 = vpop.f32.mrb[0].mxu0
      %577 = vmatprep.mubr.f32.mxu0 0.0
      %578 = vmatmul.mubr.f32.gmra.mrb[0].mxu0 %v360
      %v579 = vpop.f32.mrb[0].mxu0
      %v580 = vadd.f32 %v269, %v579
      %v581 = vpop.f32.mrb[0].mxu0
      %582 = vmatprep.mubr.f32.mxu0 0.0
      %583 = vmatmul.mubr.f32.gmra.mrb[0].mxu0 %v363
      %v584 = vpop.f32.mrb[0].mxu0
      %v585 = vadd.f32 %v269, %v584
      %v586 = vpop.f32.mrb[0].mxu0
      %587 = vmatprep.mubr.f32.mxu0 0.0
      %588 = vmatmul.mubr.f32.gmra.mrb[0].mxu0 %v366
      %v589 = vpop.f32.mrb[0].mxu0
      %v590 = vadd.f32 %v269, %v589
      %v591 = vpop.f32.mrb[0].mxu0
      %592 = vdwg.mxu0
      %v593 = vmul.f32 %v435, 0.5
      %v594 = vmul.f32 %v440, 0.5
      %v595 = vmul.f32 %v445, 0.5
      %v596 = vmul.f32 %v450, 0.5
      %v597 = vmul.f32 %v455, 0.5
      %v598 = vmul.f32 %v460, 0.5
      %v599 = vmul.f32 %v465, 0.5
      %v600 = vmul.f32 %v470, 0.5
      %v601 = vmul.f32 %v475, 0.5
      %v602 = vmul.f32 %v480, 0.5
      %v603 = vmul.f32 %v485, 0.5
      %v604 = vmul.f32 %v490, 0.5
      %v605 = vmul.f32 %v495, 0.5
      %v606 = vmul.f32 %v500, 0.5
      %v607 = vmul.f32 %v505, 0.5
      %v608 = vmul.f32 %v510, 0.5
      %v609 = vmul.f32 %v515, 0.5
      %v610 = vmul.f32 %v520, 0.5
      %v611 = vmul.f32 %v525, 0.5
      %v612 = vmul.f32 %v530, 0.5
      %v613 = vmul.f32 %v535, 0.5
      %v614 = vmul.f32 %v540, 0.5
      %v615 = vmul.f32 %v545, 0.5
      %v616 = vmul.f32 %v550, 0.5
      %v617 = vmul.f32 %v555, 0.5
      %v618 = vmul.f32 %v560, 0.5
      %v619 = vmul.f32 %v565, 0.5
      %v620 = vmul.f32 %v570, 0.5
      %v621 = vmul.f32 %v575, 0.5
      %v622 = vmul.f32 %v580, 0.5
      %v623 = vmul.f32 %v585, 0.5
      %v624 = vmul.f32 %v590, 0.5
      %v625 = vmul.f32 %v435, 0.70710677
      %v626 = vmul.f32 %v440, 0.70710677
      %v627 = vmul.f32 %v445, 0.70710677
      %v628 = vmul.f32 %v450, 0.70710677
      %v629 = vmul.f32 %v455, 0.70710677
      %v630 = vmul.f32 %v460, 0.70710677
      %v631 = vmul.f32 %v465, 0.70710677
      %v632 = vmul.f32 %v470, 0.70710677
      %v633 = vmul.f32 %v475, 0.70710677
      %v634 = vmul.f32 %v480, 0.70710677
      %v635 = vmul.f32 %v485, 0.70710677
      %v636 = vmul.f32 %v490, 0.70710677
      %v637 = vmul.f32 %v495, 0.70710677
      %v638 = vmul.f32 %v500, 0.70710677
      %v639 = vmul.f32 %v505, 0.70710677
      %v640 = vmul.f32 %v510, 0.70710677
      %v641 = vmul.f32 %v515, 0.70710677
      %v642 = vmul.f32 %v520, 0.70710677
      %v643 = vmul.f32 %v525, 0.70710677
      %v644 = vmul.f32 %v530, 0.70710677
      %v645 = vmul.f32 %v535, 0.70710677
      %v646 = vmul.f32 %v540, 0.70710677
      %v647 = vmul.f32 %v545, 0.70710677
      %v648 = vmul.f32 %v550, 0.70710677
      %v649 = vmul.f32 %v555, 0.70710677
      %v650 = vmul.f32 %v560, 0.70710677
      %v651 = vmul.f32 %v565, 0.70710677
      %v652 = vmul.f32 %v570, 0.70710677
      %v653 = vmul.f32 %v575, 0.70710677
      %v654 = vmul.f32 %v580, 0.70710677
      %v655 = vmul.f32 %v585, 0.70710677
      %v656 = vmul.f32 %v590, 0.70710677
      %v657 = verf.f32.pop %v625
      %v658 = verf.f32.pop %v626
      %v659 = verf.f32.pop %v627
      %v660 = verf.f32.pop %v628
      %v661 = verf.f32.pop %v629
      %v662 = verf.f32.pop %v630
      %v663 = verf.f32.pop %v631
      %v664 = verf.f32.pop %v632
      %v665 = verf.f32.pop %v633
      %v666 = verf.f32.pop %v634
      %v667 = verf.f32.pop %v635
      %v668 = verf.f32.pop %v636
      %v669 = verf.f32.pop %v637
      %v670 = verf.f32.pop %v638
      %v671 = verf.f32.pop %v639
      %v672 = verf.f32.pop %v640
      %v673 = verf.f32.pop %v641
      %v674 = verf.f32.pop %v642
      %v675 = verf.f32.pop %v643
      %v676 = verf.f32.pop %v644
      %v677 = verf.f32.pop %v645
      %v678 = verf.f32.pop %v646
      %v679 = verf.f32.pop %v647
      %v680 = verf.f32.pop %v648
      %v681 = verf.f32.pop %v649
      %v682 = verf.f32.pop %v650
      %v683 = verf.f32.pop %v651
      %v684 = verf.f32.pop %v652
      %v685 = verf.f32.pop %v653
      %v686 = verf.f32.pop %v654
      %v687 = verf.f32.pop %v655
      %v688 = verf.f32.pop %v656
      %v689 = vadd.f32 %v657, 1.0
      %v690 = vadd.f32 %v658, 1.0
      %v691 = vadd.f32 %v659, 1.0
      %v692 = vadd.f32 %v660, 1.0
      %v693 = vadd.f32 %v661, 1.0
      %v694 = vadd.f32 %v662, 1.0
      %v695 = vadd.f32 %v663, 1.0
      %v696 = vadd.f32 %v664, 1.0
      %v697 = vadd.f32 %v665, 1.0
      %v698 = vadd.f32 %v666, 1.0
      %v699 = vadd.f32 %v667, 1.0
      %v700 = vadd.f32 %v668, 1.0
      %v701 = vadd.f32 %v669, 1.0
      %v702 = vadd.f32 %v670, 1.0
      %v703 = vadd.f32 %v671, 1.0
      %v704 = vadd.f32 %v672, 1.0
      %v705 = vadd.f32 %v673, 1.0
      %v706 = vadd.f32 %v674, 1.0
      %v707 = vadd.f32 %v675, 1.0
      %v708 = vadd.f32 %v676, 1.0
      %v709 = vadd.f32 %v677, 1.0
      %v710 = vadd.f32 %v678, 1.0
      %v711 = vadd.f32 %v679, 1.0
      %v712 = vadd.f32 %v680, 1.0
      %v713 = vadd.f32 %v681, 1.0
      %v714 = vadd.f32 %v682, 1.0
      %v715 = vadd.f32 %v683, 1.0
      %v716 = vadd.f32 %v684, 1.0
      %v717 = vadd.f32 %v685, 1.0
      %v718 = vadd.f32 %v686, 1.0
      %v719 = vadd.f32 %v687, 1.0
      %v720 = vadd.f32 %v688, 1.0
      %v721 = vmul.f32 %v593, %v689
      %v722 = vmul.f32 %v594, %v690
      %v723 = vmul.f32 %v595, %v691
      %v724 = vmul.f32 %v596, %v692
      %v725 = vmul.f32 %v597, %v693
      %v726 = vmul.f32 %v598, %v694
      %v727 = vmul.f32 %v599, %v695
      %v728 = vmul.f32 %v600, %v696
      %v729 = vmul.f32 %v601, %v697
      %v730 = vmul.f32 %v602, %v698
      %v731 = vmul.f32 %v603, %v699
      %v732 = vmul.f32 %v604, %v700
      %v733 = vmul.f32 %v605, %v701
      %v734 = vmul.f32 %v606, %v702
      %v735 = vmul.f32 %v607, %v703
      %v736 = vmul.f32 %v608, %v704
      %v737 = vmul.f32 %v609, %v705
      %v738 = vmul.f32 %v610, %v706
      %v739 = vmul.f32 %v611, %v707
      %v740 = vmul.f32 %v612, %v708
      %v741 = vmul.f32 %v613, %v709
      %v742 = vmul.f32 %v614, %v710
      %v743 = vmul.f32 %v615, %v711
      %v744 = vmul.f32 %v616, %v712
      %v745 = vmul.f32 %v617, %v713
      %v746 = vmul.f32 %v618, %v714
      %v747 = vmul.f32 %v619, %v715
      %v748 = vmul.f32 %v620, %v716
      %v749 = vmul.f32 %v621, %v717
      %v750 = vmul.f32 %v622, %v718
      %v751 = vmul.f32 %v623, %v719
      %v752 = vmul.f32 %v624, %v720
      %v753 = vld [vmem:[%s3] sm:$0xff]
      %v754 = vld [vmem:[%s3 + $0x8] sm:$0xff]
      %v755 = vld [vmem:[%s3 + $0x10] sm:$0xff]
      %v756 = vld [vmem:[%s3 + $0x18] sm:$0xff]
      %v757 = vld [vmem:[%s3 + $0x20] sm:$0xff]
      %v758 = vld [vmem:[%s3 + $0x28] sm:$0xff]
      %v759 = vld [vmem:[%s3 + $0x30] sm:$0xff]
      %v760 = vld [vmem:[%s3 + $0x38] sm:$0xff]
      %v761 = vld [vmem:[%s3 + $0x40] sm:$0xff]
      %v762 = vld [vmem:[%s3 + $0x48] sm:$0xff]
      %v763 = vld [vmem:[%s3 + $0x50] sm:$0xff]
      %v764 = vld [vmem:[%s3 + $0x58] sm:$0xff]
      %v765 = vld [vmem:[%s3 + $0x60] sm:$0xff]
      %v766 = vld [vmem:[%s3 + $0x68] sm:$0xff]
      %v767 = vld [vmem:[%s3 + $0x70] sm:$0xff]
      %v768 = vld [vmem:[%s3 + $0x78] sm:$0xff]
      %v769 = vld [vmem:[#allocation2] sm:$0x1]
      %v771 = vlaneseq
      %v772 = vshrl.u32 %v771, 7
      %v773 = vsub.s32 0, %v772
      %v774 = vrot.slane %v769, %v773
      %776 = vmatprep.subr.mxu0 0.0
      %777 = vmatpush1.msra.mxu0 %v753
      %778 = vmatprep.subr.mxu0 0.0
      %779 = vmatpush1.msra.mxu0 %v754
      %780 = vmatprep.subr.mxu0 0.0
      %781 = vmatpush1.msra.mxu0 %v755
      %782 = vmatprep.subr.mxu0 0.0
      %783 = vmatpush1.msra.mxu0 %v756
      %784 = vmatprep.subr.mxu0 0.0
      %785 = vmatpush1.msra.mxu0 %v757
      %786 = vmatprep.subr.mxu0 0.0
      %787 = vmatpush1.msra.mxu0 %v758
      %788 = vmatprep.subr.mxu0 0.0
      %789 = vmatpush1.msra.mxu0 %v759
      %790 = vmatprep.subr.mxu0 0.0
      %791 = vmatpush1.msra.mxu0 %v760
      %792 = vmatprep.subr.mxu0 0.0
      %793 = vmatpush1.msra.mxu0 %v761
      %794 = vmatprep.subr.mxu0 0.0
      %795 = vmatpush1.msra.mxu0 %v762
      %796 = vmatprep.subr.mxu0 0.0
      %797 = vmatpush1.msra.mxu0 %v763
      %798 = vmatprep.subr.mxu0 0.0
      %799 = vmatpush1.msra.mxu0 %v764
      %800 = vmatprep.subr.mxu0 0.0
      %801 = vmatpush1.msra.mxu0 %v765
      %802 = vmatprep.subr.mxu0 0.0
      %803 = vmatpush1.msra.mxu0 %v766
      %804 = vmatprep.subr.mxu0 0.0
      %805 = vmatpush1.msra.mxu0 %v767
      %806 = vmatprep.subr.mxu0 0.0
      %807 = vmatpush1.msra.mxu0 %v768
      %808 = vmatprep.subr.mxu0 0.0
      %809 = vmatpush1.msra.mxu0 0.0
      %810 = vmatprep.subr.mxu0 0.0
      %811 = vmatpush1.msra.mxu0 0.0
      %812 = vmatprep.subr.mxu0 0.0
      %813 = vmatpush1.msra.mxu0 0.0
      %814 = vmatprep.subr.mxu0 0.0
      %815 = vmatpush1.msra.mxu0 0.0
      %816 = vmatprep.subr.mxu0 0.0
      %817 = vmatpush1.msra.mxu0 0.0
      %818 = vmatprep.subr.mxu0 0.0
      %819 = vmatpush1.msra.mxu0 0.0
      %820 = vmatprep.subr.mxu0 0.0
      %821 = vmatpush1.msra.mxu0 0.0
      %822 = vmatprep.subr.mxu0 0.0
      %823 = vmatpush1.msra.mxu0 0.0
      %824 = vmatprep.subr.mxu0 0.0
      %825 = vmatpush1.msra.mxu0 0.0
      %826 = vmatprep.subr.mxu0 0.0
      %827 = vmatpush1.msra.mxu0 0.0
      %828 = vmatprep.subr.mxu0 0.0
      %829 = vmatpush1.msra.mxu0 0.0
      %830 = vmatprep.subr.mxu0 0.0
      %831 = vmatpush1.msra.mxu0 0.0
      %832 = vmatprep.subr.mxu0 0.0
      %833 = vmatpush1.msra.mxu0 0.0
      %834 = vmatprep.subr.mxu0 0.0
      %835 = vmatpush1.msra.mxu0 0.0
      %836 = vmatprep.subr.mxu0 0.0
      %837 = vmatpush1.msra.mxu0 0.0
      %838 = vmatprep.subr.mxu0 0.0
      %839 = vmatpush1.msra.mxu0 0.0
      %840 = vmatprep.mubr.f32.mxu0 0.0
      %841 = vmatmul.mubr.f32.gmra.mrb[0].mxu0 %v721
      %v842 = vpop.f32.mrb[0].mxu0
      %v843 = vadd.f32 %v774, %v842
      %v844 = vpop.f32.mrb[0].mxu0
      %845 = vmatprep.mubr.f32.mxu0 0.0
      %846 = vmatmul.mubr.f32.gmra.mrb[0].mxu0 %v722
      %v847 = vpop.f32.mrb[0].mxu0
      %v848 = vadd.f32 %v774, %v847
      %v849 = vpop.f32.mrb[0].mxu0
      %850 = vmatprep.mubr.f32.mxu0 0.0
      %851 = vmatmul.mubr.f32.gmra.mrb[0].mxu0 %v723
      %v852 = vpop.f32.mrb[0].mxu0
      %v853 = vadd.f32 %v774, %v852
      %v854 = vpop.f32.mrb[0].mxu0
      %855 = vmatprep.mubr.f32.mxu0 0.0
      %856 = vmatmul.mubr.f32.gmra.mrb[0].mxu0 %v724
      %v857 = vpop.f32.mrb[0].mxu0
      %v858 = vadd.f32 %v774, %v857
      %v859 = vpop.f32.mrb[0].mxu0
      %860 = vmatprep.mubr.f32.mxu0 0.0
      %861 = vmatmul.mubr.f32.gmra.mrb[0].mxu0 %v725
      %v862 = vpop.f32.mrb[0].mxu0
      %v863 = vadd.f32 %v774, %v862
      %v864 = vpop.f32.mrb[0].mxu0
      %865 = vmatprep.mubr.f32.mxu0 0.0
      %866 = vmatmul.mubr.f32.gmra.mrb[0].mxu0 %v726
      %v867 = vpop.f32.mrb[0].mxu0
      %v868 = vadd.f32 %v774, %v867
      %v869 = vpop.f32.mrb[0].mxu0
      %870 = vmatprep.mubr.f32.mxu0 0.0
      %871 = vmatmul.mubr.f32.gmra.mrb[0].mxu0 %v727
      %v872 = vpop.f32.mrb[0].mxu0
      %v873 = vadd.f32 %v774, %v872
      %v874 = vpop.f32.mrb[0].mxu0
      %875 = vmatprep.mubr.f32.mxu0 0.0
      %876 = vmatmul.mubr.f32.gmra.mrb[0].mxu0 %v728
      %v877 = vpop.f32.mrb[0].mxu0
      %v878 = vadd.f32 %v774, %v877
      %v879 = vpop.f32.mrb[0].mxu0
      %880 = vmatprep.mubr.f32.mxu0 0.0
      %881 = vmatmul.mubr.f32.gmra.mrb[0].mxu0 %v729
      %v882 = vpop.f32.mrb[0].mxu0
      %v883 = vadd.f32 %v774, %v882
      %v884 = vpop.f32.mrb[0].mxu0
      %885 = vmatprep.mubr.f32.mxu0 0.0
      %886 = vmatmul.mubr.f32.gmra.mrb[0].mxu0 %v730
      %v887 = vpop.f32.mrb[0].mxu0
      %v888 = vadd.f32 %v774, %v887
      %v889 = vpop.f32.mrb[0].mxu0
      %890 = vmatprep.mubr.f32.mxu0 0.0
      %891 = vmatmul.mubr.f32.gmra.mrb[0].mxu0 %v731
      %v892 = vpop.f32.mrb[0].mxu0
      %v893 = vadd.f32 %v774, %v892
      %v894 = vpop.f32.mrb[0].mxu0
      %895 = vmatprep.mubr.f32.mxu0 0.0
      %896 = vmatmul.mubr.f32.gmra.mrb[0].mxu0 %v732
      %v897 = vpop.f32.mrb[0].mxu0
      %v898 = vadd.f32 %v774, %v897
      %v899 = vpop.f32.mrb[0].mxu0
      %900 = vmatprep.mubr.f32.mxu0 0.0
      %901 = vmatmul.mubr.f32.gmra.mrb[0].mxu0 %v733
      %v902 = vpop.f32.mrb[0].mxu0
      %v903 = vadd.f32 %v774, %v902
      %v904 = vpop.f32.mrb[0].mxu0
      %905 = vmatprep.mubr.f32.mxu0 0.0
      %906 = vmatmul.mubr.f32.gmra.mrb[0].mxu0 %v734
      %v907 = vpop.f32.mrb[0].mxu0
      %v908 = vadd.f32 %v774, %v907
      %v909 = vpop.f32.mrb[0].mxu0
      %910 = vmatprep.mubr.f32.mxu0 0.0
      %911 = vmatmul.mubr.f32.gmra.mrb[0].mxu0 %v735
      %v912 = vpop.f32.mrb[0].mxu0
      %v913 = vadd.f32 %v774, %v912
      %v914 = vpop.f32.mrb[0].mxu0
      %915 = vmatprep.mubr.f32.mxu0 0.0
      %916 = vmatmul.mubr.f32.gmra.mrb[0].mxu0 %v736
      %v917 = vpop.f32.mrb[0].mxu0
      %v918 = vadd.f32 %v774, %v917
      %v919 = vpop.f32.mrb[0].mxu0
      %920 = vmatprep.mubr.f32.mxu0 0.0
      %921 = vmatmul.mubr.f32.gmra.mrb[0].mxu0 %v737
      %v922 = vpop.f32.mrb[0].mxu0
      %v923 = vadd.f32 %v774, %v922
      %v924 = vpop.f32.mrb[0].mxu0
      %925 = vmatprep.mubr.f32.mxu0 0.0
      %926 = vmatmul.mubr.f32.gmra.mrb[0].mxu0 %v738
      %v927 = vpop.f32.mrb[0].mxu0
      %v928 = vadd.f32 %v774, %v927
      %v929 = vpop.f32.mrb[0].mxu0
      %930 = vmatprep.mubr.f32.mxu0 0.0
      %931 = vmatmul.mubr.f32.gmra.mrb[0].mxu0 %v739
      %v932 = vpop.f32.mrb[0].mxu0
      %v933 = vadd.f32 %v774, %v932
      %v934 = vpop.f32.mrb[0].mxu0
      %935 = vmatprep.mubr.f32.mxu0 0.0
      %936 = vmatmul.mubr.f32.gmra.mrb[0].mxu0 %v740
      %v937 = vpop.f32.mrb[0].mxu0
      %v938 = vadd.f32 %v774, %v937
      %v939 = vpop.f32.mrb[0].mxu0
      %940 = vmatprep.mubr.f32.mxu0 0.0
      %941 = vmatmul.mubr.f32.gmra.mrb[0].mxu0 %v741
      %v942 = vpop.f32.mrb[0].mxu0
      %v943 = vadd.f32 %v774, %v942
      %v944 = vpop.f32.mrb[0].mxu0
      %945 = vmatprep.mubr.f32.mxu0 0.0
      %946 = vmatmul.mubr.f32.gmra.mrb[0].mxu0 %v742
      %v947 = vpop.f32.mrb[0].mxu0
      %v948 = vadd.f32 %v774, %v947
      %v949 = vpop.f32.mrb[0].mxu0
      %950 = vmatprep.mubr.f32.mxu0 0.0
      %951 = vmatmul.mubr.f32.gmra.mrb[0].mxu0 %v743
      %v952 = vpop.f32.mrb[0].mxu0
      %v953 = vadd.f32 %v774, %v952
      %v954 = vpop.f32.mrb[0].mxu0
      %955 = vmatprep.mubr.f32.mxu0 0.0
      %956 = vmatmul.mubr.f32.gmra.mrb[0].mxu0 %v744
      %v957 = vpop.f32.mrb[0].mxu0
      %v958 = vadd.f32 %v774, %v957
      %v959 = vpop.f32.mrb[0].mxu0
      %960 = vmatprep.mubr.f32.mxu0 0.0
      %961 = vmatmul.mubr.f32.gmra.mrb[0].mxu0 %v745
      %v962 = vpop.f32.mrb[0].mxu0
      %v963 = vadd.f32 %v774, %v962
      %v964 = vpop.f32.mrb[0].mxu0
      %965 = vmatprep.mubr.f32.mxu0 0.0
      %966 = vmatmul.mubr.f32.gmra.mrb[0].mxu0 %v746
      %v967 = vpop.f32.mrb[0].mxu0
      %v968 = vadd.f32 %v774, %v967
      %v969 = vpop.f32.mrb[0].mxu0
      %970 = vmatprep.mubr.f32.mxu0 0.0
      %971 = vmatmul.mubr.f32.gmra.mrb[0].mxu0 %v747
      %v972 = vpop.f32.mrb[0].mxu0
      %v973 = vadd.f32 %v774, %v972
      %v974 = vpop.f32.mrb[0].mxu0
      %975 = vmatprep.mubr.f32.mxu0 0.0
      %976 = vmatmul.mubr.f32.gmra.mrb[0].mxu0 %v748
      %v977 = vpop.f32.mrb[0].mxu0
      %v978 = vadd.f32 %v774, %v977
      %v979 = vpop.f32.mrb[0].mxu0
      %980 = vmatprep.mubr.f32.mxu0 0.0
      %981 = vmatmul.mubr.f32.gmra.mrb[0].mxu0 %v749
      %v982 = vpop.f32.mrb[0].mxu0
      %v983 = vadd.f32 %v774, %v982
      %v984 = vpop.f32.mrb[0].mxu0
      %985 = vmatprep.mubr.f32.mxu0 0.0
      %986 = vmatmul.mubr.f32.gmra.mrb[0].mxu0 %v750
      %v987 = vpop.f32.mrb[0].mxu0
      %v988 = vadd.f32 %v774, %v987
      %v989 = vpop.f32.mrb[0].mxu0
      %990 = vmatprep.mubr.f32.mxu0 0.0
      %991 = vmatmul.mubr.f32.gmra.mrb[0].mxu0 %v751
      %v992 = vpop.f32.mrb[0].mxu0
      %v993 = vadd.f32 %v774, %v992
      %v994 = vpop.f32.mrb[0].mxu0
      %995 = vmatprep.mubr.f32.mxu0 0.0
      %996 = vmatmul.mubr.f32.gmra.mrb[0].mxu0 %v752
      %v997 = vpop.f32.mrb[0].mxu0
      %v998 = vadd.f32 %v774, %v997
      %v999 = vpop.f32.mrb[0].mxu0
      %1000 = vdwg.mxu0
      %vm1001 = vcmask 7168
      %1002 = vst.msk [vmem:[%s228] sm:$0xff] %vm1001, %v843
      %1003 = vst.msk [vmem:[%s228 + $0x8] sm:$0xff] %vm1001, %v848
      %1004 = vst.msk [vmem:[%s228 + $0x10] sm:$0xff] %vm1001, %v853
      %1005 = vst.msk [vmem:[%s228 + $0x18] sm:$0xff] %vm1001, %v858
      %1006 = vst.msk [vmem:[%s228 + $0x20] sm:$0xff] %vm1001, %v863
      %1007 = vst.msk [vmem:[%s228 + $0x28] sm:$0xff] %vm1001, %v868
      %1008 = vst.msk [vmem:[%s228 + $0x30] sm:$0xff] %vm1001, %v873
      %1009 = vst.msk [vmem:[%s228 + $0x38] sm:$0xff] %vm1001, %v878
      %1010 = vst.msk [vmem:[%s228 + $0x40] sm:$0xff] %vm1001, %v883
      %1011 = vst.msk [vmem:[%s228 + $0x48] sm:$0xff] %vm1001, %v888
      %1012 = vst.msk [vmem:[%s228 + $0x50] sm:$0xff] %vm1001, %v893
      %1013 = vst.msk [vmem:[%s228 + $0x58] sm:$0xff] %vm1001, %v898
      %1014 = vst.msk [vmem:[%s228 + $0x60] sm:$0xff] %vm1001, %v903
      %1015 = vst.msk [vmem:[%s228 + $0x68] sm:$0xff] %vm1001, %v908
      %1016 = vst.msk [vmem:[%s228 + $0x70] sm:$0xff] %vm1001, %v913
      %1017 = vst.msk [vmem:[%s228 + $0x78] sm:$0xff] %vm1001, %v918
      %1018 = vst.msk [vmem:[%s228 + $0x80] sm:$0xff] %vm1001, %v923
      %1019 = vst.msk [vmem:[%s228 + $0x88] sm:$0xff] %vm1001, %v928
      %1020 = vst.msk [vmem:[%s228 + $0x90] sm:$0xff] %vm1001, %v933
      %1021 = vst.msk [vmem:[%s228 + $0x98] sm:$0xff] %vm1001, %v938
      %1022 = vst.msk [vmem:[%s228 + $0xa0] sm:$0xff] %vm1001, %v943
      %1023 = vst.msk [vmem:[%s228 + $0xa8] sm:$0xff] %vm1001, %v948
      %1024 = vst.msk [vmem:[%s228 + $0xb0] sm:$0xff] %vm1001, %v953
      %1025 = vst.msk [vmem:[%s228 + $0xb8] sm:$0xff] %vm1001, %v958
      %1026 = vst.msk [vmem:[%s228 + $0xc0] sm:$0xff] %vm1001, %v963
      %1027 = vst.msk [vmem:[%s228 + $0xc8] sm:$0xff] %vm1001, %v968
      %1028 = vst.msk [vmem:[%s228 + $0xd0] sm:$0xff] %vm1001, %v973
      %1029 = vst.msk [vmem:[%s228 + $0xd8] sm:$0xff] %vm1001, %v978
      %1030 = vst.msk [vmem:[%s228 + $0xe0] sm:$0xff] %vm1001, %v983
      %1031 = vst.msk [vmem:[%s228 + $0xe8] sm:$0xff] %vm1001, %v988
      %1032 = vst.msk [vmem:[%s228 + $0xf0] sm:$0xff] %vm1001, %v993
      %1033 = vst.msk [vmem:[%s228 + $0xf8] sm:$0xff] %vm1001, %v998
      %s1034 = smul.u32 32, %s18
      %p1035 = scmp.lt.s32.totalorder %s1034, 63
      %s1036 = scalar_select %p1035, %s1034, 63
      %s1037 = smul.addr %s1036, 8
      %s1038 = scalar_lea.vmem %s5, %s1037
      // Predicated region
      $region41: #{nors_forward.19} parent=39 // pred_check
        %p1039 = pneg %p146
      $region42: #{nors_forward.19} parent=39 // pred_check_branch
        %1041 = sbr.rel (%p1039) target = $region44
      $region43: #{nors_forward.19} parent=39 // pred_region
        %s1042 = smul.u32 32, %s18
      $region44: #{nors_forward.19} parent=39 // pred_fallthru
        _
    $region40: #{nors_forward.19} parent=5 // pred_fallthru
      _
    %p1043 = scmp.le.s32.totalorder 2, %s13
    // Predicated region
    $region45: #{nors_forward.19} parent=5 // pred_check
      %p1044 = pneg %p1043
    $region46: #{nors_forward.19} parent=5 // pred_check_branch
      %1046 = sbr.rel (%p1044) target = $region48
    $region47: #{nors_forward.19} parent=5 // pred_region
      %s1047 = ssub.s32 %s13, 2
      // Predicated region
      $region49: #{nors_forward.19} parent=47 // pred_check
        %p1048 = pneg %p152
      $region50: #{nors_forward.19} parent=47 // pred_check_branch
        %1050 = sbr.rel (%p1048) target = $region52
      $region51: #{nors_forward.19} parent=47 // pred_region
        %s1051 = smul.u32 32, %s19
        %p1052 = scmp.lt.s32.totalorder %s1051, 63
        %s1053 = scalar_select %p1052, %s1051, 63
        %s1054 = smul.addr %s1053, 8
        %s1055 = scalar_lea.vmem %s5, %s1054
      $region52: #{nors_forward.19} parent=47 // pred_fallthru
        _
    $region48: #{nors_forward.19} parent=5 // pred_fallthru
      _
  $region6: #{nors_forward.19} parent=0 // loop_footer
    %s17 = sadd.s32 1, %s13
  $region7: #{nors_forward.19} parent=0 // loop_footer_branch
    %12 = sbr.rel target = $region3
  $region8: #{nors_forward.19} parent=0 // loop_exit
    _

</llo_original>
